<compile_context>
chip_gen: v5e
topology: v5e:2x2
jax: 0.10.0
libtpu: 0.0.40
codegen_flags: <defaults>
</compile_context>

<pallas_src>
import jax
import jax.numpy as jnp
from jax.experimental import pallas as pl
from jax.experimental.pallas import tpu as pltpu

KSIZE = 3  # kernel_size=3, padding=1 ("same" conv)


def _fused_double_conv_kernel(x_ref, w1_ref, b1_ref, w2_ref, b2_ref,
                              o_ref, xpad_ref, y1pad_ref):
    """Per batch element: relu(conv2(relu(conv1(x)))) + x, entirely in VMEM.

    x_ref            : (1, C, H, W)   VMEM input block (unpadded)
    w1_ref, w2_ref   : (C*C*9,)       SMEM, OIHW-flattened conv weights
    b1_ref, b2_ref   : (C,)           SMEM biases
    o_ref            : (1, C, H, W)   VMEM output block
    xpad_ref, y1pad_ref : (C, H+2, W+2) VMEM halo scratch buffers
    """
    C, H, W = o_ref.shape[1], o_ref.shape[2], o_ref.shape[3]

    def stage_padded(dst_ref, get_plane):
        # Zero halo + copy interior. All VMEM traffic, nothing goes to HBM.
        dst_ref[...] = jnp.zeros_like(dst_ref)
        for c in range(C):
            dst_ref[c, 1:H + 1, 1:W + 1] = get_plane(c)

    def conv3x3_relu(src_ref, w_ref, b_ref):
        # VPU broadcast-FMA formulation (best for small C): one SMEM scalar
        # weight times a shifted (H, W) plane per tap. Bias folded into the
        # accumulator init. f32 accumulation / elementwise throughout.
        accs = [jnp.full((H, W), b_ref[co], dtype=jnp.float32) for co in range(C)]
        for ci in range(C):
            for kh in range(KSIZE):
                for kw in range(KSIZE):
                    tap = src_ref[ci, kh:kh + H, kw:kw + W]  # (H, W) f32
                    for co in range(C):
                        w_s = w_ref[(co * C + ci) * (KSIZE * KSIZE) + kh * KSIZE + kw]
                        accs[co] = accs[co] + tap * w_s
        return [jnp.maximum(a, 0.0) for a in accs]

    # conv1 + ReLU (halo staged from the resident input block)
    stage_padded(xpad_ref, lambda c: x_ref[0, c].astype(jnp.float32))
    y1 = conv3x3_relu(xpad_ref, w1_ref, b1_ref)

    # conv2 + ReLU + residual (intermediate never leaves VMEM)
    stage_padded(y1pad_ref, lambda c: y1[c])
    y2 = conv3x3_relu(y1pad_ref, w2_ref, b2_ref)
    for co in range(C):
        o_ref[0, co] = (y2[co] + x_ref[0, co].astype(jnp.float32)).astype(o_ref.dtype)


def _double_residual_conv_impl(x_nchw, w1_oihw, b1, w2_oihw, b2):
    """Forward of doubleResidualConv: relu(conv2(relu(conv1(x)))) + x (NCHW)."""
    N, C, H, W = x_nchw.shape
    x = x_nchw.astype(jnp.float32)
    w1f = w1_oihw.astype(jnp.float32).reshape(-1)  # OIHW flattened, -> SMEM
    w2f = w2_oihw.astype(jnp.float32).reshape(-1)
    b1f = b1.astype(jnp.float32)
    b2f = b2.astype(jnp.float32)

    return pl.pallas_call(
        _fused_double_conv_kernel,
        out_shape=jax.ShapeDtypeStruct((N, C, H, W), jnp.float32),
        grid_spec=pltpu.PrefetchScalarGridSpec(
            num_scalar_prefetch=0,
            grid=(N,),  # parallel over batch; N=2 feeds both TCs on v7x
            in_specs=[
                pl.BlockSpec((1, C, H, W), lambda n: (n, 0, 0, 0)),        # x (VMEM)
                pl.BlockSpec(memory_space=pltpu.MemorySpace.SMEM),         # w1 flat
                pl.BlockSpec(memory_space=pltpu.MemorySpace.SMEM),         # b1
                pl.BlockSpec(memory_space=pltpu.MemorySpace.SMEM),         # w2 flat
                pl.BlockSpec(memory_space=pltpu.MemorySpace.SMEM),         # b2
            ],
            out_specs=pl.BlockSpec((1, C, H, W), lambda n: (n, 0, 0, 0)),
            scratch_shapes=[
                pltpu.VMEM((C, H + 2, W + 2), jnp.float32),  # padded input
                pltpu.VMEM((C, H + 2, W + 2), jnp.float32),  # padded intermediate
            ],
        ),
        compiler_params=pltpu.CompilerParams(
            dimension_semantics=("parallel",)),
    )(x, w1f, b1f, w2f, b2f)


double_residual_conv = jax.jit(_double_residual_conv_impl)


def _reference(x, w1, b1, w2, b2):
    """Pure-JAX (XLA) reference with identical semantics, for validation."""
    def conv(z, w, b):
        y = jax.lax.conv_general_dilated(
            z, w.astype(jnp.float32), window_strides=(1, 1),
            padding=((1, 1), (1, 1)),
            dimension_numbers=('NCHW', 'OIHW', 'NCHW'))
        return jnp.maximum(y + b.reshape(1, -1, 1, 1).astype(jnp.float32), 0.0)

    xf = x.astype(jnp.float32)
    return conv(conv(xf, w1, b1), w2, b2) + xf


if __name__ == "__main__":
    # Small shapes consistent with the module: outc channels, 3x3 kernels, padding=1.
    N, C, H, W = 2, 4, 16, 16
    key = jax.random.PRNGKey(0)
    kx, kw1, kb1, kw2, kb2 = jax.random.split(key, 5)

    x = jax.random.normal(kx, (N, C, H, W), dtype=jnp.float32)
    # PyTorch Conv2d weight layout: OIHW.
    w1 = 0.1 * jax.random.normal(kw1, (C, C, KSIZE, KSIZE), dtype=jnp.float32)
    b1 = 0.1 * jax.random.normal(kb1, (C,), dtype=jnp.float32)
    w2 = 0.1 * jax.random.normal(kw2, (C, C, KSIZE, KSIZE), dtype=jnp.float32)
    b2 = 0.1 * jax.random.normal(kb2, (C,), dtype=jnp.float32)

    out = jax.block_until_ready(double_residual_conv(x, w1, b1, w2, b2))
    ref = jax.block_until_ready(_reference(x, w1, b1, w2, b2))

    assert out.shape == (N, C, H, W)
    assert jnp.allclose(out, ref, rtol=1e-4, atol=1e-4), "Pallas kernel mismatch vs reference"

    print("KERNEL_OK")
</pallas_src>

<mosaic_0001>
module attributes {stable_mosaic.version = 11 : i64} {
  func.func @_fused_double_conv_kernel(%arg0: i32, %arg1: memref<1x4x16x16xf32, #tpu.memory_space<vmem>>, %arg2: memref<144xf32, #tpu.memory_space<smem>>, %arg3: memref<4xf32, #tpu.memory_space<smem>>, %arg4: memref<144xf32, #tpu.memory_space<smem>>, %arg5: memref<4xf32, #tpu.memory_space<smem>>, %arg6: memref<1x4x16x16xf32, #tpu.memory_space<vmem>>, %arg7: memref<4x18x18xf32, #tpu.memory_space<vmem>>, %arg8: memref<4x18x18xf32, #tpu.memory_space<vmem>>) attributes {dimension_semantics = [#tpu.dimension_semantics<parallel>], iteration_bounds = array<i64: 2>, scalar_prefetch = 0 : i64, scratch_operands = 2 : i64, tpu.core_type = #tpu.core_type<tc>, window_params = [{transform_indices = @transform_0, window_bounds = array<i64: 1, 4, 16, 16>}, {transform_indices = @transform_1, window_bounds = array<i64: 144>}, {transform_indices = @transform_2, window_bounds = array<i64: 4>}, {transform_indices = @transform_3, window_bounds = array<i64: 144>}, {transform_indices = @transform_4, window_bounds = array<i64: 4>}, {transform_indices = @transform_5, window_bounds = array<i64: 1, 4, 16, 16>}]} {
    %cst = arith.constant 0.000000e+00 : f32
    %0 = vector.broadcast %cst : f32 to vector<4x18x18xf32>
    %c0 = arith.constant 0 : index
    %c0_0 = arith.constant 0 : index
    %c0_1 = arith.constant 0 : index
    %1 = vector.load %arg7[%c0, %c0_0, %c0_1] : memref<4x18x18xf32, #tpu.memory_space<vmem>>, vector<4x18x18xf32>
    tpu.vector_store %arg7[%c0, %c0_0, %c0_1], %0 {strides = array<i32>} : memref<4x18x18xf32, #tpu.memory_space<vmem>>, vector<4x18x18xf32>,
    %c0_2 = arith.constant 0 : index
    %c0_3 = arith.constant 0 : index
    %c0_4 = arith.constant 0 : index
    %c0_5 = arith.constant 0 : index
    %2 = vector.load %arg1[%c0_2, %c0_3, %c0_4, %c0_5] : memref<1x4x16x16xf32, #tpu.memory_space<vmem>>, vector<1x1x16x16xf32>
    %3 = vector.shape_cast %2 : vector<1x1x16x16xf32> to vector<16x16xf32>
    %c0_6 = arith.constant 0 : index
    %c1 = arith.constant 1 : index
    %c1_7 = arith.constant 1 : index
    %4 = vector.load %arg7[%c0_6, %c1, %c1_7] : memref<4x18x18xf32, #tpu.memory_space<vmem>>, vector<1x16x16xf32>
    %5 = vector.shape_cast %4 : vector<1x16x16xf32> to vector<16x16xf32>
    %6 = vector.shape_cast %3 : vector<16x16xf32> to vector<1x16x16xf32>
    tpu.vector_store %arg7[%c0_6, %c1, %c1_7], %6 {strides = array<i32>} : memref<4x18x18xf32, #tpu.memory_space<vmem>>, vector<1x16x16xf32>,
    %c0_8 = arith.constant 0 : index
    %c1_9 = arith.constant 1 : index
    %c0_10 = arith.constant 0 : index
    %c0_11 = arith.constant 0 : index
    %7 = vector.load %arg1[%c0_8, %c1_9, %c0_10, %c0_11] : memref<1x4x16x16xf32, #tpu.memory_space<vmem>>, vector<1x1x16x16xf32>
    %8 = vector.shape_cast %7 : vector<1x1x16x16xf32> to vector<16x16xf32>
    %c1_12 = arith.constant 1 : index
    %c1_13 = arith.constant 1 : index
    %c1_14 = arith.constant 1 : index
    %9 = vector.load %arg7[%c1_12, %c1_13, %c1_14] : memref<4x18x18xf32, #tpu.memory_space<vmem>>, vector<1x16x16xf32>
    %10 = vector.shape_cast %9 : vector<1x16x16xf32> to vector<16x16xf32>
    %11 = vector.shape_cast %8 : vector<16x16xf32> to vector<1x16x16xf32>
    tpu.vector_store %arg7[%c1_12, %c1_13, %c1_14], %11 {strides = array<i32>} : memref<4x18x18xf32, #tpu.memory_space<vmem>>, vector<1x16x16xf32>,
    %c0_15 = arith.constant 0 : index
    %c2 = arith.constant 2 : index
    %c0_16 = arith.constant 0 : index
    %c0_17 = arith.constant 0 : index
    %12 = vector.load %arg1[%c0_15, %c2, %c0_16, %c0_17] : memref<1x4x16x16xf32, #tpu.memory_space<vmem>>, vector<1x1x16x16xf32>
    %13 = vector.shape_cast %12 : vector<1x1x16x16xf32> to vector<16x16xf32>
    %c2_18 = arith.constant 2 : index
    %c1_19 = arith.constant 1 : index
    %c1_20 = arith.constant 1 : index
    %14 = vector.load %arg7[%c2_18, %c1_19, %c1_20] : memref<4x18x18xf32, #tpu.memory_space<vmem>>, vector<1x16x16xf32>
    %15 = vector.shape_cast %14 : vector<1x16x16xf32> to vector<16x16xf32>
    %16 = vector.shape_cast %13 : vector<16x16xf32> to vector<1x16x16xf32>
    tpu.vector_store %arg7[%c2_18, %c1_19, %c1_20], %16 {strides = array<i32>} : memref<4x18x18xf32, #tpu.memory_space<vmem>>, vector<1x16x16xf32>,
    %c0_21 = arith.constant 0 : index
    %c3 = arith.constant 3 : index
    %c0_22 = arith.constant 0 : index
    %c0_23 = arith.constant 0 : index
    %17 = vector.load %arg1[%c0_21, %c3, %c0_22, %c0_23] : memref<1x4x16x16xf32, #tpu.memory_space<vmem>>, vector<1x1x16x16xf32>
    %18 = vector.shape_cast %17 : vector<1x1x16x16xf32> to vector<16x16xf32>
    %c3_24 = arith.constant 3 : index
    %c1_25 = arith.constant 1 : index
    %c1_26 = arith.constant 1 : index
    %19 = vector.load %arg7[%c3_24, %c1_25, %c1_26] : memref<4x18x18xf32, #tpu.memory_space<vmem>>, vector<1x16x16xf32>
    %20 = vector.shape_cast %19 : vector<1x16x16xf32> to vector<16x16xf32>
    %21 = vector.shape_cast %18 : vector<16x16xf32> to vector<1x16x16xf32>
    tpu.vector_store %arg7[%c3_24, %c1_25, %c1_26], %21 {strides = array<i32>} : memref<4x18x18xf32, #tpu.memory_space<vmem>>, vector<1x16x16xf32>,
    %c0_27 = arith.constant 0 : index
    %22 = memref.load %arg3[%c0_27] : memref<4xf32, #tpu.memory_space<smem>>
    %23 = vector.broadcast %22 : f32 to vector<16x16xf32>
    %c1_28 = arith.constant 1 : index
    %24 = memref.load %arg3[%c1_28] : memref<4xf32, #tpu.memory_space<smem>>
    %25 = vector.broadcast %24 : f32 to vector<16x16xf32>
    %c2_29 = arith.constant 2 : index
    %26 = memref.load %arg3[%c2_29] : memref<4xf32, #tpu.memory_space<smem>>
    %27 = vector.broadcast %26 : f32 to vector<16x16xf32>
    %c3_30 = arith.constant 3 : index
    %28 = memref.load %arg3[%c3_30] : memref<4xf32, #tpu.memory_space<smem>>
    %29 = vector.broadcast %28 : f32 to vector<16x16xf32>
    %c0_31 = arith.constant 0 : index
    %c0_32 = arith.constant 0 : index
    %c0_33 = arith.constant 0 : index
    %30 = vector.load %arg7[%c0_31, %c0_32, %c0_33] : memref<4x18x18xf32, #tpu.memory_space<vmem>>, vector<1x16x16xf32>
    %31 = vector.shape_cast %30 : vector<1x16x16xf32> to vector<16x16xf32>
    %c0_34 = arith.constant 0 : index
    %32 = memref.load %arg2[%c0_34] : memref<144xf32, #tpu.memory_space<smem>>
    %33 = vector.broadcast %32 : f32 to vector<16x16xf32>
    %34 = arith.mulf %31, %33 : vector<16x16xf32>
    %35 = arith.addf %23, %34 : vector<16x16xf32>
    %c36 = arith.constant 36 : index
    %36 = memref.load %arg2[%c36] : memref<144xf32, #tpu.memory_space<smem>>
    %37 = vector.broadcast %36 : f32 to vector<16x16xf32>
    %38 = arith.mulf %31, %37 : vector<16x16xf32>
    %39 = arith.addf %25, %38 : vector<16x16xf32>
    %c72 = arith.constant 72 : index
    %40 = memref.load %arg2[%c72] : memref<144xf32, #tpu.memory_space<smem>>
    %41 = vector.broadcast %40 : f32 to vector<16x16xf32>
    %42 = arith.mulf %31, %41 : vector<16x16xf32>
    %43 = arith.addf %27, %42 : vector<16x16xf32>
    %c108 = arith.constant 108 : index
    %44 = memref.load %arg2[%c108] : memref<144xf32, #tpu.memory_space<smem>>
    %45 = vector.broadcast %44 : f32 to vector<16x16xf32>
    %46 = arith.mulf %31, %45 : vector<16x16xf32>
    %47 = arith.addf %29, %46 : vector<16x16xf32>
    %c0_35 = arith.constant 0 : index
    %c0_36 = arith.constant 0 : index
    %c1_37 = arith.constant 1 : index
    %48 = vector.load %arg7[%c0_35, %c0_36, %c1_37] : memref<4x18x18xf32, #tpu.memory_space<vmem>>, vector<1x16x16xf32>
    %49 = vector.shape_cast %48 : vector<1x16x16xf32> to vector<16x16xf32>
    %c1_38 = arith.constant 1 : index
    %50 = memref.load %arg2[%c1_38] : memref<144xf32, #tpu.memory_space<smem>>
    %51 = vector.broadcast %50 : f32 to vector<16x16xf32>
    %52 = arith.mulf %49, %51 : vector<16x16xf32>
    %53 = arith.addf %35, %52 : vector<16x16xf32>
    %c37 = arith.constant 37 : index
    %54 = memref.load %arg2[%c37] : memref<144xf32, #tpu.memory_space<smem>>
    %55 = vector.broadcast %54 : f32 to vector<16x16xf32>
    %56 = arith.mulf %49, %55 : vector<16x16xf32>
    %57 = arith.addf %39, %56 : vector<16x16xf32>
    %c73 = arith.constant 73 : index
    %58 = memref.load %arg2[%c73] : memref<144xf32, #tpu.memory_space<smem>>
    %59 = vector.broadcast %58 : f32 to vector<16x16xf32>
    %60 = arith.mulf %49, %59 : vector<16x16xf32>
    %61 = arith.addf %43, %60 : vector<16x16xf32>
    %c109 = arith.constant 109 : index
    %62 = memref.load %arg2[%c109] : memref<144xf32, #tpu.memory_space<smem>>
    %63 = vector.broadcast %62 : f32 to vector<16x16xf32>
    %64 = arith.mulf %49, %63 : vector<16x16xf32>
    %65 = arith.addf %47, %64 : vector<16x16xf32>
    %c0_39 = arith.constant 0 : index
    %c0_40 = arith.constant 0 : index
    %c2_41 = arith.constant 2 : index
    %66 = vector.load %arg7[%c0_39, %c0_40, %c2_41] : memref<4x18x18xf32, #tpu.memory_space<vmem>>, vector<1x16x16xf32>
    %67 = vector.shape_cast %66 : vector<1x16x16xf32> to vector<16x16xf32>
    %c2_42 = arith.constant 2 : index
    %68 = memref.load %arg2[%c2_42] : memref<144xf32, #tpu.memory_space<smem>>
    %69 = vector.broadcast %68 : f32 to vector<16x16xf32>
    %70 = arith.mulf %67, %69 : vector<16x16xf32>
    %71 = arith.addf %53, %70 : vector<16x16xf32>
    %c38 = arith.constant 38 : index
    %72 = memref.load %arg2[%c38] : memref<144xf32, #tpu.memory_space<smem>>
    %73 = vector.broadcast %72 : f32 to vector<16x16xf32>
    %74 = arith.mulf %67, %73 : vector<16x16xf32>
    %75 = arith.addf %57, %74 : vector<16x16xf32>
    %c74 = arith.constant 74 : index
    %76 = memref.load %arg2[%c74] : memref<144xf32, #tpu.memory_space<smem>>
    %77 = vector.broadcast %76 : f32 to vector<16x16xf32>
    %78 = arith.mulf %67, %77 : vector<16x16xf32>
    %79 = arith.addf %61, %78 : vector<16x16xf32>
    %c110 = arith.constant 110 : index
    %80 = memref.load %arg2[%c110] : memref<144xf32, #tpu.memory_space<smem>>
    %81 = vector.broadcast %80 : f32 to vector<16x16xf32>
    %82 = arith.mulf %67, %81 : vector<16x16xf32>
    %83 = arith.addf %65, %82 : vector<16x16xf32>
    %c0_43 = arith.constant 0 : index
    %c1_44 = arith.constant 1 : index
    %c0_45 = arith.constant 0 : index
    %84 = vector.load %arg7[%c0_43, %c1_44, %c0_45] : memref<4x18x18xf32, #tpu.memory_space<vmem>>, vector<1x16x16xf32>
    %85 = vector.shape_cast %84 : vector<1x16x16xf32> to vector<16x16xf32>
    %c3_46 = arith.constant 3 : index
    %86 = memref.load %arg2[%c3_46] : memref<144xf32, #tpu.memory_space<smem>>
    %87 = vector.broadcast %86 : f32 to vector<16x16xf32>
    %88 = arith.mulf %85, %87 : vector<16x16xf32>
    %89 = arith.addf %71, %88 : vector<16x16xf32>
    %c39 = arith.constant 39 : index
    %90 = memref.load %arg2[%c39] : memref<144xf32, #tpu.memory_space<smem>>
    %91 = vector.broadcast %90 : f32 to vector<16x16xf32>
    %92 = arith.mulf %85, %91 : vector<16x16xf32>
    %93 = arith.addf %75, %92 : vector<16x16xf32>
    %c75 = arith.constant 75 : index
    %94 = memref.load %arg2[%c75] : memref<144xf32, #tpu.memory_space<smem>>
    %95 = vector.broadcast %94 : f32 to vector<16x16xf32>
    %96 = arith.mulf %85, %95 : vector<16x16xf32>
    %97 = arith.addf %79, %96 : vector<16x16xf32>
    %c111 = arith.constant 111 : index
    %98 = memref.load %arg2[%c111] : memref<144xf32, #tpu.memory_space<smem>>
    %99 = vector.broadcast %98 : f32 to vector<16x16xf32>
    %100 = arith.mulf %85, %99 : vector<16x16xf32>
    %101 = arith.addf %83, %100 : vector<16x16xf32>
    %c0_47 = arith.constant 0 : index
    %c1_48 = arith.constant 1 : index
    %c1_49 = arith.constant 1 : index
    %102 = vector.load %arg7[%c0_47, %c1_48, %c1_49] : memref<4x18x18xf32, #tpu.memory_space<vmem>>, vector<1x16x16xf32>
    %103 = vector.shape_cast %102 : vector<1x16x16xf32> to vector<16x16xf32>
    %c4 = arith.constant 4 : index
    %104 = memref.load %arg2[%c4] : memref<144xf32, #tpu.memory_space<smem>>
    %105 = vector.broadcast %104 : f32 to vector<16x16xf32>
    %106 = arith.mulf %103, %105 : vector<16x16xf32>
    %107 = arith.addf %89, %106 : vector<16x16xf32>
    %c40 = arith.constant 40 : index
    %108 = memref.load %arg2[%c40] : memref<144xf32, #tpu.memory_space<smem>>
    %109 = vector.broadcast %108 : f32 to vector<16x16xf32>
    %110 = arith.mulf %103, %109 : vector<16x16xf32>
    %111 = arith.addf %93, %110 : vector<16x16xf32>
    %c76 = arith.constant 76 : index
    %112 = memref.load %arg2[%c76] : memref<144xf32, #tpu.memory_space<smem>>
    %113 = vector.broadcast %112 : f32 to vector<16x16xf32>
    %114 = arith.mulf %103, %113 : vector<16x16xf32>
    %115 = arith.addf %97, %114 : vector<16x16xf32>
    %c112 = arith.constant 112 : index
    %116 = memref.load %arg2[%c112] : memref<144xf32, #tpu.memory_space<smem>>
    %117 = vector.broadcast %116 : f32 to vector<16x16xf32>
    %118 = arith.mulf %103, %117 : vector<16x16xf32>
    %119 = arith.addf %101, %118 : vector<16x16xf32>
    %c0_50 = arith.constant 0 : index
    %c1_51 = arith.constant 1 : index
    %c2_52 = arith.constant 2 : index
    %120 = vector.load %arg7[%c0_50, %c1_51, %c2_52] : memref<4x18x18xf32, #tpu.memory_space<vmem>>, vector<1x16x16xf32>
    %121 = vector.shape_cast %120 : vector<1x16x16xf32> to vector<16x16xf32>
    %c5 = arith.constant 5 : index
    %122 = memref.load %arg2[%c5] : memref<144xf32, #tpu.memory_space<smem>>
    %123 = vector.broadcast %122 : f32 to vector<16x16xf32>
    %124 = arith.mulf %121, %123 : vector<16x16xf32>
    %125 = arith.addf %107, %124 : vector<16x16xf32>
    %c41 = arith.constant 41 : index
    %126 = memref.load %arg2[%c41] : memref<144xf32, #tpu.memory_space<smem>>
    %127 = vector.broadcast %126 : f32 to vector<16x16xf32>
    %128 = arith.mulf %121, %127 : vector<16x16xf32>
    %129 = arith.addf %111, %128 : vector<16x16xf32>
    %c77 = arith.constant 77 : index
    %130 = memref.load %arg2[%c77] : memref<144xf32, #tpu.memory_space<smem>>
    %131 = vector.broadcast %130 : f32 to vector<16x16xf32>
    %132 = arith.mulf %121, %131 : vector<16x16xf32>
    %133 = arith.addf %115, %132 : vector<16x16xf32>
    %c113 = arith.constant 113 : index
    %134 = memref.load %arg2[%c113] : memref<144xf32, #tpu.memory_space<smem>>
    %135 = vector.broadcast %134 : f32 to vector<16x16xf32>
    %136 = arith.mulf %121, %135 : vector<16x16xf32>
    %137 = arith.addf %119, %136 : vector<16x16xf32>
    %c0_53 = arith.constant 0 : index
    %c2_54 = arith.constant 2 : index
    %c0_55 = arith.constant 0 : index
    %138 = vector.load %arg7[%c0_53, %c2_54, %c0_55] : memref<4x18x18xf32, #tpu.memory_space<vmem>>, vector<1x16x16xf32>
    %139 = vector.shape_cast %138 : vector<1x16x16xf32> to vector<16x16xf32>
    %c6 = arith.constant 6 : index
    %140 = memref.load %arg2[%c6] : memref<144xf32, #tpu.memory_space<smem>>
    %141 = vector.broadcast %140 : f32 to vector<16x16xf32>
    %142 = arith.mulf %139, %141 : vector<16x16xf32>
    %143 = arith.addf %125, %142 : vector<16x16xf32>
    %c42 = arith.constant 42 : index
    %144 = memref.load %arg2[%c42] : memref<144xf32, #tpu.memory_space<smem>>
    %145 = vector.broadcast %144 : f32 to vector<16x16xf32>
    %146 = arith.mulf %139, %145 : vector<16x16xf32>
    %147 = arith.addf %129, %146 : vector<16x16xf32>
    %c78 = arith.constant 78 : index
    %148 = memref.load %arg2[%c78] : memref<144xf32, #tpu.memory_space<smem>>
    %149 = vector.broadcast %148 : f32 to vector<16x16xf32>
    %150 = arith.mulf %139, %149 : vector<16x16xf32>
    %151 = arith.addf %133, %150 : vector<16x16xf32>
    %c114 = arith.constant 114 : index
    %152 = memref.load %arg2[%c114] : memref<144xf32, #tpu.memory_space<smem>>
    %153 = vector.broadcast %152 : f32 to vector<16x16xf32>
    %154 = arith.mulf %139, %153 : vector<16x16xf32>
    %155 = arith.addf %137, %154 : vector<16x16xf32>
    %c0_56 = arith.constant 0 : index
    %c2_57 = arith.constant 2 : index
    %c1_58 = arith.constant 1 : index
    %156 = vector.load %arg7[%c0_56, %c2_57, %c1_58] : memref<4x18x18xf32, #tpu.memory_space<vmem>>, vector<1x16x16xf32>
    %157 = vector.shape_cast %156 : vector<1x16x16xf32> to vector<16x16xf32>
    %c7 = arith.constant 7 : index
    %158 = memref.load %arg2[%c7] : memref<144xf32, #tpu.memory_space<smem>>
    %159 = vector.broadcast %158 : f32 to vector<16x16xf32>
    %160 = arith.mulf %157, %159 : vector<16x16xf32>
    %161 = arith.addf %143, %160 : vector<16x16xf32>
    %c43 = arith.constant 43 : index
    %162 = memref.load %arg2[%c43] : memref<144xf32, #tpu.memory_space<smem>>
    %163 = vector.broadcast %162 : f32 to vector<16x16xf32>
    %164 = arith.mulf %157, %163 : vector<16x16xf32>
    %165 = arith.addf %147, %164 : vector<16x16xf32>
    %c79 = arith.constant 79 : index
    %166 = memref.load %arg2[%c79] : memref<144xf32, #tpu.memory_space<smem>>
    %167 = vector.broadcast %166 : f32 to vector<16x16xf32>
    %168 = arith.mulf %157, %167 : vector<16x16xf32>
    %169 = arith.addf %151, %168 : vector<16x16xf32>
    %c115 = arith.constant 115 : index
    %170 = memref.load %arg2[%c115] : memref<144xf32, #tpu.memory_space<smem>>
    %171 = vector.broadcast %170 : f32 to vector<16x16xf32>
    %172 = arith.mulf %157, %171 : vector<16x16xf32>
    %173 = arith.addf %155, %172 : vector<16x16xf32>
    %c0_59 = arith.constant 0 : index
    %c2_60 = arith.constant 2 : index
    %c2_61 = arith.constant 2 : index
    %174 = vector.load %arg7[%c0_59, %c2_60, %c2_61] : memref<4x18x18xf32, #tpu.memory_space<vmem>>, vector<1x16x16xf32>
    %175 = vector.shape_cast %174 : vector<1x16x16xf32> to vector<16x16xf32>
    %c8 = arith.constant 8 : index
    %176 = memref.load %arg2[%c8] : memref<144xf32, #tpu.memory_space<smem>>
    %177 = vector.broadcast %176 : f32 to vector<16x16xf32>
    %178 = arith.mulf %175, %177 : vector<16x16xf32>
    %179 = arith.addf %161, %178 : vector<16x16xf32>
    %c44 = arith.constant 44 : index
    %180 = memref.load %arg2[%c44] : memref<144xf32, #tpu.memory_space<smem>>
    %181 = vector.broadcast %180 : f32 to vector<16x16xf32>
    %182 = arith.mulf %175, %181 : vector<16x16xf32>
    %183 = arith.addf %165, %182 : vector<16x16xf32>
    %c80 = arith.constant 80 : index
    %184 = memref.load %arg2[%c80] : memref<144xf32, #tpu.memory_space<smem>>
    %185 = vector.broadcast %184 : f32 to vector<16x16xf32>
    %186 = arith.mulf %175, %185 : vector<16x16xf32>
    %187 = arith.addf %169, %186 : vector<16x16xf32>
    %c116 = arith.constant 116 : index
    %188 = memref.load %arg2[%c116] : memref<144xf32, #tpu.memory_space<smem>>
    %189 = vector.broadcast %188 : f32 to vector<16x16xf32>
    %190 = arith.mulf %175, %189 : vector<16x16xf32>
    %191 = arith.addf %173, %190 : vector<16x16xf32>
    %c1_62 = arith.constant 1 : index
    %c0_63 = arith.constant 0 : index
    %c0_64 = arith.constant 0 : index
    %192 = vector.load %arg7[%c1_62, %c0_63, %c0_64] : memref<4x18x18xf32, #tpu.memory_space<vmem>>, vector<1x16x16xf32>
    %193 = vector.shape_cast %192 : vector<1x16x16xf32> to vector<16x16xf32>
    %c9 = arith.constant 9 : index
    %194 = memref.load %arg2[%c9] : memref<144xf32, #tpu.memory_space<smem>>
    %195 = vector.broadcast %194 : f32 to vector<16x16xf32>
    %196 = arith.mulf %193, %195 : vector<16x16xf32>
    %197 = arith.addf %179, %196 : vector<16x16xf32>
    %c45 = arith.constant 45 : index
    %198 = memref.load %arg2[%c45] : memref<144xf32, #tpu.memory_space<smem>>
    %199 = vector.broadcast %198 : f32 to vector<16x16xf32>
    %200 = arith.mulf %193, %199 : vector<16x16xf32>
    %201 = arith.addf %183, %200 : vector<16x16xf32>
    %c81 = arith.constant 81 : index
    %202 = memref.load %arg2[%c81] : memref<144xf32, #tpu.memory_space<smem>>
    %203 = vector.broadcast %202 : f32 to vector<16x16xf32>
    %204 = arith.mulf %193, %203 : vector<16x16xf32>
    %205 = arith.addf %187, %204 : vector<16x16xf32>
    %c117 = arith.constant 117 : index
    %206 = memref.load %arg2[%c117] : memref<144xf32, #tpu.memory_space<smem>>
    %207 = vector.broadcast %206 : f32 to vector<16x16xf32>
    %208 = arith.mulf %193, %207 : vector<16x16xf32>
    %209 = arith.addf %191, %208 : vector<16x16xf32>
    %c1_65 = arith.constant 1 : index
    %c0_66 = arith.constant 0 : index
    %c1_67 = arith.constant 1 : index
    %210 = vector.load %arg7[%c1_65, %c0_66, %c1_67] : memref<4x18x18xf32, #tpu.memory_space<vmem>>, vector<1x16x16xf32>
    %211 = vector.shape_cast %210 : vector<1x16x16xf32> to vector<16x16xf32>
    %c10 = arith.constant 10 : index
    %212 = memref.load %arg2[%c10] : memref<144xf32, #tpu.memory_space<smem>>
    %213 = vector.broadcast %212 : f32 to vector<16x16xf32>
    %214 = arith.mulf %211, %213 : vector<16x16xf32>
    %215 = arith.addf %197, %214 : vector<16x16xf32>
    %c46 = arith.constant 46 : index
    %216 = memref.load %arg2[%c46] : memref<144xf32, #tpu.memory_space<smem>>
    %217 = vector.broadcast %216 : f32 to vector<16x16xf32>
    %218 = arith.mulf %211, %217 : vector<16x16xf32>
    %219 = arith.addf %201, %218 : vector<16x16xf32>
    %c82 = arith.constant 82 : index
    %220 = memref.load %arg2[%c82] : memref<144xf32, #tpu.memory_space<smem>>
    %221 = vector.broadcast %220 : f32 to vector<16x16xf32>
    %222 = arith.mulf %211, %221 : vector<16x16xf32>
    %223 = arith.addf %205, %222 : vector<16x16xf32>
    %c118 = arith.constant 118 : index
    %224 = memref.load %arg2[%c118] : memref<144xf32, #tpu.memory_space<smem>>
    %225 = vector.broadcast %224 : f32 to vector<16x16xf32>
    %226 = arith.mulf %211, %225 : vector<16x16xf32>
    %227 = arith.addf %209, %226 : vector<16x16xf32>
    %c1_68 = arith.constant 1 : index
    %c0_69 = arith.constant 0 : index
    %c2_70 = arith.constant 2 : index
    %228 = vector.load %arg7[%c1_68, %c0_69, %c2_70] : memref<4x18x18xf32, #tpu.memory_space<vmem>>, vector<1x16x16xf32>
    %229 = vector.shape_cast %228 : vector<1x16x16xf32> to vector<16x16xf32>
    %c11 = arith.constant 11 : index
    %230 = memref.load %arg2[%c11] : memref<144xf32, #tpu.memory_space<smem>>
    %231 = vector.broadcast %230 : f32 to vector<16x16xf32>
    %232 = arith.mulf %229, %231 : vector<16x16xf32>
    %233 = arith.addf %215, %232 : vector<16x16xf32>
    %c47 = arith.constant 47 : index
    %234 = memref.load %arg2[%c47] : memref<144xf32, #tpu.memory_space<smem>>
    %235 = vector.broadcast %234 : f32 to vector<16x16xf32>
    %236 = arith.mulf %229, %235 : vector<16x16xf32>
    %237 = arith.addf %219, %236 : vector<16x16xf32>
    %c83 = arith.constant 83 : index
    %238 = memref.load %arg2[%c83] : memref<144xf32, #tpu.memory_space<smem>>
    %239 = vector.broadcast %238 : f32 to vector<16x16xf32>
    %240 = arith.mulf %229, %239 : vector<16x16xf32>
    %241 = arith.addf %223, %240 : vector<16x16xf32>
    %c119 = arith.constant 119 : index
    %242 = memref.load %arg2[%c119] : memref<144xf32, #tpu.memory_space<smem>>
    %243 = vector.broadcast %242 : f32 to vector<16x16xf32>
    %244 = arith.mulf %229, %243 : vector<16x16xf32>
    %245 = arith.addf %227, %244 : vector<16x16xf32>
    %c1_71 = arith.constant 1 : index
    %c1_72 = arith.constant 1 : index
    %c0_73 = arith.constant 0 : index
    %246 = vector.load %arg7[%c1_71, %c1_72, %c0_73] : memref<4x18x18xf32, #tpu.memory_space<vmem>>, vector<1x16x16xf32>
    %247 = vector.shape_cast %246 : vector<1x16x16xf32> to vector<16x16xf32>
    %c12 = arith.constant 12 : index
    %248 = memref.load %arg2[%c12] : memref<144xf32, #tpu.memory_space<smem>>
    %249 = vector.broadcast %248 : f32 to vector<16x16xf32>
    %250 = arith.mulf %247, %249 : vector<16x16xf32>
    %251 = arith.addf %233, %250 : vector<16x16xf32>
    %c48 = arith.constant 48 : index
    %252 = memref.load %arg2[%c48] : memref<144xf32, #tpu.memory_space<smem>>
    %253 = vector.broadcast %252 : f32 to vector<16x16xf32>
    %254 = arith.mulf %247, %253 : vector<16x16xf32>
    %255 = arith.addf %237, %254 : vector<16x16xf32>
    %c84 = arith.constant 84 : index
    %256 = memref.load %arg2[%c84] : memref<144xf32, #tpu.memory_space<smem>>
    %257 = vector.broadcast %256 : f32 to vector<16x16xf32>
    %258 = arith.mulf %247, %257 : vector<16x16xf32>
    %259 = arith.addf %241, %258 : vector<16x16xf32>
    %c120 = arith.constant 120 : index
    %260 = memref.load %arg2[%c120] : memref<144xf32, #tpu.memory_space<smem>>
    %261 = vector.broadcast %260 : f32 to vector<16x16xf32>
    %262 = arith.mulf %247, %261 : vector<16x16xf32>
    %263 = arith.addf %245, %262 : vector<16x16xf32>
    %c1_74 = arith.constant 1 : index
    %c1_75 = arith.constant 1 : index
    %c1_76 = arith.constant 1 : index
    %264 = vector.load %arg7[%c1_74, %c1_75, %c1_76] : memref<4x18x18xf32, #tpu.memory_space<vmem>>, vector<1x16x16xf32>
    %265 = vector.shape_cast %264 : vector<1x16x16xf32> to vector<16x16xf32>
    %c13 = arith.constant 13 : index
    %266 = memref.load %arg2[%c13] : memref<144xf32, #tpu.memory_space<smem>>
    %267 = vector.broadcast %266 : f32 to vector<16x16xf32>
    %268 = arith.mulf %265, %267 : vector<16x16xf32>
    %269 = arith.addf %251, %268 : vector<16x16xf32>
    %c49 = arith.constant 49 : index
    %270 = memref.load %arg2[%c49] : memref<144xf32, #tpu.memory_space<smem>>
    %271 = vector.broadcast %270 : f32 to vector<16x16xf32>
    %272 = arith.mulf %265, %271 : vector<16x16xf32>
    %273 = arith.addf %255, %272 : vector<16x16xf32>
    %c85 = arith.constant 85 : index
    %274 = memref.load %arg2[%c85] : memref<144xf32, #tpu.memory_space<smem>>
    %275 = vector.broadcast %274 : f32 to vector<16x16xf32>
    %276 = arith.mulf %265, %275 : vector<16x16xf32>
    %277 = arith.addf %259, %276 : vector<16x16xf32>
    %c121 = arith.constant 121 : index
    %278 = memref.load %arg2[%c121] : memref<144xf32, #tpu.memory_space<smem>>
    %279 = vector.broadcast %278 : f32 to vector<16x16xf32>
    %280 = arith.mulf %265, %279 : vector<16x16xf32>
    %281 = arith.addf %263, %280 : vector<16x16xf32>
    %c1_77 = arith.constant 1 : index
    %c1_78 = arith.constant 1 : index
    %c2_79 = arith.constant 2 : index
    %282 = vector.load %arg7[%c1_77, %c1_78, %c2_79] : memref<4x18x18xf32, #tpu.memory_space<vmem>>, vector<1x16x16xf32>
    %283 = vector.shape_cast %282 : vector<1x16x16xf32> to vector<16x16xf32>
    %c14 = arith.constant 14 : index
    %284 = memref.load %arg2[%c14] : memref<144xf32, #tpu.memory_space<smem>>
    %285 = vector.broadcast %284 : f32 to vector<16x16xf32>
    %286 = arith.mulf %283, %285 : vector<16x16xf32>
    %287 = arith.addf %269, %286 : vector<16x16xf32>
    %c50 = arith.constant 50 : index
    %288 = memref.load %arg2[%c50] : memref<144xf32, #tpu.memory_space<smem>>
    %289 = vector.broadcast %288 : f32 to vector<16x16xf32>
    %290 = arith.mulf %283, %289 : vector<16x16xf32>
    %291 = arith.addf %273, %290 : vector<16x16xf32>
    %c86 = arith.constant 86 : index
    %292 = memref.load %arg2[%c86] : memref<144xf32, #tpu.memory_space<smem>>
    %293 = vector.broadcast %292 : f32 to vector<16x16xf32>
    %294 = arith.mulf %283, %293 : vector<16x16xf32>
    %295 = arith.addf %277, %294 : vector<16x16xf32>
    %c122 = arith.constant 122 : index
    %296 = memref.load %arg2[%c122] : memref<144xf32, #tpu.memory_space<smem>>
    %297 = vector.broadcast %296 : f32 to vector<16x16xf32>
    %298 = arith.mulf %283, %297 : vector<16x16xf32>
    %299 = arith.addf %281, %298 : vector<16x16xf32>
    %c1_80 = arith.constant 1 : index
    %c2_81 = arith.constant 2 : index
    %c0_82 = arith.constant 0 : index
    %300 = vector.load %arg7[%c1_80, %c2_81, %c0_82] : memref<4x18x18xf32, #tpu.memory_space<vmem>>, vector<1x16x16xf32>
    %301 = vector.shape_cast %300 : vector<1x16x16xf32> to vector<16x16xf32>
    %c15 = arith.constant 15 : index
    %302 = memref.load %arg2[%c15] : memref<144xf32, #tpu.memory_space<smem>>
    %303 = vector.broadcast %302 : f32 to vector<16x16xf32>
    %304 = arith.mulf %301, %303 : vector<16x16xf32>
    %305 = arith.addf %287, %304 : vector<16x16xf32>
    %c51 = arith.constant 51 : index
    %306 = memref.load %arg2[%c51] : memref<144xf32, #tpu.memory_space<smem>>
    %307 = vector.broadcast %306 : f32 to vector<16x16xf32>
    %308 = arith.mulf %301, %307 : vector<16x16xf32>
    %309 = arith.addf %291, %308 : vector<16x16xf32>
    %c87 = arith.constant 87 : index
    %310 = memref.load %arg2[%c87] : memref<144xf32, #tpu.memory_space<smem>>
    %311 = vector.broadcast %310 : f32 to vector<16x16xf32>
    %312 = arith.mulf %301, %311 : vector<16x16xf32>
    %313 = arith.addf %295, %312 : vector<16x16xf32>
    %c123 = arith.constant 123 : index
    %314 = memref.load %arg2[%c123] : memref<144xf32, #tpu.memory_space<smem>>
    %315 = vector.broadcast %314 : f32 to vector<16x16xf32>
    %316 = arith.mulf %301, %315 : vector<16x16xf32>
    %317 = arith.addf %299, %316 : vector<16x16xf32>
    %c1_83 = arith.constant 1 : index
    %c2_84 = arith.constant 2 : index
    %c1_85 = arith.constant 1 : index
    %318 = vector.load %arg7[%c1_83, %c2_84, %c1_85] : memref<4x18x18xf32, #tpu.memory_space<vmem>>, vector<1x16x16xf32>
    %319 = vector.shape_cast %318 : vector<1x16x16xf32> to vector<16x16xf32>
    %c16 = arith.constant 16 : index
    %320 = memref.load %arg2[%c16] : memref<144xf32, #tpu.memory_space<smem>>
    %321 = vector.broadcast %320 : f32 to vector<16x16xf32>
    %322 = arith.mulf %319, %321 : vector<16x16xf32>
    %323 = arith.addf %305, %322 : vector<16x16xf32>
    %c52 = arith.constant 52 : index
    %324 = memref.load %arg2[%c52] : memref<144xf32, #tpu.memory_space<smem>>
    %325 = vector.broadcast %324 : f32 to vector<16x16xf32>
    %326 = arith.mulf %319, %325 : vector<16x16xf32>
    %327 = arith.addf %309, %326 : vector<16x16xf32>
    %c88 = arith.constant 88 : index
    %328 = memref.load %arg2[%c88] : memref<144xf32, #tpu.memory_space<smem>>
    %329 = vector.broadcast %328 : f32 to vector<16x16xf32>
    %330 = arith.mulf %319, %329 : vector<16x16xf32>
    %331 = arith.addf %313, %330 : vector<16x16xf32>
    %c124 = arith.constant 124 : index
    %332 = memref.load %arg2[%c124] : memref<144xf32, #tpu.memory_space<smem>>
    %333 = vector.broadcast %332 : f32 to vector<16x16xf32>
    %334 = arith.mulf %319, %333 : vector<16x16xf32>
    %335 = arith.addf %317, %334 : vector<16x16xf32>
    %c1_86 = arith.constant 1 : index
    %c2_87 = arith.constant 2 : index
    %c2_88 = arith.constant 2 : index
    %336 = vector.load %arg7[%c1_86, %c2_87, %c2_88] : memref<4x18x18xf32, #tpu.memory_space<vmem>>, vector<1x16x16xf32>
    %337 = vector.shape_cast %336 : vector<1x16x16xf32> to vector<16x16xf32>
    %c17 = arith.constant 17 : index
    %338 = memref.load %arg2[%c17] : memref<144xf32, #tpu.memory_space<smem>>
    %339 = vector.broadcast %338 : f32 to vector<16x16xf32>
    %340 = arith.mulf %337, %339 : vector<16x16xf32>
    %341 = arith.addf %323, %340 : vector<16x16xf32>
    %c53 = arith.constant 53 : index
    %342 = memref.load %arg2[%c53] : memref<144xf32, #tpu.memory_space<smem>>
    %343 = vector.broadcast %342 : f32 to vector<16x16xf32>
    %344 = arith.mulf %337, %343 : vector<16x16xf32>
    %345 = arith.addf %327, %344 : vector<16x16xf32>
    %c89 = arith.constant 89 : index
    %346 = memref.load %arg2[%c89] : memref<144xf32, #tpu.memory_space<smem>>
    %347 = vector.broadcast %346 : f32 to vector<16x16xf32>
    %348 = arith.mulf %337, %347 : vector<16x16xf32>
    %349 = arith.addf %331, %348 : vector<16x16xf32>
    %c125 = arith.constant 125 : index
    %350 = memref.load %arg2[%c125] : memref<144xf32, #tpu.memory_space<smem>>
    %351 = vector.broadcast %350 : f32 to vector<16x16xf32>
    %352 = arith.mulf %337, %351 : vector<16x16xf32>
    %353 = arith.addf %335, %352 : vector<16x16xf32>
    %c2_89 = arith.constant 2 : index
    %c0_90 = arith.constant 0 : index
    %c0_91 = arith.constant 0 : index
    %354 = vector.load %arg7[%c2_89, %c0_90, %c0_91] : memref<4x18x18xf32, #tpu.memory_space<vmem>>, vector<1x16x16xf32>
    %355 = vector.shape_cast %354 : vector<1x16x16xf32> to vector<16x16xf32>
    %c18 = arith.constant 18 : index
    %356 = memref.load %arg2[%c18] : memref<144xf32, #tpu.memory_space<smem>>
    %357 = vector.broadcast %356 : f32 to vector<16x16xf32>
    %358 = arith.mulf %355, %357 : vector<16x16xf32>
    %359 = arith.addf %341, %358 : vector<16x16xf32>
    %c54 = arith.constant 54 : index
    %360 = memref.load %arg2[%c54] : memref<144xf32, #tpu.memory_space<smem>>
    %361 = vector.broadcast %360 : f32 to vector<16x16xf32>
    %362 = arith.mulf %355, %361 : vector<16x16xf32>
    %363 = arith.addf %345, %362 : vector<16x16xf32>
    %c90 = arith.constant 90 : index
    %364 = memref.load %arg2[%c90] : memref<144xf32, #tpu.memory_space<smem>>
    %365 = vector.broadcast %364 : f32 to vector<16x16xf32>
    %366 = arith.mulf %355, %365 : vector<16x16xf32>
    %367 = arith.addf %349, %366 : vector<16x16xf32>
    %c126 = arith.constant 126 : index
    %368 = memref.load %arg2[%c126] : memref<144xf32, #tpu.memory_space<smem>>
    %369 = vector.broadcast %368 : f32 to vector<16x16xf32>
    %370 = arith.mulf %355, %369 : vector<16x16xf32>
    %371 = arith.addf %353, %370 : vector<16x16xf32>
    %c2_92 = arith.constant 2 : index
    %c0_93 = arith.constant 0 : index
    %c1_94 = arith.constant 1 : index
    %372 = vector.load %arg7[%c2_92, %c0_93, %c1_94] : memref<4x18x18xf32, #tpu.memory_space<vmem>>, vector<1x16x16xf32>
    %373 = vector.shape_cast %372 : vector<1x16x16xf32> to vector<16x16xf32>
    %c19 = arith.constant 19 : index
    %374 = memref.load %arg2[%c19] : memref<144xf32, #tpu.memory_space<smem>>
    %375 = vector.broadcast %374 : f32 to vector<16x16xf32>
    %376 = arith.mulf %373, %375 : vector<16x16xf32>
    %377 = arith.addf %359, %376 : vector<16x16xf32>
    %c55 = arith.constant 55 : index
    %378 = memref.load %arg2[%c55] : memref<144xf32, #tpu.memory_space<smem>>
    %379 = vector.broadcast %378 : f32 to vector<16x16xf32>
    %380 = arith.mulf %373, %379 : vector<16x16xf32>
    %381 = arith.addf %363, %380 : vector<16x16xf32>
    %c91 = arith.constant 91 : index
    %382 = memref.load %arg2[%c91] : memref<144xf32, #tpu.memory_space<smem>>
    %383 = vector.broadcast %382 : f32 to vector<16x16xf32>
    %384 = arith.mulf %373, %383 : vector<16x16xf32>
    %385 = arith.addf %367, %384 : vector<16x16xf32>
    %c127 = arith.constant 127 : index
    %386 = memref.load %arg2[%c127] : memref<144xf32, #tpu.memory_space<smem>>
    %387 = vector.broadcast %386 : f32 to vector<16x16xf32>
    %388 = arith.mulf %373, %387 : vector<16x16xf32>
    %389 = arith.addf %371, %388 : vector<16x16xf32>
    %c2_95 = arith.constant 2 : index
    %c0_96 = arith.constant 0 : index
    %c2_97 = arith.constant 2 : index
    %390 = vector.load %arg7[%c2_95, %c0_96, %c2_97] : memref<4x18x18xf32, #tpu.memory_space<vmem>>, vector<1x16x16xf32>
    %391 = vector.shape_cast %390 : vector<1x16x16xf32> to vector<16x16xf32>
    %c20 = arith.constant 20 : index
    %392 = memref.load %arg2[%c20] : memref<144xf32, #tpu.memory_space<smem>>
    %393 = vector.broadcast %392 : f32 to vector<16x16xf32>
    %394 = arith.mulf %391, %393 : vector<16x16xf32>
    %395 = arith.addf %377, %394 : vector<16x16xf32>
    %c56 = arith.constant 56 : index
    %396 = memref.load %arg2[%c56] : memref<144xf32, #tpu.memory_space<smem>>
    %397 = vector.broadcast %396 : f32 to vector<16x16xf32>
    %398 = arith.mulf %391, %397 : vector<16x16xf32>
    %399 = arith.addf %381, %398 : vector<16x16xf32>
    %c92 = arith.constant 92 : index
    %400 = memref.load %arg2[%c92] : memref<144xf32, #tpu.memory_space<smem>>
    %401 = vector.broadcast %400 : f32 to vector<16x16xf32>
    %402 = arith.mulf %391, %401 : vector<16x16xf32>
    %403 = arith.addf %385, %402 : vector<16x16xf32>
    %c128 = arith.constant 128 : index
    %404 = memref.load %arg2[%c128] : memref<144xf32, #tpu.memory_space<smem>>
    %405 = vector.broadcast %404 : f32 to vector<16x16xf32>
    %406 = arith.mulf %391, %405 : vector<16x16xf32>
    %407 = arith.addf %389, %406 : vector<16x16xf32>
    %c2_98 = arith.constant 2 : index
    %c1_99 = arith.constant 1 : index
    %c0_100 = arith.constant 0 : index
    %408 = vector.load %arg7[%c2_98, %c1_99, %c0_100] : memref<4x18x18xf32, #tpu.memory_space<vmem>>, vector<1x16x16xf32>
    %409 = vector.shape_cast %408 : vector<1x16x16xf32> to vector<16x16xf32>
    %c21 = arith.constant 21 : index
    %410 = memref.load %arg2[%c21] : memref<144xf32, #tpu.memory_space<smem>>
    %411 = vector.broadcast %410 : f32 to vector<16x16xf32>
    %412 = arith.mulf %409, %411 : vector<16x16xf32>
    %413 = arith.addf %395, %412 : vector<16x16xf32>
    %c57 = arith.constant 57 : index
    %414 = memref.load %arg2[%c57] : memref<144xf32, #tpu.memory_space<smem>>
    %415 = vector.broadcast %414 : f32 to vector<16x16xf32>
    %416 = arith.mulf %409, %415 : vector<16x16xf32>
    %417 = arith.addf %399, %416 : vector<16x16xf32>
    %c93 = arith.constant 93 : index
    %418 = memref.load %arg2[%c93] : memref<144xf32, #tpu.memory_space<smem>>
    %419 = vector.broadcast %418 : f32 to vector<16x16xf32>
    %420 = arith.mulf %409, %419 : vector<16x16xf32>
    %421 = arith.addf %403, %420 : vector<16x16xf32>
    %c129 = arith.constant 129 : index
    %422 = memref.load %arg2[%c129] : memref<144xf32, #tpu.memory_space<smem>>
    %423 = vector.broadcast %422 : f32 to vector<16x16xf32>
    %424 = arith.mulf %409, %423 : vector<16x16xf32>
    %425 = arith.addf %407, %424 : vector<16x16xf32>
    %c2_101 = arith.constant 2 : index
    %c1_102 = arith.constant 1 : index
    %c1_103 = arith.constant 1 : index
    %426 = vector.load %arg7[%c2_101, %c1_102, %c1_103] : memref<4x18x18xf32, #tpu.memory_space<vmem>>, vector<1x16x16xf32>
    %427 = vector.shape_cast %426 : vector<1x16x16xf32> to vector<16x16xf32>
    %c22 = arith.constant 22 : index
    %428 = memref.load %arg2[%c22] : memref<144xf32, #tpu.memory_space<smem>>
    %429 = vector.broadcast %428 : f32 to vector<16x16xf32>
    %430 = arith.mulf %427, %429 : vector<16x16xf32>
    %431 = arith.addf %413, %430 : vector<16x16xf32>
    %c58 = arith.constant 58 : index
    %432 = memref.load %arg2[%c58] : memref<144xf32, #tpu.memory_space<smem>>
    %433 = vector.broadcast %432 : f32 to vector<16x16xf32>
    %434 = arith.mulf %427, %433 : vector<16x16xf32>
    %435 = arith.addf %417, %434 : vector<16x16xf32>
    %c94 = arith.constant 94 : index
    %436 = memref.load %arg2[%c94] : memref<144xf32, #tpu.memory_space<smem>>
    %437 = vector.broadcast %436 : f32 to vector<16x16xf32>
    %438 = arith.mulf %427, %437 : vector<16x16xf32>
    %439 = arith.addf %421, %438 : vector<16x16xf32>
    %c130 = arith.constant 130 : index
    %440 = memref.load %arg2[%c130] : memref<144xf32, #tpu.memory_space<smem>>
    %441 = vector.broadcast %440 : f32 to vector<16x16xf32>
    %442 = arith.mulf %427, %441 : vector<16x16xf32>
    %443 = arith.addf %425, %442 : vector<16x16xf32>
    %c2_104 = arith.constant 2 : index
    %c1_105 = arith.constant 1 : index
    %c2_106 = arith.constant 2 : index
    %444 = vector.load %arg7[%c2_104, %c1_105, %c2_106] : memref<4x18x18xf32, #tpu.memory_space<vmem>>, vector<1x16x16xf32>
    %445 = vector.shape_cast %444 : vector<1x16x16xf32> to vector<16x16xf32>
    %c23 = arith.constant 23 : index
    %446 = memref.load %arg2[%c23] : memref<144xf32, #tpu.memory_space<smem>>
    %447 = vector.broadcast %446 : f32 to vector<16x16xf32>
    %448 = arith.mulf %445, %447 : vector<16x16xf32>
    %449 = arith.addf %431, %448 : vector<16x16xf32>
    %c59 = arith.constant 59 : index
    %450 = memref.load %arg2[%c59] : memref<144xf32, #tpu.memory_space<smem>>
    %451 = vector.broadcast %450 : f32 to vector<16x16xf32>
    %452 = arith.mulf %445, %451 : vector<16x16xf32>
    %453 = arith.addf %435, %452 : vector<16x16xf32>
    %c95 = arith.constant 95 : index
    %454 = memref.load %arg2[%c95] : memref<144xf32, #tpu.memory_space<smem>>
    %455 = vector.broadcast %454 : f32 to vector<16x16xf32>
    %456 = arith.mulf %445, %455 : vector<16x16xf32>
    %457 = arith.addf %439, %456 : vector<16x16xf32>
    %c131 = arith.constant 131 : index
    %458 = memref.load %arg2[%c131] : memref<144xf32, #tpu.memory_space<smem>>
    %459 = vector.broadcast %458 : f32 to vector<16x16xf32>
    %460 = arith.mulf %445, %459 : vector<16x16xf32>
    %461 = arith.addf %443, %460 : vector<16x16xf32>
    %c2_107 = arith.constant 2 : index
    %c2_108 = arith.constant 2 : index
    %c0_109 = arith.constant 0 : index
    %462 = vector.load %arg7[%c2_107, %c2_108, %c0_109] : memref<4x18x18xf32, #tpu.memory_space<vmem>>, vector<1x16x16xf32>
    %463 = vector.shape_cast %462 : vector<1x16x16xf32> to vector<16x16xf32>
    %c24 = arith.constant 24 : index
    %464 = memref.load %arg2[%c24] : memref<144xf32, #tpu.memory_space<smem>>
    %465 = vector.broadcast %464 : f32 to vector<16x16xf32>
    %466 = arith.mulf %463, %465 : vector<16x16xf32>
    %467 = arith.addf %449, %466 : vector<16x16xf32>
    %c60 = arith.constant 60 : index
    %468 = memref.load %arg2[%c60] : memref<144xf32, #tpu.memory_space<smem>>
    %469 = vector.broadcast %468 : f32 to vector<16x16xf32>
    %470 = arith.mulf %463, %469 : vector<16x16xf32>
    %471 = arith.addf %453, %470 : vector<16x16xf32>
    %c96 = arith.constant 96 : index
    %472 = memref.load %arg2[%c96] : memref<144xf32, #tpu.memory_space<smem>>
    %473 = vector.broadcast %472 : f32 to vector<16x16xf32>
    %474 = arith.mulf %463, %473 : vector<16x16xf32>
    %475 = arith.addf %457, %474 : vector<16x16xf32>
    %c132 = arith.constant 132 : index
    %476 = memref.load %arg2[%c132] : memref<144xf32, #tpu.memory_space<smem>>
    %477 = vector.broadcast %476 : f32 to vector<16x16xf32>
    %478 = arith.mulf %463, %477 : vector<16x16xf32>
    %479 = arith.addf %461, %478 : vector<16x16xf32>
    %c2_110 = arith.constant 2 : index
    %c2_111 = arith.constant 2 : index
    %c1_112 = arith.constant 1 : index
    %480 = vector.load %arg7[%c2_110, %c2_111, %c1_112] : memref<4x18x18xf32, #tpu.memory_space<vmem>>, vector<1x16x16xf32>
    %481 = vector.shape_cast %480 : vector<1x16x16xf32> to vector<16x16xf32>
    %c25 = arith.constant 25 : index
    %482 = memref.load %arg2[%c25] : memref<144xf32, #tpu.memory_space<smem>>
    %483 = vector.broadcast %482 : f32 to vector<16x16xf32>
    %484 = arith.mulf %481, %483 : vector<16x16xf32>
    %485 = arith.addf %467, %484 : vector<16x16xf32>
    %c61 = arith.constant 61 : index
    %486 = memref.load %arg2[%c61] : memref<144xf32, #tpu.memory_space<smem>>
    %487 = vector.broadcast %486 : f32 to vector<16x16xf32>
    %488 = arith.mulf %481, %487 : vector<16x16xf32>
    %489 = arith.addf %471, %488 : vector<16x16xf32>
    %c97 = arith.constant 97 : index
    %490 = memref.load %arg2[%c97] : memref<144xf32, #tpu.memory_space<smem>>
    %491 = vector.broadcast %490 : f32 to vector<16x16xf32>
    %492 = arith.mulf %481, %491 : vector<16x16xf32>
    %493 = arith.addf %475, %492 : vector<16x16xf32>
    %c133 = arith.constant 133 : index
    %494 = memref.load %arg2[%c133] : memref<144xf32, #tpu.memory_space<smem>>
    %495 = vector.broadcast %494 : f32 to vector<16x16xf32>
    %496 = arith.mulf %481, %495 : vector<16x16xf32>
    %497 = arith.addf %479, %496 : vector<16x16xf32>
    %c2_113 = arith.constant 2 : index
    %c2_114 = arith.constant 2 : index
    %c2_115 = arith.constant 2 : index
    %498 = vector.load %arg7[%c2_113, %c2_114, %c2_115] : memref<4x18x18xf32, #tpu.memory_space<vmem>>, vector<1x16x16xf32>
    %499 = vector.shape_cast %498 : vector<1x16x16xf32> to vector<16x16xf32>
    %c26 = arith.constant 26 : index
    %500 = memref.load %arg2[%c26] : memref<144xf32, #tpu.memory_space<smem>>
    %501 = vector.broadcast %500 : f32 to vector<16x16xf32>
    %502 = arith.mulf %499, %501 : vector<16x16xf32>
    %503 = arith.addf %485, %502 : vector<16x16xf32>
    %c62 = arith.constant 62 : index
    %504 = memref.load %arg2[%c62] : memref<144xf32, #tpu.memory_space<smem>>
    %505 = vector.broadcast %504 : f32 to vector<16x16xf32>
    %506 = arith.mulf %499, %505 : vector<16x16xf32>
    %507 = arith.addf %489, %506 : vector<16x16xf32>
    %c98 = arith.constant 98 : index
    %508 = memref.load %arg2[%c98] : memref<144xf32, #tpu.memory_space<smem>>
    %509 = vector.broadcast %508 : f32 to vector<16x16xf32>
    %510 = arith.mulf %499, %509 : vector<16x16xf32>
    %511 = arith.addf %493, %510 : vector<16x16xf32>
    %c134 = arith.constant 134 : index
    %512 = memref.load %arg2[%c134] : memref<144xf32, #tpu.memory_space<smem>>
    %513 = vector.broadcast %512 : f32 to vector<16x16xf32>
    %514 = arith.mulf %499, %513 : vector<16x16xf32>
    %515 = arith.addf %497, %514 : vector<16x16xf32>
    %c3_116 = arith.constant 3 : index
    %c0_117 = arith.constant 0 : index
    %c0_118 = arith.constant 0 : index
    %516 = vector.load %arg7[%c3_116, %c0_117, %c0_118] : memref<4x18x18xf32, #tpu.memory_space<vmem>>, vector<1x16x16xf32>
    %517 = vector.shape_cast %516 : vector<1x16x16xf32> to vector<16x16xf32>
    %c27 = arith.constant 27 : index
    %518 = memref.load %arg2[%c27] : memref<144xf32, #tpu.memory_space<smem>>
    %519 = vector.broadcast %518 : f32 to vector<16x16xf32>
    %520 = arith.mulf %517, %519 : vector<16x16xf32>
    %521 = arith.addf %503, %520 : vector<16x16xf32>
    %c63 = arith.constant 63 : index
    %522 = memref.load %arg2[%c63] : memref<144xf32, #tpu.memory_space<smem>>
    %523 = vector.broadcast %522 : f32 to vector<16x16xf32>
    %524 = arith.mulf %517, %523 : vector<16x16xf32>
    %525 = arith.addf %507, %524 : vector<16x16xf32>
    %c99 = arith.constant 99 : index
    %526 = memref.load %arg2[%c99] : memref<144xf32, #tpu.memory_space<smem>>
    %527 = vector.broadcast %526 : f32 to vector<16x16xf32>
    %528 = arith.mulf %517, %527 : vector<16x16xf32>
    %529 = arith.addf %511, %528 : vector<16x16xf32>
    %c135 = arith.constant 135 : index
    %530 = memref.load %arg2[%c135] : memref<144xf32, #tpu.memory_space<smem>>
    %531 = vector.broadcast %530 : f32 to vector<16x16xf32>
    %532 = arith.mulf %517, %531 : vector<16x16xf32>
    %533 = arith.addf %515, %532 : vector<16x16xf32>
    %c3_119 = arith.constant 3 : index
    %c0_120 = arith.constant 0 : index
    %c1_121 = arith.constant 1 : index
    %534 = vector.load %arg7[%c3_119, %c0_120, %c1_121] : memref<4x18x18xf32, #tpu.memory_space<vmem>>, vector<1x16x16xf32>
    %535 = vector.shape_cast %534 : vector<1x16x16xf32> to vector<16x16xf32>
    %c28 = arith.constant 28 : index
    %536 = memref.load %arg2[%c28] : memref<144xf32, #tpu.memory_space<smem>>
    %537 = vector.broadcast %536 : f32 to vector<16x16xf32>
    %538 = arith.mulf %535, %537 : vector<16x16xf32>
    %539 = arith.addf %521, %538 : vector<16x16xf32>
    %c64 = arith.constant 64 : index
    %540 = memref.load %arg2[%c64] : memref<144xf32, #tpu.memory_space<smem>>
    %541 = vector.broadcast %540 : f32 to vector<16x16xf32>
    %542 = arith.mulf %535, %541 : vector<16x16xf32>
    %543 = arith.addf %525, %542 : vector<16x16xf32>
    %c100 = arith.constant 100 : index
    %544 = memref.load %arg2[%c100] : memref<144xf32, #tpu.memory_space<smem>>
    %545 = vector.broadcast %544 : f32 to vector<16x16xf32>
    %546 = arith.mulf %535, %545 : vector<16x16xf32>
    %547 = arith.addf %529, %546 : vector<16x16xf32>
    %c136 = arith.constant 136 : index
    %548 = memref.load %arg2[%c136] : memref<144xf32, #tpu.memory_space<smem>>
    %549 = vector.broadcast %548 : f32 to vector<16x16xf32>
    %550 = arith.mulf %535, %549 : vector<16x16xf32>
    %551 = arith.addf %533, %550 : vector<16x16xf32>
    %c3_122 = arith.constant 3 : index
    %c0_123 = arith.constant 0 : index
    %c2_124 = arith.constant 2 : index
    %552 = vector.load %arg7[%c3_122, %c0_123, %c2_124] : memref<4x18x18xf32, #tpu.memory_space<vmem>>, vector<1x16x16xf32>
    %553 = vector.shape_cast %552 : vector<1x16x16xf32> to vector<16x16xf32>
    %c29 = arith.constant 29 : index
    %554 = memref.load %arg2[%c29] : memref<144xf32, #tpu.memory_space<smem>>
    %555 = vector.broadcast %554 : f32 to vector<16x16xf32>
    %556 = arith.mulf %553, %555 : vector<16x16xf32>
    %557 = arith.addf %539, %556 : vector<16x16xf32>
    %c65 = arith.constant 65 : index
    %558 = memref.load %arg2[%c65] : memref<144xf32, #tpu.memory_space<smem>>
    %559 = vector.broadcast %558 : f32 to vector<16x16xf32>
    %560 = arith.mulf %553, %559 : vector<16x16xf32>
    %561 = arith.addf %543, %560 : vector<16x16xf32>
    %c101 = arith.constant 101 : index
    %562 = memref.load %arg2[%c101] : memref<144xf32, #tpu.memory_space<smem>>
    %563 = vector.broadcast %562 : f32 to vector<16x16xf32>
    %564 = arith.mulf %553, %563 : vector<16x16xf32>
    %565 = arith.addf %547, %564 : vector<16x16xf32>
    %c137 = arith.constant 137 : index
    %566 = memref.load %arg2[%c137] : memref<144xf32, #tpu.memory_space<smem>>
    %567 = vector.broadcast %566 : f32 to vector<16x16xf32>
    %568 = arith.mulf %553, %567 : vector<16x16xf32>
    %569 = arith.addf %551, %568 : vector<16x16xf32>
    %c3_125 = arith.constant 3 : index
    %c1_126 = arith.constant 1 : index
    %c0_127 = arith.constant 0 : index
    %570 = vector.load %arg7[%c3_125, %c1_126, %c0_127] : memref<4x18x18xf32, #tpu.memory_space<vmem>>, vector<1x16x16xf32>
    %571 = vector.shape_cast %570 : vector<1x16x16xf32> to vector<16x16xf32>
    %c30 = arith.constant 30 : index
    %572 = memref.load %arg2[%c30] : memref<144xf32, #tpu.memory_space<smem>>
    %573 = vector.broadcast %572 : f32 to vector<16x16xf32>
    %574 = arith.mulf %571, %573 : vector<16x16xf32>
    %575 = arith.addf %557, %574 : vector<16x16xf32>
    %c66 = arith.constant 66 : index
    %576 = memref.load %arg2[%c66] : memref<144xf32, #tpu.memory_space<smem>>
    %577 = vector.broadcast %576 : f32 to vector<16x16xf32>
    %578 = arith.mulf %571, %577 : vector<16x16xf32>
    %579 = arith.addf %561, %578 : vector<16x16xf32>
    %c102 = arith.constant 102 : index
    %580 = memref.load %arg2[%c102] : memref<144xf32, #tpu.memory_space<smem>>
    %581 = vector.broadcast %580 : f32 to vector<16x16xf32>
    %582 = arith.mulf %571, %581 : vector<16x16xf32>
    %583 = arith.addf %565, %582 : vector<16x16xf32>
    %c138 = arith.constant 138 : index
    %584 = memref.load %arg2[%c138] : memref<144xf32, #tpu.memory_space<smem>>
    %585 = vector.broadcast %584 : f32 to vector<16x16xf32>
    %586 = arith.mulf %571, %585 : vector<16x16xf32>
    %587 = arith.addf %569, %586 : vector<16x16xf32>
    %c3_128 = arith.constant 3 : index
    %c1_129 = arith.constant 1 : index
    %c1_130 = arith.constant 1 : index
    %588 = vector.load %arg7[%c3_128, %c1_129, %c1_130] : memref<4x18x18xf32, #tpu.memory_space<vmem>>, vector<1x16x16xf32>
    %589 = vector.shape_cast %588 : vector<1x16x16xf32> to vector<16x16xf32>
    %c31 = arith.constant 31 : index
    %590 = memref.load %arg2[%c31] : memref<144xf32, #tpu.memory_space<smem>>
    %591 = vector.broadcast %590 : f32 to vector<16x16xf32>
    %592 = arith.mulf %589, %591 : vector<16x16xf32>
    %593 = arith.addf %575, %592 : vector<16x16xf32>
    %c67 = arith.constant 67 : index
    %594 = memref.load %arg2[%c67] : memref<144xf32, #tpu.memory_space<smem>>
    %595 = vector.broadcast %594 : f32 to vector<16x16xf32>
    %596 = arith.mulf %589, %595 : vector<16x16xf32>
    %597 = arith.addf %579, %596 : vector<16x16xf32>
    %c103 = arith.constant 103 : index
    %598 = memref.load %arg2[%c103] : memref<144xf32, #tpu.memory_space<smem>>
    %599 = vector.broadcast %598 : f32 to vector<16x16xf32>
    %600 = arith.mulf %589, %599 : vector<16x16xf32>
    %601 = arith.addf %583, %600 : vector<16x16xf32>
    %c139 = arith.constant 139 : index
    %602 = memref.load %arg2[%c139] : memref<144xf32, #tpu.memory_space<smem>>
    %603 = vector.broadcast %602 : f32 to vector<16x16xf32>
    %604 = arith.mulf %589, %603 : vector<16x16xf32>
    %605 = arith.addf %587, %604 : vector<16x16xf32>
    %c3_131 = arith.constant 3 : index
    %c1_132 = arith.constant 1 : index
    %c2_133 = arith.constant 2 : index
    %606 = vector.load %arg7[%c3_131, %c1_132, %c2_133] : memref<4x18x18xf32, #tpu.memory_space<vmem>>, vector<1x16x16xf32>
    %607 = vector.shape_cast %606 : vector<1x16x16xf32> to vector<16x16xf32>
    %c32 = arith.constant 32 : index
    %608 = memref.load %arg2[%c32] : memref<144xf32, #tpu.memory_space<smem>>
    %609 = vector.broadcast %608 : f32 to vector<16x16xf32>
    %610 = arith.mulf %607, %609 : vector<16x16xf32>
    %611 = arith.addf %593, %610 : vector<16x16xf32>
    %c68 = arith.constant 68 : index
    %612 = memref.load %arg2[%c68] : memref<144xf32, #tpu.memory_space<smem>>
    %613 = vector.broadcast %612 : f32 to vector<16x16xf32>
    %614 = arith.mulf %607, %613 : vector<16x16xf32>
    %615 = arith.addf %597, %614 : vector<16x16xf32>
    %c104 = arith.constant 104 : index
    %616 = memref.load %arg2[%c104] : memref<144xf32, #tpu.memory_space<smem>>
    %617 = vector.broadcast %616 : f32 to vector<16x16xf32>
    %618 = arith.mulf %607, %617 : vector<16x16xf32>
    %619 = arith.addf %601, %618 : vector<16x16xf32>
    %c140 = arith.constant 140 : index
    %620 = memref.load %arg2[%c140] : memref<144xf32, #tpu.memory_space<smem>>
    %621 = vector.broadcast %620 : f32 to vector<16x16xf32>
    %622 = arith.mulf %607, %621 : vector<16x16xf32>
    %623 = arith.addf %605, %622 : vector<16x16xf32>
    %c3_134 = arith.constant 3 : index
    %c2_135 = arith.constant 2 : index
    %c0_136 = arith.constant 0 : index
    %624 = vector.load %arg7[%c3_134, %c2_135, %c0_136] : memref<4x18x18xf32, #tpu.memory_space<vmem>>, vector<1x16x16xf32>
    %625 = vector.shape_cast %624 : vector<1x16x16xf32> to vector<16x16xf32>
    %c33 = arith.constant 33 : index
    %626 = memref.load %arg2[%c33] : memref<144xf32, #tpu.memory_space<smem>>
    %627 = vector.broadcast %626 : f32 to vector<16x16xf32>
    %628 = arith.mulf %625, %627 : vector<16x16xf32>
    %629 = arith.addf %611, %628 : vector<16x16xf32>
    %c69 = arith.constant 69 : index
    %630 = memref.load %arg2[%c69] : memref<144xf32, #tpu.memory_space<smem>>
    %631 = vector.broadcast %630 : f32 to vector<16x16xf32>
    %632 = arith.mulf %625, %631 : vector<16x16xf32>
    %633 = arith.addf %615, %632 : vector<16x16xf32>
    %c105 = arith.constant 105 : index
    %634 = memref.load %arg2[%c105] : memref<144xf32, #tpu.memory_space<smem>>
    %635 = vector.broadcast %634 : f32 to vector<16x16xf32>
    %636 = arith.mulf %625, %635 : vector<16x16xf32>
    %637 = arith.addf %619, %636 : vector<16x16xf32>
    %c141 = arith.constant 141 : index
    %638 = memref.load %arg2[%c141] : memref<144xf32, #tpu.memory_space<smem>>
    %639 = vector.broadcast %638 : f32 to vector<16x16xf32>
    %640 = arith.mulf %625, %639 : vector<16x16xf32>
    %641 = arith.addf %623, %640 : vector<16x16xf32>
    %c3_137 = arith.constant 3 : index
    %c2_138 = arith.constant 2 : index
    %c1_139 = arith.constant 1 : index
    %642 = vector.load %arg7[%c3_137, %c2_138, %c1_139] : memref<4x18x18xf32, #tpu.memory_space<vmem>>, vector<1x16x16xf32>
    %643 = vector.shape_cast %642 : vector<1x16x16xf32> to vector<16x16xf32>
    %c34 = arith.constant 34 : index
    %644 = memref.load %arg2[%c34] : memref<144xf32, #tpu.memory_space<smem>>
    %645 = vector.broadcast %644 : f32 to vector<16x16xf32>
    %646 = arith.mulf %643, %645 : vector<16x16xf32>
    %647 = arith.addf %629, %646 : vector<16x16xf32>
    %c70 = arith.constant 70 : index
    %648 = memref.load %arg2[%c70] : memref<144xf32, #tpu.memory_space<smem>>
    %649 = vector.broadcast %648 : f32 to vector<16x16xf32>
    %650 = arith.mulf %643, %649 : vector<16x16xf32>
    %651 = arith.addf %633, %650 : vector<16x16xf32>
    %c106 = arith.constant 106 : index
    %652 = memref.load %arg2[%c106] : memref<144xf32, #tpu.memory_space<smem>>
    %653 = vector.broadcast %652 : f32 to vector<16x16xf32>
    %654 = arith.mulf %643, %653 : vector<16x16xf32>
    %655 = arith.addf %637, %654 : vector<16x16xf32>
    %c142 = arith.constant 142 : index
    %656 = memref.load %arg2[%c142] : memref<144xf32, #tpu.memory_space<smem>>
    %657 = vector.broadcast %656 : f32 to vector<16x16xf32>
    %658 = arith.mulf %643, %657 : vector<16x16xf32>
    %659 = arith.addf %641, %658 : vector<16x16xf32>
    %c3_140 = arith.constant 3 : index
    %c2_141 = arith.constant 2 : index
    %c2_142 = arith.constant 2 : index
    %660 = vector.load %arg7[%c3_140, %c2_141, %c2_142] : memref<4x18x18xf32, #tpu.memory_space<vmem>>, vector<1x16x16xf32>
    %661 = vector.shape_cast %660 : vector<1x16x16xf32> to vector<16x16xf32>
    %c35 = arith.constant 35 : index
    %662 = memref.load %arg2[%c35] : memref<144xf32, #tpu.memory_space<smem>>
    %663 = vector.broadcast %662 : f32 to vector<16x16xf32>
    %664 = arith.mulf %661, %663 : vector<16x16xf32>
    %665 = arith.addf %647, %664 : vector<16x16xf32>
    %c71 = arith.constant 71 : index
    %666 = memref.load %arg2[%c71] : memref<144xf32, #tpu.memory_space<smem>>
    %667 = vector.broadcast %666 : f32 to vector<16x16xf32>
    %668 = arith.mulf %661, %667 : vector<16x16xf32>
    %669 = arith.addf %651, %668 : vector<16x16xf32>
    %c107 = arith.constant 107 : index
    %670 = memref.load %arg2[%c107] : memref<144xf32, #tpu.memory_space<smem>>
    %671 = vector.broadcast %670 : f32 to vector<16x16xf32>
    %672 = arith.mulf %661, %671 : vector<16x16xf32>
    %673 = arith.addf %655, %672 : vector<16x16xf32>
    %c143 = arith.constant 143 : index
    %674 = memref.load %arg2[%c143] : memref<144xf32, #tpu.memory_space<smem>>
    %675 = vector.broadcast %674 : f32 to vector<16x16xf32>
    %676 = arith.mulf %661, %675 : vector<16x16xf32>
    %677 = arith.addf %659, %676 : vector<16x16xf32>
    %cst_143 = arith.constant 0.000000e+00 : f32
    %678 = vector.broadcast %cst_143 : f32 to vector<16x16xf32>
    %679 = arith.maximumf %665, %678 : vector<16x16xf32>
    %cst_144 = arith.constant 0.000000e+00 : f32
    %680 = vector.broadcast %cst_144 : f32 to vector<16x16xf32>
    %681 = arith.maximumf %669, %680 : vector<16x16xf32>
    %cst_145 = arith.constant 0.000000e+00 : f32
    %682 = vector.broadcast %cst_145 : f32 to vector<16x16xf32>
    %683 = arith.maximumf %673, %682 : vector<16x16xf32>
    %cst_146 = arith.constant 0.000000e+00 : f32
    %684 = vector.broadcast %cst_146 : f32 to vector<16x16xf32>
    %685 = arith.maximumf %677, %684 : vector<16x16xf32>
    %cst_147 = arith.constant 0.000000e+00 : f32
    %686 = vector.broadcast %cst_147 : f32 to vector<4x18x18xf32>
    %c0_148 = arith.constant 0 : index
    %c0_149 = arith.constant 0 : index
    %c0_150 = arith.constant 0 : index
    %687 = vector.load %arg8[%c0_148, %c0_149, %c0_150] : memref<4x18x18xf32, #tpu.memory_space<vmem>>, vector<4x18x18xf32>
    tpu.vector_store %arg8[%c0_148, %c0_149, %c0_150], %686 {strides = array<i32>} : memref<4x18x18xf32, #tpu.memory_space<vmem>>, vector<4x18x18xf32>,
    %c0_151 = arith.constant 0 : index
    %c1_152 = arith.constant 1 : index
    %c1_153 = arith.constant 1 : index
    %688 = vector.load %arg8[%c0_151, %c1_152, %c1_153] : memref<4x18x18xf32, #tpu.memory_space<vmem>>, vector<1x16x16xf32>
    %689 = vector.shape_cast %688 : vector<1x16x16xf32> to vector<16x16xf32>
    %690 = vector.shape_cast %679 : vector<16x16xf32> to vector<1x16x16xf32>
    tpu.vector_store %arg8[%c0_151, %c1_152, %c1_153], %690 {strides = array<i32>} : memref<4x18x18xf32, #tpu.memory_space<vmem>>, vector<1x16x16xf32>,
    %c1_154 = arith.constant 1 : index
    %c1_155 = arith.constant 1 : index
    %c1_156 = arith.constant 1 : index
    %691 = vector.load %arg8[%c1_154, %c1_155, %c1_156] : memref<4x18x18xf32, #tpu.memory_space<vmem>>, vector<1x16x16xf32>
    %692 = vector.shape_cast %691 : vector<1x16x16xf32> to vector<16x16xf32>
    %693 = vector.shape_cast %681 : vector<16x16xf32> to vector<1x16x16xf32>
    tpu.vector_store %arg8[%c1_154, %c1_155, %c1_156], %693 {strides = array<i32>} : memref<4x18x18xf32, #tpu.memory_space<vmem>>, vector<1x16x16xf32>,
    %c2_157 = arith.constant 2 : index
    %c1_158 = arith.constant 1 : index
    %c1_159 = arith.constant 1 : index
    %694 = vector.load %arg8[%c2_157, %c1_158, %c1_159] : memref<4x18x18xf32, #tpu.memory_space<vmem>>, vector<1x16x16xf32>
    %695 = vector.shape_cast %694 : vector<1x16x16xf32> to vector<16x16xf32>
    %696 = vector.shape_cast %683 : vector<16x16xf32> to vector<1x16x16xf32>
    tpu.vector_store %arg8[%c2_157, %c1_158, %c1_159], %696 {strides = array<i32>} : memref<4x18x18xf32, #tpu.memory_space<vmem>>, vector<1x16x16xf32>,
    %c3_160 = arith.constant 3 : index
    %c1_161 = arith.constant 1 : index
    %c1_162 = arith.constant 1 : index
    %697 = vector.load %arg8[%c3_160, %c1_161, %c1_162] : memref<4x18x18xf32, #tpu.memory_space<vmem>>, vector<1x16x16xf32>
    %698 = vector.shape_cast %697 : vector<1x16x16xf32> to vector<16x16xf32>
    %699 = vector.shape_cast %685 : vector<16x16xf32> to vector<1x16x16xf32>
    tpu.vector_store %arg8[%c3_160, %c1_161, %c1_162], %699 {strides = array<i32>} : memref<4x18x18xf32, #tpu.memory_space<vmem>>, vector<1x16x16xf32>,
    %c0_163 = arith.constant 0 : index
    %700 = memref.load %arg5[%c0_163] : memref<4xf32, #tpu.memory_space<smem>>
    %701 = vector.broadcast %700 : f32 to vector<16x16xf32>
    %c1_164 = arith.constant 1 : index
    %702 = memref.load %arg5[%c1_164] : memref<4xf32, #tpu.memory_space<smem>>
    %703 = vector.broadcast %702 : f32 to vector<16x16xf32>
    %c2_165 = arith.constant 2 : index
    %704 = memref.load %arg5[%c2_165] : memref<4xf32, #tpu.memory_space<smem>>
    %705 = vector.broadcast %704 : f32 to vector<16x16xf32>
    %c3_166 = arith.constant 3 : index
    %706 = memref.load %arg5[%c3_166] : memref<4xf32, #tpu.memory_space<smem>>
    %707 = vector.broadcast %706 : f32 to vector<16x16xf32>
    %c0_167 = arith.constant 0 : index
    %c0_168 = arith.constant 0 : index
    %c0_169 = arith.constant 0 : index
    %708 = vector.load %arg8[%c0_167, %c0_168, %c0_169] : memref<4x18x18xf32, #tpu.memory_space<vmem>>, vector<1x16x16xf32>
    %709 = vector.shape_cast %708 : vector<1x16x16xf32> to vector<16x16xf32>
    %c0_170 = arith.constant 0 : index
    %710 = memref.load %arg4[%c0_170] : memref<144xf32, #tpu.memory_space<smem>>
    %711 = vector.broadcast %710 : f32 to vector<16x16xf32>
    %712 = arith.mulf %709, %711 : vector<16x16xf32>
    %713 = arith.addf %701, %712 : vector<16x16xf32>
    %c36_171 = arith.constant 36 : index
    %714 = memref.load %arg4[%c36_171] : memref<144xf32, #tpu.memory_space<smem>>
    %715 = vector.broadcast %714 : f32 to vector<16x16xf32>
    %716 = arith.mulf %709, %715 : vector<16x16xf32>
    %717 = arith.addf %703, %716 : vector<16x16xf32>
    %c72_172 = arith.constant 72 : index
    %718 = memref.load %arg4[%c72_172] : memref<144xf32, #tpu.memory_space<smem>>
    %719 = vector.broadcast %718 : f32 to vector<16x16xf32>
    %720 = arith.mulf %709, %719 : vector<16x16xf32>
    %721 = arith.addf %705, %720 : vector<16x16xf32>
    %c108_173 = arith.constant 108 : index
    %722 = memref.load %arg4[%c108_173] : memref<144xf32, #tpu.memory_space<smem>>
    %723 = vector.broadcast %722 : f32 to vector<16x16xf32>
    %724 = arith.mulf %709, %723 : vector<16x16xf32>
    %725 = arith.addf %707, %724 : vector<16x16xf32>
    %c0_174 = arith.constant 0 : index
    %c0_175 = arith.constant 0 : index
    %c1_176 = arith.constant 1 : index
    %726 = vector.load %arg8[%c0_174, %c0_175, %c1_176] : memref<4x18x18xf32, #tpu.memory_space<vmem>>, vector<1x16x16xf32>
    %727 = vector.shape_cast %726 : vector<1x16x16xf32> to vector<16x16xf32>
    %c1_177 = arith.constant 1 : index
    %728 = memref.load %arg4[%c1_177] : memref<144xf32, #tpu.memory_space<smem>>
    %729 = vector.broadcast %728 : f32 to vector<16x16xf32>
    %730 = arith.mulf %727, %729 : vector<16x16xf32>
    %731 = arith.addf %713, %730 : vector<16x16xf32>
    %c37_178 = arith.constant 37 : index
    %732 = memref.load %arg4[%c37_178] : memref<144xf32, #tpu.memory_space<smem>>
    %733 = vector.broadcast %732 : f32 to vector<16x16xf32>
    %734 = arith.mulf %727, %733 : vector<16x16xf32>
    %735 = arith.addf %717, %734 : vector<16x16xf32>
    %c73_179 = arith.constant 73 : index
    %736 = memref.load %arg4[%c73_179] : memref<144xf32, #tpu.memory_space<smem>>
    %737 = vector.broadcast %736 : f32 to vector<16x16xf32>
    %738 = arith.mulf %727, %737 : vector<16x16xf32>
    %739 = arith.addf %721, %738 : vector<16x16xf32>
    %c109_180 = arith.constant 109 : index
    %740 = memref.load %arg4[%c109_180] : memref<144xf32, #tpu.memory_space<smem>>
    %741 = vector.broadcast %740 : f32 to vector<16x16xf32>
    %742 = arith.mulf %727, %741 : vector<16x16xf32>
    %743 = arith.addf %725, %742 : vector<16x16xf32>
    %c0_181 = arith.constant 0 : index
    %c0_182 = arith.constant 0 : index
    %c2_183 = arith.constant 2 : index
    %744 = vector.load %arg8[%c0_181, %c0_182, %c2_183] : memref<4x18x18xf32, #tpu.memory_space<vmem>>, vector<1x16x16xf32>
    %745 = vector.shape_cast %744 : vector<1x16x16xf32> to vector<16x16xf32>
    %c2_184 = arith.constant 2 : index
    %746 = memref.load %arg4[%c2_184] : memref<144xf32, #tpu.memory_space<smem>>
    %747 = vector.broadcast %746 : f32 to vector<16x16xf32>
    %748 = arith.mulf %745, %747 : vector<16x16xf32>
    %749 = arith.addf %731, %748 : vector<16x16xf32>
    %c38_185 = arith.constant 38 : index
    %750 = memref.load %arg4[%c38_185] : memref<144xf32, #tpu.memory_space<smem>>
    %751 = vector.broadcast %750 : f32 to vector<16x16xf32>
    %752 = arith.mulf %745, %751 : vector<16x16xf32>
    %753 = arith.addf %735, %752 : vector<16x16xf32>
    %c74_186 = arith.constant 74 : index
    %754 = memref.load %arg4[%c74_186] : memref<144xf32, #tpu.memory_space<smem>>
    %755 = vector.broadcast %754 : f32 to vector<16x16xf32>
    %756 = arith.mulf %745, %755 : vector<16x16xf32>
    %757 = arith.addf %739, %756 : vector<16x16xf32>
    %c110_187 = arith.constant 110 : index
    %758 = memref.load %arg4[%c110_187] : memref<144xf32, #tpu.memory_space<smem>>
    %759 = vector.broadcast %758 : f32 to vector<16x16xf32>
    %760 = arith.mulf %745, %759 : vector<16x16xf32>
    %761 = arith.addf %743, %760 : vector<16x16xf32>
    %c0_188 = arith.constant 0 : index
    %c1_189 = arith.constant 1 : index
    %c0_190 = arith.constant 0 : index
    %762 = vector.load %arg8[%c0_188, %c1_189, %c0_190] : memref<4x18x18xf32, #tpu.memory_space<vmem>>, vector<1x16x16xf32>
    %763 = vector.shape_cast %762 : vector<1x16x16xf32> to vector<16x16xf32>
    %c3_191 = arith.constant 3 : index
    %764 = memref.load %arg4[%c3_191] : memref<144xf32, #tpu.memory_space<smem>>
    %765 = vector.broadcast %764 : f32 to vector<16x16xf32>
    %766 = arith.mulf %763, %765 : vector<16x16xf32>
    %767 = arith.addf %749, %766 : vector<16x16xf32>
    %c39_192 = arith.constant 39 : index
    %768 = memref.load %arg4[%c39_192] : memref<144xf32, #tpu.memory_space<smem>>
    %769 = vector.broadcast %768 : f32 to vector<16x16xf32>
    %770 = arith.mulf %763, %769 : vector<16x16xf32>
    %771 = arith.addf %753, %770 : vector<16x16xf32>
    %c75_193 = arith.constant 75 : index
    %772 = memref.load %arg4[%c75_193] : memref<144xf32, #tpu.memory_space<smem>>
    %773 = vector.broadcast %772 : f32 to vector<16x16xf32>
    %774 = arith.mulf %763, %773 : vector<16x16xf32>
    %775 = arith.addf %757, %774 : vector<16x16xf32>
    %c111_194 = arith.constant 111 : index
    %776 = memref.load %arg4[%c111_194] : memref<144xf32, #tpu.memory_space<smem>>
    %777 = vector.broadcast %776 : f32 to vector<16x16xf32>
    %778 = arith.mulf %763, %777 : vector<16x16xf32>
    %779 = arith.addf %761, %778 : vector<16x16xf32>
    %c0_195 = arith.constant 0 : index
    %c1_196 = arith.constant 1 : index
    %c1_197 = arith.constant 1 : index
    %780 = vector.load %arg8[%c0_195, %c1_196, %c1_197] : memref<4x18x18xf32, #tpu.memory_space<vmem>>, vector<1x16x16xf32>
    %781 = vector.shape_cast %780 : vector<1x16x16xf32> to vector<16x16xf32>
    %c4_198 = arith.constant 4 : index
    %782 = memref.load %arg4[%c4_198] : memref<144xf32, #tpu.memory_space<smem>>
    %783 = vector.broadcast %782 : f32 to vector<16x16xf32>
    %784 = arith.mulf %781, %783 : vector<16x16xf32>
    %785 = arith.addf %767, %784 : vector<16x16xf32>
    %c40_199 = arith.constant 40 : index
    %786 = memref.load %arg4[%c40_199] : memref<144xf32, #tpu.memory_space<smem>>
    %787 = vector.broadcast %786 : f32 to vector<16x16xf32>
    %788 = arith.mulf %781, %787 : vector<16x16xf32>
    %789 = arith.addf %771, %788 : vector<16x16xf32>
    %c76_200 = arith.constant 76 : index
    %790 = memref.load %arg4[%c76_200] : memref<144xf32, #tpu.memory_space<smem>>
    %791 = vector.broadcast %790 : f32 to vector<16x16xf32>
    %792 = arith.mulf %781, %791 : vector<16x16xf32>
    %793 = arith.addf %775, %792 : vector<16x16xf32>
    %c112_201 = arith.constant 112 : index
    %794 = memref.load %arg4[%c112_201] : memref<144xf32, #tpu.memory_space<smem>>
    %795 = vector.broadcast %794 : f32 to vector<16x16xf32>
    %796 = arith.mulf %781, %795 : vector<16x16xf32>
    %797 = arith.addf %779, %796 : vector<16x16xf32>
    %c0_202 = arith.constant 0 : index
    %c1_203 = arith.constant 1 : index
    %c2_204 = arith.constant 2 : index
    %798 = vector.load %arg8[%c0_202, %c1_203, %c2_204] : memref<4x18x18xf32, #tpu.memory_space<vmem>>, vector<1x16x16xf32>
    %799 = vector.shape_cast %798 : vector<1x16x16xf32> to vector<16x16xf32>
    %c5_205 = arith.constant 5 : index
    %800 = memref.load %arg4[%c5_205] : memref<144xf32, #tpu.memory_space<smem>>
    %801 = vector.broadcast %800 : f32 to vector<16x16xf32>
    %802 = arith.mulf %799, %801 : vector<16x16xf32>
    %803 = arith.addf %785, %802 : vector<16x16xf32>
    %c41_206 = arith.constant 41 : index
    %804 = memref.load %arg4[%c41_206] : memref<144xf32, #tpu.memory_space<smem>>
    %805 = vector.broadcast %804 : f32 to vector<16x16xf32>
    %806 = arith.mulf %799, %805 : vector<16x16xf32>
    %807 = arith.addf %789, %806 : vector<16x16xf32>
    %c77_207 = arith.constant 77 : index
    %808 = memref.load %arg4[%c77_207] : memref<144xf32, #tpu.memory_space<smem>>
    %809 = vector.broadcast %808 : f32 to vector<16x16xf32>
    %810 = arith.mulf %799, %809 : vector<16x16xf32>
    %811 = arith.addf %793, %810 : vector<16x16xf32>
    %c113_208 = arith.constant 113 : index
    %812 = memref.load %arg4[%c113_208] : memref<144xf32, #tpu.memory_space<smem>>
    %813 = vector.broadcast %812 : f32 to vector<16x16xf32>
    %814 = arith.mulf %799, %813 : vector<16x16xf32>
    %815 = arith.addf %797, %814 : vector<16x16xf32>
    %c0_209 = arith.constant 0 : index
    %c2_210 = arith.constant 2 : index
    %c0_211 = arith.constant 0 : index
    %816 = vector.load %arg8[%c0_209, %c2_210, %c0_211] : memref<4x18x18xf32, #tpu.memory_space<vmem>>, vector<1x16x16xf32>
    %817 = vector.shape_cast %816 : vector<1x16x16xf32> to vector<16x16xf32>
    %c6_212 = arith.constant 6 : index
    %818 = memref.load %arg4[%c6_212] : memref<144xf32, #tpu.memory_space<smem>>
    %819 = vector.broadcast %818 : f32 to vector<16x16xf32>
    %820 = arith.mulf %817, %819 : vector<16x16xf32>
    %821 = arith.addf %803, %820 : vector<16x16xf32>
    %c42_213 = arith.constant 42 : index
    %822 = memref.load %arg4[%c42_213] : memref<144xf32, #tpu.memory_space<smem>>
    %823 = vector.broadcast %822 : f32 to vector<16x16xf32>
    %824 = arith.mulf %817, %823 : vector<16x16xf32>
    %825 = arith.addf %807, %824 : vector<16x16xf32>
    %c78_214 = arith.constant 78 : index
    %826 = memref.load %arg4[%c78_214] : memref<144xf32, #tpu.memory_space<smem>>
    %827 = vector.broadcast %826 : f32 to vector<16x16xf32>
    %828 = arith.mulf %817, %827 : vector<16x16xf32>
    %829 = arith.addf %811, %828 : vector<16x16xf32>
    %c114_215 = arith.constant 114 : index
    %830 = memref.load %arg4[%c114_215] : memref<144xf32, #tpu.memory_space<smem>>
    %831 = vector.broadcast %830 : f32 to vector<16x16xf32>
    %832 = arith.mulf %817, %831 : vector<16x16xf32>
    %833 = arith.addf %815, %832 : vector<16x16xf32>
    %c0_216 = arith.constant 0 : index
    %c2_217 = arith.constant 2 : index
    %c1_218 = arith.constant 1 : index
    %834 = vector.load %arg8[%c0_216, %c2_217, %c1_218] : memref<4x18x18xf32, #tpu.memory_space<vmem>>, vector<1x16x16xf32>
    %835 = vector.shape_cast %834 : vector<1x16x16xf32> to vector<16x16xf32>
    %c7_219 = arith.constant 7 : index
    %836 = memref.load %arg4[%c7_219] : memref<144xf32, #tpu.memory_space<smem>>
    %837 = vector.broadcast %836 : f32 to vector<16x16xf32>
    %838 = arith.mulf %835, %837 : vector<16x16xf32>
    %839 = arith.addf %821, %838 : vector<16x16xf32>
    %c43_220 = arith.constant 43 : index
    %840 = memref.load %arg4[%c43_220] : memref<144xf32, #tpu.memory_space<smem>>
    %841 = vector.broadcast %840 : f32 to vector<16x16xf32>
    %842 = arith.mulf %835, %841 : vector<16x16xf32>
    %843 = arith.addf %825, %842 : vector<16x16xf32>
    %c79_221 = arith.constant 79 : index
    %844 = memref.load %arg4[%c79_221] : memref<144xf32, #tpu.memory_space<smem>>
    %845 = vector.broadcast %844 : f32 to vector<16x16xf32>
    %846 = arith.mulf %835, %845 : vector<16x16xf32>
    %847 = arith.addf %829, %846 : vector<16x16xf32>
    %c115_222 = arith.constant 115 : index
    %848 = memref.load %arg4[%c115_222] : memref<144xf32, #tpu.memory_space<smem>>
    %849 = vector.broadcast %848 : f32 to vector<16x16xf32>
    %850 = arith.mulf %835, %849 : vector<16x16xf32>
    %851 = arith.addf %833, %850 : vector<16x16xf32>
    %c0_223 = arith.constant 0 : index
    %c2_224 = arith.constant 2 : index
    %c2_225 = arith.constant 2 : index
    %852 = vector.load %arg8[%c0_223, %c2_224, %c2_225] : memref<4x18x18xf32, #tpu.memory_space<vmem>>, vector<1x16x16xf32>
    %853 = vector.shape_cast %852 : vector<1x16x16xf32> to vector<16x16xf32>
    %c8_226 = arith.constant 8 : index
    %854 = memref.load %arg4[%c8_226] : memref<144xf32, #tpu.memory_space<smem>>
    %855 = vector.broadcast %854 : f32 to vector<16x16xf32>
    %856 = arith.mulf %853, %855 : vector<16x16xf32>
    %857 = arith.addf %839, %856 : vector<16x16xf32>
    %c44_227 = arith.constant 44 : index
    %858 = memref.load %arg4[%c44_227] : memref<144xf32, #tpu.memory_space<smem>>
    %859 = vector.broadcast %858 : f32 to vector<16x16xf32>
    %860 = arith.mulf %853, %859 : vector<16x16xf32>
    %861 = arith.addf %843, %860 : vector<16x16xf32>
    %c80_228 = arith.constant 80 : index
    %862 = memref.load %arg4[%c80_228] : memref<144xf32, #tpu.memory_space<smem>>
    %863 = vector.broadcast %862 : f32 to vector<16x16xf32>
    %864 = arith.mulf %853, %863 : vector<16x16xf32>
    %865 = arith.addf %847, %864 : vector<16x16xf32>
    %c116_229 = arith.constant 116 : index
    %866 = memref.load %arg4[%c116_229] : memref<144xf32, #tpu.memory_space<smem>>
    %867 = vector.broadcast %866 : f32 to vector<16x16xf32>
    %868 = arith.mulf %853, %867 : vector<16x16xf32>
    %869 = arith.addf %851, %868 : vector<16x16xf32>
    %c1_230 = arith.constant 1 : index
    %c0_231 = arith.constant 0 : index
    %c0_232 = arith.constant 0 : index
    %870 = vector.load %arg8[%c1_230, %c0_231, %c0_232] : memref<4x18x18xf32, #tpu.memory_space<vmem>>, vector<1x16x16xf32>
    %871 = vector.shape_cast %870 : vector<1x16x16xf32> to vector<16x16xf32>
    %c9_233 = arith.constant 9 : index
    %872 = memref.load %arg4[%c9_233] : memref<144xf32, #tpu.memory_space<smem>>
    %873 = vector.broadcast %872 : f32 to vector<16x16xf32>
    %874 = arith.mulf %871, %873 : vector<16x16xf32>
    %875 = arith.addf %857, %874 : vector<16x16xf32>
    %c45_234 = arith.constant 45 : index
    %876 = memref.load %arg4[%c45_234] : memref<144xf32, #tpu.memory_space<smem>>
    %877 = vector.broadcast %876 : f32 to vector<16x16xf32>
    %878 = arith.mulf %871, %877 : vector<16x16xf32>
    %879 = arith.addf %861, %878 : vector<16x16xf32>
    %c81_235 = arith.constant 81 : index
    %880 = memref.load %arg4[%c81_235] : memref<144xf32, #tpu.memory_space<smem>>
    %881 = vector.broadcast %880 : f32 to vector<16x16xf32>
    %882 = arith.mulf %871, %881 : vector<16x16xf32>
    %883 = arith.addf %865, %882 : vector<16x16xf32>
    %c117_236 = arith.constant 117 : index
    %884 = memref.load %arg4[%c117_236] : memref<144xf32, #tpu.memory_space<smem>>
    %885 = vector.broadcast %884 : f32 to vector<16x16xf32>
    %886 = arith.mulf %871, %885 : vector<16x16xf32>
    %887 = arith.addf %869, %886 : vector<16x16xf32>
    %c1_237 = arith.constant 1 : index
    %c0_238 = arith.constant 0 : index
    %c1_239 = arith.constant 1 : index
    %888 = vector.load %arg8[%c1_237, %c0_238, %c1_239] : memref<4x18x18xf32, #tpu.memory_space<vmem>>, vector<1x16x16xf32>
    %889 = vector.shape_cast %888 : vector<1x16x16xf32> to vector<16x16xf32>
    %c10_240 = arith.constant 10 : index
    %890 = memref.load %arg4[%c10_240] : memref<144xf32, #tpu.memory_space<smem>>
    %891 = vector.broadcast %890 : f32 to vector<16x16xf32>
    %892 = arith.mulf %889, %891 : vector<16x16xf32>
    %893 = arith.addf %875, %892 : vector<16x16xf32>
    %c46_241 = arith.constant 46 : index
    %894 = memref.load %arg4[%c46_241] : memref<144xf32, #tpu.memory_space<smem>>
    %895 = vector.broadcast %894 : f32 to vector<16x16xf32>
    %896 = arith.mulf %889, %895 : vector<16x16xf32>
    %897 = arith.addf %879, %896 : vector<16x16xf32>
    %c82_242 = arith.constant 82 : index
    %898 = memref.load %arg4[%c82_242] : memref<144xf32, #tpu.memory_space<smem>>
    %899 = vector.broadcast %898 : f32 to vector<16x16xf32>
    %900 = arith.mulf %889, %899 : vector<16x16xf32>
    %901 = arith.addf %883, %900 : vector<16x16xf32>
    %c118_243 = arith.constant 118 : index
    %902 = memref.load %arg4[%c118_243] : memref<144xf32, #tpu.memory_space<smem>>
    %903 = vector.broadcast %902 : f32 to vector<16x16xf32>
    %904 = arith.mulf %889, %903 : vector<16x16xf32>
    %905 = arith.addf %887, %904 : vector<16x16xf32>
    %c1_244 = arith.constant 1 : index
    %c0_245 = arith.constant 0 : index
    %c2_246 = arith.constant 2 : index
    %906 = vector.load %arg8[%c1_244, %c0_245, %c2_246] : memref<4x18x18xf32, #tpu.memory_space<vmem>>, vector<1x16x16xf32>
    %907 = vector.shape_cast %906 : vector<1x16x16xf32> to vector<16x16xf32>
    %c11_247 = arith.constant 11 : index
    %908 = memref.load %arg4[%c11_247] : memref<144xf32, #tpu.memory_space<smem>>
    %909 = vector.broadcast %908 : f32 to vector<16x16xf32>
    %910 = arith.mulf %907, %909 : vector<16x16xf32>
    %911 = arith.addf %893, %910 : vector<16x16xf32>
    %c47_248 = arith.constant 47 : index
    %912 = memref.load %arg4[%c47_248] : memref<144xf32, #tpu.memory_space<smem>>
    %913 = vector.broadcast %912 : f32 to vector<16x16xf32>
    %914 = arith.mulf %907, %913 : vector<16x16xf32>
    %915 = arith.addf %897, %914 : vector<16x16xf32>
    %c83_249 = arith.constant 83 : index
    %916 = memref.load %arg4[%c83_249] : memref<144xf32, #tpu.memory_space<smem>>
    %917 = vector.broadcast %916 : f32 to vector<16x16xf32>
    %918 = arith.mulf %907, %917 : vector<16x16xf32>
    %919 = arith.addf %901, %918 : vector<16x16xf32>
    %c119_250 = arith.constant 119 : index
    %920 = memref.load %arg4[%c119_250] : memref<144xf32, #tpu.memory_space<smem>>
    %921 = vector.broadcast %920 : f32 to vector<16x16xf32>
    %922 = arith.mulf %907, %921 : vector<16x16xf32>
    %923 = arith.addf %905, %922 : vector<16x16xf32>
    %c1_251 = arith.constant 1 : index
    %c1_252 = arith.constant 1 : index
    %c0_253 = arith.constant 0 : index
    %924 = vector.load %arg8[%c1_251, %c1_252, %c0_253] : memref<4x18x18xf32, #tpu.memory_space<vmem>>, vector<1x16x16xf32>
    %925 = vector.shape_cast %924 : vector<1x16x16xf32> to vector<16x16xf32>
    %c12_254 = arith.constant 12 : index
    %926 = memref.load %arg4[%c12_254] : memref<144xf32, #tpu.memory_space<smem>>
    %927 = vector.broadcast %926 : f32 to vector<16x16xf32>
    %928 = arith.mulf %925, %927 : vector<16x16xf32>
    %929 = arith.addf %911, %928 : vector<16x16xf32>
    %c48_255 = arith.constant 48 : index
    %930 = memref.load %arg4[%c48_255] : memref<144xf32, #tpu.memory_space<smem>>
    %931 = vector.broadcast %930 : f32 to vector<16x16xf32>
    %932 = arith.mulf %925, %931 : vector<16x16xf32>
    %933 = arith.addf %915, %932 : vector<16x16xf32>
    %c84_256 = arith.constant 84 : index
    %934 = memref.load %arg4[%c84_256] : memref<144xf32, #tpu.memory_space<smem>>
    %935 = vector.broadcast %934 : f32 to vector<16x16xf32>
    %936 = arith.mulf %925, %935 : vector<16x16xf32>
    %937 = arith.addf %919, %936 : vector<16x16xf32>
    %c120_257 = arith.constant 120 : index
    %938 = memref.load %arg4[%c120_257] : memref<144xf32, #tpu.memory_space<smem>>
    %939 = vector.broadcast %938 : f32 to vector<16x16xf32>
    %940 = arith.mulf %925, %939 : vector<16x16xf32>
    %941 = arith.addf %923, %940 : vector<16x16xf32>
    %c1_258 = arith.constant 1 : index
    %c1_259 = arith.constant 1 : index
    %c1_260 = arith.constant 1 : index
    %942 = vector.load %arg8[%c1_258, %c1_259, %c1_260] : memref<4x18x18xf32, #tpu.memory_space<vmem>>, vector<1x16x16xf32>
    %943 = vector.shape_cast %942 : vector<1x16x16xf32> to vector<16x16xf32>
    %c13_261 = arith.constant 13 : index
    %944 = memref.load %arg4[%c13_261] : memref<144xf32, #tpu.memory_space<smem>>
    %945 = vector.broadcast %944 : f32 to vector<16x16xf32>
    %946 = arith.mulf %943, %945 : vector<16x16xf32>
    %947 = arith.addf %929, %946 : vector<16x16xf32>
    %c49_262 = arith.constant 49 : index
    %948 = memref.load %arg4[%c49_262] : memref<144xf32, #tpu.memory_space<smem>>
    %949 = vector.broadcast %948 : f32 to vector<16x16xf32>
    %950 = arith.mulf %943, %949 : vector<16x16xf32>
    %951 = arith.addf %933, %950 : vector<16x16xf32>
    %c85_263 = arith.constant 85 : index
    %952 = memref.load %arg4[%c85_263] : memref<144xf32, #tpu.memory_space<smem>>
    %953 = vector.broadcast %952 : f32 to vector<16x16xf32>
    %954 = arith.mulf %943, %953 : vector<16x16xf32>
    %955 = arith.addf %937, %954 : vector<16x16xf32>
    %c121_264 = arith.constant 121 : index
    %956 = memref.load %arg4[%c121_264] : memref<144xf32, #tpu.memory_space<smem>>
    %957 = vector.broadcast %956 : f32 to vector<16x16xf32>
    %958 = arith.mulf %943, %957 : vector<16x16xf32>
    %959 = arith.addf %941, %958 : vector<16x16xf32>
    %c1_265 = arith.constant 1 : index
    %c1_266 = arith.constant 1 : index
    %c2_267 = arith.constant 2 : index
    %960 = vector.load %arg8[%c1_265, %c1_266, %c2_267] : memref<4x18x18xf32, #tpu.memory_space<vmem>>, vector<1x16x16xf32>
    %961 = vector.shape_cast %960 : vector<1x16x16xf32> to vector<16x16xf32>
    %c14_268 = arith.constant 14 : index
    %962 = memref.load %arg4[%c14_268] : memref<144xf32, #tpu.memory_space<smem>>
    %963 = vector.broadcast %962 : f32 to vector<16x16xf32>
    %964 = arith.mulf %961, %963 : vector<16x16xf32>
    %965 = arith.addf %947, %964 : vector<16x16xf32>
    %c50_269 = arith.constant 50 : index
    %966 = memref.load %arg4[%c50_269] : memref<144xf32, #tpu.memory_space<smem>>
    %967 = vector.broadcast %966 : f32 to vector<16x16xf32>
    %968 = arith.mulf %961, %967 : vector<16x16xf32>
    %969 = arith.addf %951, %968 : vector<16x16xf32>
    %c86_270 = arith.constant 86 : index
    %970 = memref.load %arg4[%c86_270] : memref<144xf32, #tpu.memory_space<smem>>
    %971 = vector.broadcast %970 : f32 to vector<16x16xf32>
    %972 = arith.mulf %961, %971 : vector<16x16xf32>
    %973 = arith.addf %955, %972 : vector<16x16xf32>
    %c122_271 = arith.constant 122 : index
    %974 = memref.load %arg4[%c122_271] : memref<144xf32, #tpu.memory_space<smem>>
    %975 = vector.broadcast %974 : f32 to vector<16x16xf32>
    %976 = arith.mulf %961, %975 : vector<16x16xf32>
    %977 = arith.addf %959, %976 : vector<16x16xf32>
    %c1_272 = arith.constant 1 : index
    %c2_273 = arith.constant 2 : index
    %c0_274 = arith.constant 0 : index
    %978 = vector.load %arg8[%c1_272, %c2_273, %c0_274] : memref<4x18x18xf32, #tpu.memory_space<vmem>>, vector<1x16x16xf32>
    %979 = vector.shape_cast %978 : vector<1x16x16xf32> to vector<16x16xf32>
    %c15_275 = arith.constant 15 : index
    %980 = memref.load %arg4[%c15_275] : memref<144xf32, #tpu.memory_space<smem>>
    %981 = vector.broadcast %980 : f32 to vector<16x16xf32>
    %982 = arith.mulf %979, %981 : vector<16x16xf32>
    %983 = arith.addf %965, %982 : vector<16x16xf32>
    %c51_276 = arith.constant 51 : index
    %984 = memref.load %arg4[%c51_276] : memref<144xf32, #tpu.memory_space<smem>>
    %985 = vector.broadcast %984 : f32 to vector<16x16xf32>
    %986 = arith.mulf %979, %985 : vector<16x16xf32>
    %987 = arith.addf %969, %986 : vector<16x16xf32>
    %c87_277 = arith.constant 87 : index
    %988 = memref.load %arg4[%c87_277] : memref<144xf32, #tpu.memory_space<smem>>
    %989 = vector.broadcast %988 : f32 to vector<16x16xf32>
    %990 = arith.mulf %979, %989 : vector<16x16xf32>
    %991 = arith.addf %973, %990 : vector<16x16xf32>
    %c123_278 = arith.constant 123 : index
    %992 = memref.load %arg4[%c123_278] : memref<144xf32, #tpu.memory_space<smem>>
    %993 = vector.broadcast %992 : f32 to vector<16x16xf32>
    %994 = arith.mulf %979, %993 : vector<16x16xf32>
    %995 = arith.addf %977, %994 : vector<16x16xf32>
    %c1_279 = arith.constant 1 : index
    %c2_280 = arith.constant 2 : index
    %c1_281 = arith.constant 1 : index
    %996 = vector.load %arg8[%c1_279, %c2_280, %c1_281] : memref<4x18x18xf32, #tpu.memory_space<vmem>>, vector<1x16x16xf32>
    %997 = vector.shape_cast %996 : vector<1x16x16xf32> to vector<16x16xf32>
    %c16_282 = arith.constant 16 : index
    %998 = memref.load %arg4[%c16_282] : memref<144xf32, #tpu.memory_space<smem>>
    %999 = vector.broadcast %998 : f32 to vector<16x16xf32>
    %1000 = arith.mulf %997, %999 : vector<16x16xf32>
    %1001 = arith.addf %983, %1000 : vector<16x16xf32>
    %c52_283 = arith.constant 52 : index
    %1002 = memref.load %arg4[%c52_283] : memref<144xf32, #tpu.memory_space<smem>>
    %1003 = vector.broadcast %1002 : f32 to vector<16x16xf32>
    %1004 = arith.mulf %997, %1003 : vector<16x16xf32>
    %1005 = arith.addf %987, %1004 : vector<16x16xf32>
    %c88_284 = arith.constant 88 : index
    %1006 = memref.load %arg4[%c88_284] : memref<144xf32, #tpu.memory_space<smem>>
    %1007 = vector.broadcast %1006 : f32 to vector<16x16xf32>
    %1008 = arith.mulf %997, %1007 : vector<16x16xf32>
    %1009 = arith.addf %991, %1008 : vector<16x16xf32>
    %c124_285 = arith.constant 124 : index
    %1010 = memref.load %arg4[%c124_285] : memref<144xf32, #tpu.memory_space<smem>>
    %1011 = vector.broadcast %1010 : f32 to vector<16x16xf32>
    %1012 = arith.mulf %997, %1011 : vector<16x16xf32>
    %1013 = arith.addf %995, %1012 : vector<16x16xf32>
    %c1_286 = arith.constant 1 : index
    %c2_287 = arith.constant 2 : index
    %c2_288 = arith.constant 2 : index
    %1014 = vector.load %arg8[%c1_286, %c2_287, %c2_288] : memref<4x18x18xf32, #tpu.memory_space<vmem>>, vector<1x16x16xf32>
    %1015 = vector.shape_cast %1014 : vector<1x16x16xf32> to vector<16x16xf32>
    %c17_289 = arith.constant 17 : index
    %1016 = memref.load %arg4[%c17_289] : memref<144xf32, #tpu.memory_space<smem>>
    %1017 = vector.broadcast %1016 : f32 to vector<16x16xf32>
    %1018 = arith.mulf %1015, %1017 : vector<16x16xf32>
    %1019 = arith.addf %1001, %1018 : vector<16x16xf32>
    %c53_290 = arith.constant 53 : index
    %1020 = memref.load %arg4[%c53_290] : memref<144xf32, #tpu.memory_space<smem>>
    %1021 = vector.broadcast %1020 : f32 to vector<16x16xf32>
    %1022 = arith.mulf %1015, %1021 : vector<16x16xf32>
    %1023 = arith.addf %1005, %1022 : vector<16x16xf32>
    %c89_291 = arith.constant 89 : index
    %1024 = memref.load %arg4[%c89_291] : memref<144xf32, #tpu.memory_space<smem>>
    %1025 = vector.broadcast %1024 : f32 to vector<16x16xf32>
    %1026 = arith.mulf %1015, %1025 : vector<16x16xf32>
    %1027 = arith.addf %1009, %1026 : vector<16x16xf32>
    %c125_292 = arith.constant 125 : index
    %1028 = memref.load %arg4[%c125_292] : memref<144xf32, #tpu.memory_space<smem>>
    %1029 = vector.broadcast %1028 : f32 to vector<16x16xf32>
    %1030 = arith.mulf %1015, %1029 : vector<16x16xf32>
    %1031 = arith.addf %1013, %1030 : vector<16x16xf32>
    %c2_293 = arith.constant 2 : index
    %c0_294 = arith.constant 0 : index
    %c0_295 = arith.constant 0 : index
    %1032 = vector.load %arg8[%c2_293, %c0_294, %c0_295] : memref<4x18x18xf32, #tpu.memory_space<vmem>>, vector<1x16x16xf32>
    %1033 = vector.shape_cast %1032 : vector<1x16x16xf32> to vector<16x16xf32>
    %c18_296 = arith.constant 18 : index
    %1034 = memref.load %arg4[%c18_296] : memref<144xf32, #tpu.memory_space<smem>>
    %1035 = vector.broadcast %1034 : f32 to vector<16x16xf32>
    %1036 = arith.mulf %1033, %1035 : vector<16x16xf32>
    %1037 = arith.addf %1019, %1036 : vector<16x16xf32>
    %c54_297 = arith.constant 54 : index
    %1038 = memref.load %arg4[%c54_297] : memref<144xf32, #tpu.memory_space<smem>>
    %1039 = vector.broadcast %1038 : f32 to vector<16x16xf32>
    %1040 = arith.mulf %1033, %1039 : vector<16x16xf32>
    %1041 = arith.addf %1023, %1040 : vector<16x16xf32>
    %c90_298 = arith.constant 90 : index
    %1042 = memref.load %arg4[%c90_298] : memref<144xf32, #tpu.memory_space<smem>>
    %1043 = vector.broadcast %1042 : f32 to vector<16x16xf32>
    %1044 = arith.mulf %1033, %1043 : vector<16x16xf32>
    %1045 = arith.addf %1027, %1044 : vector<16x16xf32>
    %c126_299 = arith.constant 126 : index
    %1046 = memref.load %arg4[%c126_299] : memref<144xf32, #tpu.memory_space<smem>>
    %1047 = vector.broadcast %1046 : f32 to vector<16x16xf32>
    %1048 = arith.mulf %1033, %1047 : vector<16x16xf32>
    %1049 = arith.addf %1031, %1048 : vector<16x16xf32>
    %c2_300 = arith.constant 2 : index
    %c0_301 = arith.constant 0 : index
    %c1_302 = arith.constant 1 : index
    %1050 = vector.load %arg8[%c2_300, %c0_301, %c1_302] : memref<4x18x18xf32, #tpu.memory_space<vmem>>, vector<1x16x16xf32>
    %1051 = vector.shape_cast %1050 : vector<1x16x16xf32> to vector<16x16xf32>
    %c19_303 = arith.constant 19 : index
    %1052 = memref.load %arg4[%c19_303] : memref<144xf32, #tpu.memory_space<smem>>
    %1053 = vector.broadcast %1052 : f32 to vector<16x16xf32>
    %1054 = arith.mulf %1051, %1053 : vector<16x16xf32>
    %1055 = arith.addf %1037, %1054 : vector<16x16xf32>
    %c55_304 = arith.constant 55 : index
    %1056 = memref.load %arg4[%c55_304] : memref<144xf32, #tpu.memory_space<smem>>
    %1057 = vector.broadcast %1056 : f32 to vector<16x16xf32>
    %1058 = arith.mulf %1051, %1057 : vector<16x16xf32>
    %1059 = arith.addf %1041, %1058 : vector<16x16xf32>
    %c91_305 = arith.constant 91 : index
    %1060 = memref.load %arg4[%c91_305] : memref<144xf32, #tpu.memory_space<smem>>
    %1061 = vector.broadcast %1060 : f32 to vector<16x16xf32>
    %1062 = arith.mulf %1051, %1061 : vector<16x16xf32>
    %1063 = arith.addf %1045, %1062 : vector<16x16xf32>
    %c127_306 = arith.constant 127 : index
    %1064 = memref.load %arg4[%c127_306] : memref<144xf32, #tpu.memory_space<smem>>
    %1065 = vector.broadcast %1064 : f32 to vector<16x16xf32>
    %1066 = arith.mulf %1051, %1065 : vector<16x16xf32>
    %1067 = arith.addf %1049, %1066 : vector<16x16xf32>
    %c2_307 = arith.constant 2 : index
    %c0_308 = arith.constant 0 : index
    %c2_309 = arith.constant 2 : index
    %1068 = vector.load %arg8[%c2_307, %c0_308, %c2_309] : memref<4x18x18xf32, #tpu.memory_space<vmem>>, vector<1x16x16xf32>
    %1069 = vector.shape_cast %1068 : vector<1x16x16xf32> to vector<16x16xf32>
    %c20_310 = arith.constant 20 : index
    %1070 = memref.load %arg4[%c20_310] : memref<144xf32, #tpu.memory_space<smem>>
    %1071 = vector.broadcast %1070 : f32 to vector<16x16xf32>
    %1072 = arith.mulf %1069, %1071 : vector<16x16xf32>
    %1073 = arith.addf %1055, %1072 : vector<16x16xf32>
    %c56_311 = arith.constant 56 : index
    %1074 = memref.load %arg4[%c56_311] : memref<144xf32, #tpu.memory_space<smem>>
    %1075 = vector.broadcast %1074 : f32 to vector<16x16xf32>
    %1076 = arith.mulf %1069, %1075 : vector<16x16xf32>
    %1077 = arith.addf %1059, %1076 : vector<16x16xf32>
    %c92_312 = arith.constant 92 : index
    %1078 = memref.load %arg4[%c92_312] : memref<144xf32, #tpu.memory_space<smem>>
    %1079 = vector.broadcast %1078 : f32 to vector<16x16xf32>
    %1080 = arith.mulf %1069, %1079 : vector<16x16xf32>
    %1081 = arith.addf %1063, %1080 : vector<16x16xf32>
    %c128_313 = arith.constant 128 : index
    %1082 = memref.load %arg4[%c128_313] : memref<144xf32, #tpu.memory_space<smem>>
    %1083 = vector.broadcast %1082 : f32 to vector<16x16xf32>
    %1084 = arith.mulf %1069, %1083 : vector<16x16xf32>
    %1085 = arith.addf %1067, %1084 : vector<16x16xf32>
    %c2_314 = arith.constant 2 : index
    %c1_315 = arith.constant 1 : index
    %c0_316 = arith.constant 0 : index
    %1086 = vector.load %arg8[%c2_314, %c1_315, %c0_316] : memref<4x18x18xf32, #tpu.memory_space<vmem>>, vector<1x16x16xf32>
    %1087 = vector.shape_cast %1086 : vector<1x16x16xf32> to vector<16x16xf32>
    %c21_317 = arith.constant 21 : index
    %1088 = memref.load %arg4[%c21_317] : memref<144xf32, #tpu.memory_space<smem>>
    %1089 = vector.broadcast %1088 : f32 to vector<16x16xf32>
    %1090 = arith.mulf %1087, %1089 : vector<16x16xf32>
    %1091 = arith.addf %1073, %1090 : vector<16x16xf32>
    %c57_318 = arith.constant 57 : index
    %1092 = memref.load %arg4[%c57_318] : memref<144xf32, #tpu.memory_space<smem>>
    %1093 = vector.broadcast %1092 : f32 to vector<16x16xf32>
    %1094 = arith.mulf %1087, %1093 : vector<16x16xf32>
    %1095 = arith.addf %1077, %1094 : vector<16x16xf32>
    %c93_319 = arith.constant 93 : index
    %1096 = memref.load %arg4[%c93_319] : memref<144xf32, #tpu.memory_space<smem>>
    %1097 = vector.broadcast %1096 : f32 to vector<16x16xf32>
    %1098 = arith.mulf %1087, %1097 : vector<16x16xf32>
    %1099 = arith.addf %1081, %1098 : vector<16x16xf32>
    %c129_320 = arith.constant 129 : index
    %1100 = memref.load %arg4[%c129_320] : memref<144xf32, #tpu.memory_space<smem>>
    %1101 = vector.broadcast %1100 : f32 to vector<16x16xf32>
    %1102 = arith.mulf %1087, %1101 : vector<16x16xf32>
    %1103 = arith.addf %1085, %1102 : vector<16x16xf32>
    %c2_321 = arith.constant 2 : index
    %c1_322 = arith.constant 1 : index
    %c1_323 = arith.constant 1 : index
    %1104 = vector.load %arg8[%c2_321, %c1_322, %c1_323] : memref<4x18x18xf32, #tpu.memory_space<vmem>>, vector<1x16x16xf32>
    %1105 = vector.shape_cast %1104 : vector<1x16x16xf32> to vector<16x16xf32>
    %c22_324 = arith.constant 22 : index
    %1106 = memref.load %arg4[%c22_324] : memref<144xf32, #tpu.memory_space<smem>>
    %1107 = vector.broadcast %1106 : f32 to vector<16x16xf32>
    %1108 = arith.mulf %1105, %1107 : vector<16x16xf32>
    %1109 = arith.addf %1091, %1108 : vector<16x16xf32>
    %c58_325 = arith.constant 58 : index
    %1110 = memref.load %arg4[%c58_325] : memref<144xf32, #tpu.memory_space<smem>>
    %1111 = vector.broadcast %1110 : f32 to vector<16x16xf32>
    %1112 = arith.mulf %1105, %1111 : vector<16x16xf32>
    %1113 = arith.addf %1095, %1112 : vector<16x16xf32>
    %c94_326 = arith.constant 94 : index
    %1114 = memref.load %arg4[%c94_326] : memref<144xf32, #tpu.memory_space<smem>>
    %1115 = vector.broadcast %1114 : f32 to vector<16x16xf32>
    %1116 = arith.mulf %1105, %1115 : vector<16x16xf32>
    %1117 = arith.addf %1099, %1116 : vector<16x16xf32>
    %c130_327 = arith.constant 130 : index
    %1118 = memref.load %arg4[%c130_327] : memref<144xf32, #tpu.memory_space<smem>>
    %1119 = vector.broadcast %1118 : f32 to vector<16x16xf32>
    %1120 = arith.mulf %1105, %1119 : vector<16x16xf32>
    %1121 = arith.addf %1103, %1120 : vector<16x16xf32>
    %c2_328 = arith.constant 2 : index
    %c1_329 = arith.constant 1 : index
    %c2_330 = arith.constant 2 : index
    %1122 = vector.load %arg8[%c2_328, %c1_329, %c2_330] : memref<4x18x18xf32, #tpu.memory_space<vmem>>, vector<1x16x16xf32>
    %1123 = vector.shape_cast %1122 : vector<1x16x16xf32> to vector<16x16xf32>
    %c23_331 = arith.constant 23 : index
    %1124 = memref.load %arg4[%c23_331] : memref<144xf32, #tpu.memory_space<smem>>
    %1125 = vector.broadcast %1124 : f32 to vector<16x16xf32>
    %1126 = arith.mulf %1123, %1125 : vector<16x16xf32>
    %1127 = arith.addf %1109, %1126 : vector<16x16xf32>
    %c59_332 = arith.constant 59 : index
    %1128 = memref.load %arg4[%c59_332] : memref<144xf32, #tpu.memory_space<smem>>
    %1129 = vector.broadcast %1128 : f32 to vector<16x16xf32>
    %1130 = arith.mulf %1123, %1129 : vector<16x16xf32>
    %1131 = arith.addf %1113, %1130 : vector<16x16xf32>
    %c95_333 = arith.constant 95 : index
    %1132 = memref.load %arg4[%c95_333] : memref<144xf32, #tpu.memory_space<smem>>
    %1133 = vector.broadcast %1132 : f32 to vector<16x16xf32>
    %1134 = arith.mulf %1123, %1133 : vector<16x16xf32>
    %1135 = arith.addf %1117, %1134 : vector<16x16xf32>
    %c131_334 = arith.constant 131 : index
    %1136 = memref.load %arg4[%c131_334] : memref<144xf32, #tpu.memory_space<smem>>
    %1137 = vector.broadcast %1136 : f32 to vector<16x16xf32>
    %1138 = arith.mulf %1123, %1137 : vector<16x16xf32>
    %1139 = arith.addf %1121, %1138 : vector<16x16xf32>
    %c2_335 = arith.constant 2 : index
    %c2_336 = arith.constant 2 : index
    %c0_337 = arith.constant 0 : index
    %1140 = vector.load %arg8[%c2_335, %c2_336, %c0_337] : memref<4x18x18xf32, #tpu.memory_space<vmem>>, vector<1x16x16xf32>
    %1141 = vector.shape_cast %1140 : vector<1x16x16xf32> to vector<16x16xf32>
    %c24_338 = arith.constant 24 : index
    %1142 = memref.load %arg4[%c24_338] : memref<144xf32, #tpu.memory_space<smem>>
    %1143 = vector.broadcast %1142 : f32 to vector<16x16xf32>
    %1144 = arith.mulf %1141, %1143 : vector<16x16xf32>
    %1145 = arith.addf %1127, %1144 : vector<16x16xf32>
    %c60_339 = arith.constant 60 : index
    %1146 = memref.load %arg4[%c60_339] : memref<144xf32, #tpu.memory_space<smem>>
    %1147 = vector.broadcast %1146 : f32 to vector<16x16xf32>
    %1148 = arith.mulf %1141, %1147 : vector<16x16xf32>
    %1149 = arith.addf %1131, %1148 : vector<16x16xf32>
    %c96_340 = arith.constant 96 : index
    %1150 = memref.load %arg4[%c96_340] : memref<144xf32, #tpu.memory_space<smem>>
    %1151 = vector.broadcast %1150 : f32 to vector<16x16xf32>
    %1152 = arith.mulf %1141, %1151 : vector<16x16xf32>
    %1153 = arith.addf %1135, %1152 : vector<16x16xf32>
    %c132_341 = arith.constant 132 : index
    %1154 = memref.load %arg4[%c132_341] : memref<144xf32, #tpu.memory_space<smem>>
    %1155 = vector.broadcast %1154 : f32 to vector<16x16xf32>
    %1156 = arith.mulf %1141, %1155 : vector<16x16xf32>
    %1157 = arith.addf %1139, %1156 : vector<16x16xf32>
    %c2_342 = arith.constant 2 : index
    %c2_343 = arith.constant 2 : index
    %c1_344 = arith.constant 1 : index
    %1158 = vector.load %arg8[%c2_342, %c2_343, %c1_344] : memref<4x18x18xf32, #tpu.memory_space<vmem>>, vector<1x16x16xf32>
    %1159 = vector.shape_cast %1158 : vector<1x16x16xf32> to vector<16x16xf32>
    %c25_345 = arith.constant 25 : index
    %1160 = memref.load %arg4[%c25_345] : memref<144xf32, #tpu.memory_space<smem>>
    %1161 = vector.broadcast %1160 : f32 to vector<16x16xf32>
    %1162 = arith.mulf %1159, %1161 : vector<16x16xf32>
    %1163 = arith.addf %1145, %1162 : vector<16x16xf32>
    %c61_346 = arith.constant 61 : index
    %1164 = memref.load %arg4[%c61_346] : memref<144xf32, #tpu.memory_space<smem>>
    %1165 = vector.broadcast %1164 : f32 to vector<16x16xf32>
    %1166 = arith.mulf %1159, %1165 : vector<16x16xf32>
    %1167 = arith.addf %1149, %1166 : vector<16x16xf32>
    %c97_347 = arith.constant 97 : index
    %1168 = memref.load %arg4[%c97_347] : memref<144xf32, #tpu.memory_space<smem>>
    %1169 = vector.broadcast %1168 : f32 to vector<16x16xf32>
    %1170 = arith.mulf %1159, %1169 : vector<16x16xf32>
    %1171 = arith.addf %1153, %1170 : vector<16x16xf32>
    %c133_348 = arith.constant 133 : index
    %1172 = memref.load %arg4[%c133_348] : memref<144xf32, #tpu.memory_space<smem>>
    %1173 = vector.broadcast %1172 : f32 to vector<16x16xf32>
    %1174 = arith.mulf %1159, %1173 : vector<16x16xf32>
    %1175 = arith.addf %1157, %1174 : vector<16x16xf32>
    %c2_349 = arith.constant 2 : index
    %c2_350 = arith.constant 2 : index
    %c2_351 = arith.constant 2 : index
    %1176 = vector.load %arg8[%c2_349, %c2_350, %c2_351] : memref<4x18x18xf32, #tpu.memory_space<vmem>>, vector<1x16x16xf32>
    %1177 = vector.shape_cast %1176 : vector<1x16x16xf32> to vector<16x16xf32>
    %c26_352 = arith.constant 26 : index
    %1178 = memref.load %arg4[%c26_352] : memref<144xf32, #tpu.memory_space<smem>>
    %1179 = vector.broadcast %1178 : f32 to vector<16x16xf32>
    %1180 = arith.mulf %1177, %1179 : vector<16x16xf32>
    %1181 = arith.addf %1163, %1180 : vector<16x16xf32>
    %c62_353 = arith.constant 62 : index
    %1182 = memref.load %arg4[%c62_353] : memref<144xf32, #tpu.memory_space<smem>>
    %1183 = vector.broadcast %1182 : f32 to vector<16x16xf32>
    %1184 = arith.mulf %1177, %1183 : vector<16x16xf32>
    %1185 = arith.addf %1167, %1184 : vector<16x16xf32>
    %c98_354 = arith.constant 98 : index
    %1186 = memref.load %arg4[%c98_354] : memref<144xf32, #tpu.memory_space<smem>>
    %1187 = vector.broadcast %1186 : f32 to vector<16x16xf32>
    %1188 = arith.mulf %1177, %1187 : vector<16x16xf32>
    %1189 = arith.addf %1171, %1188 : vector<16x16xf32>
    %c134_355 = arith.constant 134 : index
    %1190 = memref.load %arg4[%c134_355] : memref<144xf32, #tpu.memory_space<smem>>
    %1191 = vector.broadcast %1190 : f32 to vector<16x16xf32>
    %1192 = arith.mulf %1177, %1191 : vector<16x16xf32>
    %1193 = arith.addf %1175, %1192 : vector<16x16xf32>
    %c3_356 = arith.constant 3 : index
    %c0_357 = arith.constant 0 : index
    %c0_358 = arith.constant 0 : index
    %1194 = vector.load %arg8[%c3_356, %c0_357, %c0_358] : memref<4x18x18xf32, #tpu.memory_space<vmem>>, vector<1x16x16xf32>
    %1195 = vector.shape_cast %1194 : vector<1x16x16xf32> to vector<16x16xf32>
    %c27_359 = arith.constant 27 : index
    %1196 = memref.load %arg4[%c27_359] : memref<144xf32, #tpu.memory_space<smem>>
    %1197 = vector.broadcast %1196 : f32 to vector<16x16xf32>
    %1198 = arith.mulf %1195, %1197 : vector<16x16xf32>
    %1199 = arith.addf %1181, %1198 : vector<16x16xf32>
    %c63_360 = arith.constant 63 : index
    %1200 = memref.load %arg4[%c63_360] : memref<144xf32, #tpu.memory_space<smem>>
    %1201 = vector.broadcast %1200 : f32 to vector<16x16xf32>
    %1202 = arith.mulf %1195, %1201 : vector<16x16xf32>
    %1203 = arith.addf %1185, %1202 : vector<16x16xf32>
    %c99_361 = arith.constant 99 : index
    %1204 = memref.load %arg4[%c99_361] : memref<144xf32, #tpu.memory_space<smem>>
    %1205 = vector.broadcast %1204 : f32 to vector<16x16xf32>
    %1206 = arith.mulf %1195, %1205 : vector<16x16xf32>
    %1207 = arith.addf %1189, %1206 : vector<16x16xf32>
    %c135_362 = arith.constant 135 : index
    %1208 = memref.load %arg4[%c135_362] : memref<144xf32, #tpu.memory_space<smem>>
    %1209 = vector.broadcast %1208 : f32 to vector<16x16xf32>
    %1210 = arith.mulf %1195, %1209 : vector<16x16xf32>
    %1211 = arith.addf %1193, %1210 : vector<16x16xf32>
    %c3_363 = arith.constant 3 : index
    %c0_364 = arith.constant 0 : index
    %c1_365 = arith.constant 1 : index
    %1212 = vector.load %arg8[%c3_363, %c0_364, %c1_365] : memref<4x18x18xf32, #tpu.memory_space<vmem>>, vector<1x16x16xf32>
    %1213 = vector.shape_cast %1212 : vector<1x16x16xf32> to vector<16x16xf32>
    %c28_366 = arith.constant 28 : index
    %1214 = memref.load %arg4[%c28_366] : memref<144xf32, #tpu.memory_space<smem>>
    %1215 = vector.broadcast %1214 : f32 to vector<16x16xf32>
    %1216 = arith.mulf %1213, %1215 : vector<16x16xf32>
    %1217 = arith.addf %1199, %1216 : vector<16x16xf32>
    %c64_367 = arith.constant 64 : index
    %1218 = memref.load %arg4[%c64_367] : memref<144xf32, #tpu.memory_space<smem>>
    %1219 = vector.broadcast %1218 : f32 to vector<16x16xf32>
    %1220 = arith.mulf %1213, %1219 : vector<16x16xf32>
    %1221 = arith.addf %1203, %1220 : vector<16x16xf32>
    %c100_368 = arith.constant 100 : index
    %1222 = memref.load %arg4[%c100_368] : memref<144xf32, #tpu.memory_space<smem>>
    %1223 = vector.broadcast %1222 : f32 to vector<16x16xf32>
    %1224 = arith.mulf %1213, %1223 : vector<16x16xf32>
    %1225 = arith.addf %1207, %1224 : vector<16x16xf32>
    %c136_369 = arith.constant 136 : index
    %1226 = memref.load %arg4[%c136_369] : memref<144xf32, #tpu.memory_space<smem>>
    %1227 = vector.broadcast %1226 : f32 to vector<16x16xf32>
    %1228 = arith.mulf %1213, %1227 : vector<16x16xf32>
    %1229 = arith.addf %1211, %1228 : vector<16x16xf32>
    %c3_370 = arith.constant 3 : index
    %c0_371 = arith.constant 0 : index
    %c2_372 = arith.constant 2 : index
    %1230 = vector.load %arg8[%c3_370, %c0_371, %c2_372] : memref<4x18x18xf32, #tpu.memory_space<vmem>>, vector<1x16x16xf32>
    %1231 = vector.shape_cast %1230 : vector<1x16x16xf32> to vector<16x16xf32>
    %c29_373 = arith.constant 29 : index
    %1232 = memref.load %arg4[%c29_373] : memref<144xf32, #tpu.memory_space<smem>>
    %1233 = vector.broadcast %1232 : f32 to vector<16x16xf32>
    %1234 = arith.mulf %1231, %1233 : vector<16x16xf32>
    %1235 = arith.addf %1217, %1234 : vector<16x16xf32>
    %c65_374 = arith.constant 65 : index
    %1236 = memref.load %arg4[%c65_374] : memref<144xf32, #tpu.memory_space<smem>>
    %1237 = vector.broadcast %1236 : f32 to vector<16x16xf32>
    %1238 = arith.mulf %1231, %1237 : vector<16x16xf32>
    %1239 = arith.addf %1221, %1238 : vector<16x16xf32>
    %c101_375 = arith.constant 101 : index
    %1240 = memref.load %arg4[%c101_375] : memref<144xf32, #tpu.memory_space<smem>>
    %1241 = vector.broadcast %1240 : f32 to vector<16x16xf32>
    %1242 = arith.mulf %1231, %1241 : vector<16x16xf32>
    %1243 = arith.addf %1225, %1242 : vector<16x16xf32>
    %c137_376 = arith.constant 137 : index
    %1244 = memref.load %arg4[%c137_376] : memref<144xf32, #tpu.memory_space<smem>>
    %1245 = vector.broadcast %1244 : f32 to vector<16x16xf32>
    %1246 = arith.mulf %1231, %1245 : vector<16x16xf32>
    %1247 = arith.addf %1229, %1246 : vector<16x16xf32>
    %c3_377 = arith.constant 3 : index
    %c1_378 = arith.constant 1 : index
    %c0_379 = arith.constant 0 : index
    %1248 = vector.load %arg8[%c3_377, %c1_378, %c0_379] : memref<4x18x18xf32, #tpu.memory_space<vmem>>, vector<1x16x16xf32>
    %1249 = vector.shape_cast %1248 : vector<1x16x16xf32> to vector<16x16xf32>
    %c30_380 = arith.constant 30 : index
    %1250 = memref.load %arg4[%c30_380] : memref<144xf32, #tpu.memory_space<smem>>
    %1251 = vector.broadcast %1250 : f32 to vector<16x16xf32>
    %1252 = arith.mulf %1249, %1251 : vector<16x16xf32>
    %1253 = arith.addf %1235, %1252 : vector<16x16xf32>
    %c66_381 = arith.constant 66 : index
    %1254 = memref.load %arg4[%c66_381] : memref<144xf32, #tpu.memory_space<smem>>
    %1255 = vector.broadcast %1254 : f32 to vector<16x16xf32>
    %1256 = arith.mulf %1249, %1255 : vector<16x16xf32>
    %1257 = arith.addf %1239, %1256 : vector<16x16xf32>
    %c102_382 = arith.constant 102 : index
    %1258 = memref.load %arg4[%c102_382] : memref<144xf32, #tpu.memory_space<smem>>
    %1259 = vector.broadcast %1258 : f32 to vector<16x16xf32>
    %1260 = arith.mulf %1249, %1259 : vector<16x16xf32>
    %1261 = arith.addf %1243, %1260 : vector<16x16xf32>
    %c138_383 = arith.constant 138 : index
    %1262 = memref.load %arg4[%c138_383] : memref<144xf32, #tpu.memory_space<smem>>
    %1263 = vector.broadcast %1262 : f32 to vector<16x16xf32>
    %1264 = arith.mulf %1249, %1263 : vector<16x16xf32>
    %1265 = arith.addf %1247, %1264 : vector<16x16xf32>
    %c3_384 = arith.constant 3 : index
    %c1_385 = arith.constant 1 : index
    %c1_386 = arith.constant 1 : index
    %1266 = vector.load %arg8[%c3_384, %c1_385, %c1_386] : memref<4x18x18xf32, #tpu.memory_space<vmem>>, vector<1x16x16xf32>
    %1267 = vector.shape_cast %1266 : vector<1x16x16xf32> to vector<16x16xf32>
    %c31_387 = arith.constant 31 : index
    %1268 = memref.load %arg4[%c31_387] : memref<144xf32, #tpu.memory_space<smem>>
    %1269 = vector.broadcast %1268 : f32 to vector<16x16xf32>
    %1270 = arith.mulf %1267, %1269 : vector<16x16xf32>
    %1271 = arith.addf %1253, %1270 : vector<16x16xf32>
    %c67_388 = arith.constant 67 : index
    %1272 = memref.load %arg4[%c67_388] : memref<144xf32, #tpu.memory_space<smem>>
    %1273 = vector.broadcast %1272 : f32 to vector<16x16xf32>
    %1274 = arith.mulf %1267, %1273 : vector<16x16xf32>
    %1275 = arith.addf %1257, %1274 : vector<16x16xf32>
    %c103_389 = arith.constant 103 : index
    %1276 = memref.load %arg4[%c103_389] : memref<144xf32, #tpu.memory_space<smem>>
    %1277 = vector.broadcast %1276 : f32 to vector<16x16xf32>
    %1278 = arith.mulf %1267, %1277 : vector<16x16xf32>
    %1279 = arith.addf %1261, %1278 : vector<16x16xf32>
    %c139_390 = arith.constant 139 : index
    %1280 = memref.load %arg4[%c139_390] : memref<144xf32, #tpu.memory_space<smem>>
    %1281 = vector.broadcast %1280 : f32 to vector<16x16xf32>
    %1282 = arith.mulf %1267, %1281 : vector<16x16xf32>
    %1283 = arith.addf %1265, %1282 : vector<16x16xf32>
    %c3_391 = arith.constant 3 : index
    %c1_392 = arith.constant 1 : index
    %c2_393 = arith.constant 2 : index
    %1284 = vector.load %arg8[%c3_391, %c1_392, %c2_393] : memref<4x18x18xf32, #tpu.memory_space<vmem>>, vector<1x16x16xf32>
    %1285 = vector.shape_cast %1284 : vector<1x16x16xf32> to vector<16x16xf32>
    %c32_394 = arith.constant 32 : index
    %1286 = memref.load %arg4[%c32_394] : memref<144xf32, #tpu.memory_space<smem>>
    %1287 = vector.broadcast %1286 : f32 to vector<16x16xf32>
    %1288 = arith.mulf %1285, %1287 : vector<16x16xf32>
    %1289 = arith.addf %1271, %1288 : vector<16x16xf32>
    %c68_395 = arith.constant 68 : index
    %1290 = memref.load %arg4[%c68_395] : memref<144xf32, #tpu.memory_space<smem>>
    %1291 = vector.broadcast %1290 : f32 to vector<16x16xf32>
    %1292 = arith.mulf %1285, %1291 : vector<16x16xf32>
    %1293 = arith.addf %1275, %1292 : vector<16x16xf32>
    %c104_396 = arith.constant 104 : index
    %1294 = memref.load %arg4[%c104_396] : memref<144xf32, #tpu.memory_space<smem>>
    %1295 = vector.broadcast %1294 : f32 to vector<16x16xf32>
    %1296 = arith.mulf %1285, %1295 : vector<16x16xf32>
    %1297 = arith.addf %1279, %1296 : vector<16x16xf32>
    %c140_397 = arith.constant 140 : index
    %1298 = memref.load %arg4[%c140_397] : memref<144xf32, #tpu.memory_space<smem>>
    %1299 = vector.broadcast %1298 : f32 to vector<16x16xf32>
    %1300 = arith.mulf %1285, %1299 : vector<16x16xf32>
    %1301 = arith.addf %1283, %1300 : vector<16x16xf32>
    %c3_398 = arith.constant 3 : index
    %c2_399 = arith.constant 2 : index
    %c0_400 = arith.constant 0 : index
    %1302 = vector.load %arg8[%c3_398, %c2_399, %c0_400] : memref<4x18x18xf32, #tpu.memory_space<vmem>>, vector<1x16x16xf32>
    %1303 = vector.shape_cast %1302 : vector<1x16x16xf32> to vector<16x16xf32>
    %c33_401 = arith.constant 33 : index
    %1304 = memref.load %arg4[%c33_401] : memref<144xf32, #tpu.memory_space<smem>>
    %1305 = vector.broadcast %1304 : f32 to vector<16x16xf32>
    %1306 = arith.mulf %1303, %1305 : vector<16x16xf32>
    %1307 = arith.addf %1289, %1306 : vector<16x16xf32>
    %c69_402 = arith.constant 69 : index
    %1308 = memref.load %arg4[%c69_402] : memref<144xf32, #tpu.memory_space<smem>>
    %1309 = vector.broadcast %1308 : f32 to vector<16x16xf32>
    %1310 = arith.mulf %1303, %1309 : vector<16x16xf32>
    %1311 = arith.addf %1293, %1310 : vector<16x16xf32>
    %c105_403 = arith.constant 105 : index
    %1312 = memref.load %arg4[%c105_403] : memref<144xf32, #tpu.memory_space<smem>>
    %1313 = vector.broadcast %1312 : f32 to vector<16x16xf32>
    %1314 = arith.mulf %1303, %1313 : vector<16x16xf32>
    %1315 = arith.addf %1297, %1314 : vector<16x16xf32>
    %c141_404 = arith.constant 141 : index
    %1316 = memref.load %arg4[%c141_404] : memref<144xf32, #tpu.memory_space<smem>>
    %1317 = vector.broadcast %1316 : f32 to vector<16x16xf32>
    %1318 = arith.mulf %1303, %1317 : vector<16x16xf32>
    %1319 = arith.addf %1301, %1318 : vector<16x16xf32>
    %c3_405 = arith.constant 3 : index
    %c2_406 = arith.constant 2 : index
    %c1_407 = arith.constant 1 : index
    %1320 = vector.load %arg8[%c3_405, %c2_406, %c1_407] : memref<4x18x18xf32, #tpu.memory_space<vmem>>, vector<1x16x16xf32>
    %1321 = vector.shape_cast %1320 : vector<1x16x16xf32> to vector<16x16xf32>
    %c34_408 = arith.constant 34 : index
    %1322 = memref.load %arg4[%c34_408] : memref<144xf32, #tpu.memory_space<smem>>
    %1323 = vector.broadcast %1322 : f32 to vector<16x16xf32>
    %1324 = arith.mulf %1321, %1323 : vector<16x16xf32>
    %1325 = arith.addf %1307, %1324 : vector<16x16xf32>
    %c70_409 = arith.constant 70 : index
    %1326 = memref.load %arg4[%c70_409] : memref<144xf32, #tpu.memory_space<smem>>
    %1327 = vector.broadcast %1326 : f32 to vector<16x16xf32>
    %1328 = arith.mulf %1321, %1327 : vector<16x16xf32>
    %1329 = arith.addf %1311, %1328 : vector<16x16xf32>
    %c106_410 = arith.constant 106 : index
    %1330 = memref.load %arg4[%c106_410] : memref<144xf32, #tpu.memory_space<smem>>
    %1331 = vector.broadcast %1330 : f32 to vector<16x16xf32>
    %1332 = arith.mulf %1321, %1331 : vector<16x16xf32>
    %1333 = arith.addf %1315, %1332 : vector<16x16xf32>
    %c142_411 = arith.constant 142 : index
    %1334 = memref.load %arg4[%c142_411] : memref<144xf32, #tpu.memory_space<smem>>
    %1335 = vector.broadcast %1334 : f32 to vector<16x16xf32>
    %1336 = arith.mulf %1321, %1335 : vector<16x16xf32>
    %1337 = arith.addf %1319, %1336 : vector<16x16xf32>
    %c3_412 = arith.constant 3 : index
    %c2_413 = arith.constant 2 : index
    %c2_414 = arith.constant 2 : index
    %1338 = vector.load %arg8[%c3_412, %c2_413, %c2_414] : memref<4x18x18xf32, #tpu.memory_space<vmem>>, vector<1x16x16xf32>
    %1339 = vector.shape_cast %1338 : vector<1x16x16xf32> to vector<16x16xf32>
    %c35_415 = arith.constant 35 : index
    %1340 = memref.load %arg4[%c35_415] : memref<144xf32, #tpu.memory_space<smem>>
    %1341 = vector.broadcast %1340 : f32 to vector<16x16xf32>
    %1342 = arith.mulf %1339, %1341 : vector<16x16xf32>
    %1343 = arith.addf %1325, %1342 : vector<16x16xf32>
    %c71_416 = arith.constant 71 : index
    %1344 = memref.load %arg4[%c71_416] : memref<144xf32, #tpu.memory_space<smem>>
    %1345 = vector.broadcast %1344 : f32 to vector<16x16xf32>
    %1346 = arith.mulf %1339, %1345 : vector<16x16xf32>
    %1347 = arith.addf %1329, %1346 : vector<16x16xf32>
    %c107_417 = arith.constant 107 : index
    %1348 = memref.load %arg4[%c107_417] : memref<144xf32, #tpu.memory_space<smem>>
    %1349 = vector.broadcast %1348 : f32 to vector<16x16xf32>
    %1350 = arith.mulf %1339, %1349 : vector<16x16xf32>
    %1351 = arith.addf %1333, %1350 : vector<16x16xf32>
    %c143_418 = arith.constant 143 : index
    %1352 = memref.load %arg4[%c143_418] : memref<144xf32, #tpu.memory_space<smem>>
    %1353 = vector.broadcast %1352 : f32 to vector<16x16xf32>
    %1354 = arith.mulf %1339, %1353 : vector<16x16xf32>
    %1355 = arith.addf %1337, %1354 : vector<16x16xf32>
    %cst_419 = arith.constant 0.000000e+00 : f32
    %1356 = vector.broadcast %cst_419 : f32 to vector<16x16xf32>
    %1357 = arith.maximumf %1343, %1356 : vector<16x16xf32>
    %cst_420 = arith.constant 0.000000e+00 : f32
    %1358 = vector.broadcast %cst_420 : f32 to vector<16x16xf32>
    %1359 = arith.maximumf %1347, %1358 : vector<16x16xf32>
    %cst_421 = arith.constant 0.000000e+00 : f32
    %1360 = vector.broadcast %cst_421 : f32 to vector<16x16xf32>
    %1361 = arith.maximumf %1351, %1360 : vector<16x16xf32>
    %cst_422 = arith.constant 0.000000e+00 : f32
    %1362 = vector.broadcast %cst_422 : f32 to vector<16x16xf32>
    %1363 = arith.maximumf %1355, %1362 : vector<16x16xf32>
    %c0_423 = arith.constant 0 : index
    %c0_424 = arith.constant 0 : index
    %c0_425 = arith.constant 0 : index
    %c0_426 = arith.constant 0 : index
    %1364 = vector.load %arg1[%c0_423, %c0_424, %c0_425, %c0_426] : memref<1x4x16x16xf32, #tpu.memory_space<vmem>>, vector<1x1x16x16xf32>
    %1365 = vector.shape_cast %1364 : vector<1x1x16x16xf32> to vector<16x16xf32>
    %1366 = arith.addf %1357, %1365 : vector<16x16xf32>
    %c0_427 = arith.constant 0 : index
    %c0_428 = arith.constant 0 : index
    %c0_429 = arith.constant 0 : index
    %c0_430 = arith.constant 0 : index
    %1367 = vector.load %arg6[%c0_427, %c0_428, %c0_429, %c0_430] : memref<1x4x16x16xf32, #tpu.memory_space<vmem>>, vector<1x1x16x16xf32>
    %1368 = vector.shape_cast %1367 : vector<1x1x16x16xf32> to vector<16x16xf32>
    %1369 = vector.shape_cast %1366 : vector<16x16xf32> to vector<1x1x16x16xf32>
    tpu.vector_store %arg6[%c0_427, %c0_428, %c0_429, %c0_430], %1369 {strides = array<i32>} : memref<1x4x16x16xf32, #tpu.memory_space<vmem>>, vector<1x1x16x16xf32>,
    %c0_431 = arith.constant 0 : index
    %c1_432 = arith.constant 1 : index
    %c0_433 = arith.constant 0 : index
    %c0_434 = arith.constant 0 : index
    %1370 = vector.load %arg1[%c0_431, %c1_432, %c0_433, %c0_434] : memref<1x4x16x16xf32, #tpu.memory_space<vmem>>, vector<1x1x16x16xf32>
    %1371 = vector.shape_cast %1370 : vector<1x1x16x16xf32> to vector<16x16xf32>
    %1372 = arith.addf %1359, %1371 : vector<16x16xf32>
    %c0_435 = arith.constant 0 : index
    %c1_436 = arith.constant 1 : index
    %c0_437 = arith.constant 0 : index
    %c0_438 = arith.constant 0 : index
    %1373 = vector.load %arg6[%c0_435, %c1_436, %c0_437, %c0_438] : memref<1x4x16x16xf32, #tpu.memory_space<vmem>>, vector<1x1x16x16xf32>
    %1374 = vector.shape_cast %1373 : vector<1x1x16x16xf32> to vector<16x16xf32>
    %1375 = vector.shape_cast %1372 : vector<16x16xf32> to vector<1x1x16x16xf32>
    tpu.vector_store %arg6[%c0_435, %c1_436, %c0_437, %c0_438], %1375 {strides = array<i32>} : memref<1x4x16x16xf32, #tpu.memory_space<vmem>>, vector<1x1x16x16xf32>,
    %c0_439 = arith.constant 0 : index
    %c2_440 = arith.constant 2 : index
    %c0_441 = arith.constant 0 : index
    %c0_442 = arith.constant 0 : index
    %1376 = vector.load %arg1[%c0_439, %c2_440, %c0_441, %c0_442] : memref<1x4x16x16xf32, #tpu.memory_space<vmem>>, vector<1x1x16x16xf32>
    %1377 = vector.shape_cast %1376 : vector<1x1x16x16xf32> to vector<16x16xf32>
    %1378 = arith.addf %1361, %1377 : vector<16x16xf32>
    %c0_443 = arith.constant 0 : index
    %c2_444 = arith.constant 2 : index
    %c0_445 = arith.constant 0 : index
    %c0_446 = arith.constant 0 : index
    %1379 = vector.load %arg6[%c0_443, %c2_444, %c0_445, %c0_446] : memref<1x4x16x16xf32, #tpu.memory_space<vmem>>, vector<1x1x16x16xf32>
    %1380 = vector.shape_cast %1379 : vector<1x1x16x16xf32> to vector<16x16xf32>
    %1381 = vector.shape_cast %1378 : vector<16x16xf32> to vector<1x1x16x16xf32>
    tpu.vector_store %arg6[%c0_443, %c2_444, %c0_445, %c0_446], %1381 {strides = array<i32>} : memref<1x4x16x16xf32, #tpu.memory_space<vmem>>, vector<1x1x16x16xf32>,
    %c0_447 = arith.constant 0 : index
    %c3_448 = arith.constant 3 : index
    %c0_449 = arith.constant 0 : index
    %c0_450 = arith.constant 0 : index
    %1382 = vector.load %arg1[%c0_447, %c3_448, %c0_449, %c0_450] : memref<1x4x16x16xf32, #tpu.memory_space<vmem>>, vector<1x1x16x16xf32>
    %1383 = vector.shape_cast %1382 : vector<1x1x16x16xf32> to vector<16x16xf32>
    %1384 = arith.addf %1363, %1383 : vector<16x16xf32>
    %c0_451 = arith.constant 0 : index
    %c3_452 = arith.constant 3 : index
    %c0_453 = arith.constant 0 : index
    %c0_454 = arith.constant 0 : index
    %1385 = vector.load %arg6[%c0_451, %c3_452, %c0_453, %c0_454] : memref<1x4x16x16xf32, #tpu.memory_space<vmem>>, vector<1x1x16x16xf32>
    %1386 = vector.shape_cast %1385 : vector<1x1x16x16xf32> to vector<16x16xf32>
    %1387 = vector.shape_cast %1384 : vector<16x16xf32> to vector<1x1x16x16xf32>
    tpu.vector_store %arg6[%c0_451, %c3_452, %c0_453, %c0_454], %1387 {strides = array<i32>} : memref<1x4x16x16xf32, #tpu.memory_space<vmem>>, vector<1x1x16x16xf32>,
    return
  }
  func.func @transform_0(%arg0: i32) -> (i32, i32, i32, i32) {
    %c0_i32 = arith.constant 0 : i32
    %c0_i32_0 = arith.constant 0 : i32
    %c0_i32_1 = arith.constant 0 : i32
    %c0_i32_2 = arith.constant 0 : i32
    return %arg0, %c0_i32, %c0_i32_0, %c0_i32_1 : i32, i32, i32, i32
  }
  func.func @transform_1(%arg0: i32) -> i32 {
    %c0_i32 = arith.constant 0 : i32
    %c0_i32_0 = arith.constant 0 : i32
    return %c0_i32 : i32
  }
  func.func @transform_2(%arg0: i32) -> i32 {
    %c0_i32 = arith.constant 0 : i32
    %c0_i32_0 = arith.constant 0 : i32
    return %c0_i32 : i32
  }
  func.func @transform_3(%arg0: i32) -> i32 {
    %c0_i32 = arith.constant 0 : i32
    %c0_i32_0 = arith.constant 0 : i32
    return %c0_i32 : i32
  }
  func.func @transform_4(%arg0: i32) -> i32 {
    %c0_i32 = arith.constant 0 : i32
    %c0_i32_0 = arith.constant 0 : i32
    return %c0_i32 : i32
  }
  func.func @transform_5(%arg0: i32) -> (i32, i32, i32, i32) {
    %c0_i32 = arith.constant 0 : i32
    %c0_i32_0 = arith.constant 0 : i32
    %c0_i32_1 = arith.constant 0 : i32
    %c0_i32_2 = arith.constant 0 : i32
    return %arg0, %c0_i32, %c0_i32_0, %c0_i32_1 : i32, i32, i32, i32
  }
}

</mosaic_0001>

<llo_original>
// kernel: _double_residual_conv_impl.1
$region0: #{_double_residual_conv_impl.1}
  #allocation0 [shape = 'u32[]', space=smem, size = 0x4, offset = 0x4, fixed_abs, tag = 'smem constant byte address 0x4 - core index']
  #allocation1 [shape = 'u32[72,128]{1,0:T(1,128)}', space=vmem, size = 0x9000, scoped, tag = 'internal scratch']
  #allocation2 [shape = 'f32[4,18,18]{2,1,0:T(8,128)}', space=vmem, size = 0xc000, scoped, tag = 'scratch operand']
  #allocation3 [shape = 'f32[4,18,18]{2,1,0:T(8,128)}', space=vmem, size = 0xc000, scoped, tag = 'scratch operand']
  %s0 = inlined_call_operand.vmem [shape: f32[2,4,16,16], index: 0, kind: input, shape index: {}]
  %s1 = inlined_call_operand.vmem [shape: f32[144], index: 1, kind: input, shape index: {}]
  %s2 = inlined_call_operand.vmem [shape: f32[4], index: 2, kind: input, shape index: {}]
  %s3 = inlined_call_operand.vmem [shape: f32[144], index: 3, kind: input, shape index: {}]
  %s4 = inlined_call_operand.vmem [shape: f32[4], index: 4, kind: input, shape index: {}]
  %s5 = inlined_call_operand.hbm [shape: f32[2,4,16,16], index: 5, kind: output, shape index: {}]
  %s6 = sld [smem:[#allocation0]]
  $region69: #{_double_residual_conv_impl.1} parent=0
    _
  %s8 = ssub.s32 1, %s6
  %s9 = scalar_select 0, %s8, %s6
  $region1: #{_double_residual_conv_impl.1} parent=0
    #allocation4 [shape = 'u8[1024]{0}', space=smem, size = 0x400, scoped, tag = 'input window, operand 1, single buffered']
    #allocation5 [shape = 's32[2]{0}', space=sflag, size = 0x8, scoped, tag = 'scoped memory for _double_residual_conv_impl.1']
    #allocation6 [shape = 's32[2]{0}', space=sflag, size = 0x8, scoped, tag = 'scoped memory for _double_residual_conv_impl.1']
    #allocation7 [shape = 'u8[512]{0}', space=smem, size = 0x200, scoped, tag = 'input window, operand 2, single buffered']
    #allocation8 [shape = 's32[1]{0}', space=sflag, size = 0x4, scoped, tag = 'scoped memory for _double_residual_conv_impl.1']
    #allocation9 [shape = 'u8[1024]{0}', space=smem, size = 0x400, scoped, tag = 'input window, operand 3, single buffered']
    #allocation10 [shape = 'u8[512]{0}', space=smem, size = 0x200, scoped, tag = 'input window, operand 4, single buffered']
    #allocation11 [shape = 's32[1]{0}', space=sflag, size = 0x4, scoped, tag = 'scoped memory for _double_residual_conv_impl.1']
    #allocation12 [shape = 'u8[65536]{0}', space=vmem, size = 0x10000, scoped, tag = 'output window, operand 0']
    %10 = vsyncpa [#allocation6], 0
    %11 = vsyncpa [#allocation8], 0
    %12 = vsyncpa [#allocation11], 0
    %13 = vsyncpa [#allocation5], 0
    %s14 = scalar_lea.sflag [#allocation5], 1
    %15 = vsyncpa %s14, 0
    loop: start=0, step=1, limit=4
    $region2: #{_double_residual_conv_impl.1} parent=1 // loop_pre_header
      _
    $region3: #{_double_residual_conv_impl.1} parent=1 // loop_header
      %s17 = sphi 0, %s21
      %p18 = scmp.ge.s32.totalorder %s17, 4
      %s27 = sphi 0, %s29
      %s30 = sphi 0, %s27
      %s31 = sphi 0, %s30
      %s47 = sphi 0, %s31
      %s51 = sphi 0, %s51
      %s53 = sphi 0, %s51
      %s54 = sphi 0, %s53
      %s68 = sphi 0, %s54
      %s72 = sphi 0, %s72
      %s74 = sphi 0, %s72
      %s75 = sphi 0, %s74
      %s89 = sphi 0, %s75
      %s93 = sphi 0, %s93
      %s95 = sphi 0, %s93
      %s96 = sphi 0, %s95
      %s110 = sphi 0, %s96
      %s114 = sphi 0, %s114
      %s116 = sphi 0, %s114
      %s117 = sphi 0, %s116
      %s131 = sphi 0, %s117
      %s137 = sphi 0, %s139
      %s140 = sphi 0, %s137
      %s141 = sphi 0, %s140
      %s157 = sphi 0, %s141
    $region4: #{_double_residual_conv_impl.1} parent=1 // loop_header_branch
      %20 = sbr.rel (%p18) target = $region8
    $region5: #{_double_residual_conv_impl.1} parent=1 // loop_body
      %s22 = ssub.s32 %s17, 1
      %s23 = ssub.s32 %s17, 2
      %s24 = sadd.s32 %s17, 1
      %s25 = ssub.s32 %s17, %s24
      %p26 = scmp.eq.s32.totalorder %s25, 0
      %s28 = sadd.s32 %s27, 1
      %s29 = scalar_select %p26, %s27, %s28
      %p32 = pneg %p26
      %p33 = scmp.eq.s32.totalorder %s17, 1
      %p34 = por %p32, %p33
      %p35 = scmp.ne.s32.totalorder %s27, %s30
      %p36 = scmp.eq.s32.totalorder %s17, 0
      %p37 = por %p35, %p36
      %p38 = scmp.ne.s32.totalorder %s27, %s30
      %p39 = scmp.eq.s32.totalorder %s22, 1
      %p40 = por %p38, %p39
      %p41 = scmp.ne.s32.totalorder %s30, %s31
      %p42 = scmp.eq.s32.totalorder %s22, 0
      %p43 = por %p41, %p42
      %p44 = scmp.ne.s32.totalorder %s30, %s31
      %p45 = scmp.eq.s32.totalorder %s23, 1
      %p46 = por %p44, %p45
      %p48 = scmp.ne.s32.totalorder %s31, %s47
      %p49 = scmp.eq.s32.totalorder %s23, 0
      %p50 = por %p48, %p49
      %s52 = sadd.s32 %s51, 1
      %p55 = scmp.eq.s32.totalorder %s17, 1
      %p56 = scmp.ne.s32.totalorder %s51, %s53
      %p57 = scmp.eq.s32.totalorder %s17, 0
      %p58 = por %p56, %p57
      %p59 = scmp.ne.s32.totalorder %s51, %s53
      %p60 = scmp.eq.s32.totalorder %s22, 1
      %p61 = por %p59, %p60
      %p62 = scmp.ne.s32.totalorder %s53, %s54
      %p63 = scmp.eq.s32.totalorder %s22, 0
      %p64 = por %p62, %p63
      %p65 = scmp.ne.s32.totalorder %s53, %s54
      %p66 = scmp.eq.s32.totalorder %s23, 1
      %p67 = por %p65, %p66
      %p69 = scmp.ne.s32.totalorder %s54, %s68
      %p70 = scmp.eq.s32.totalorder %s23, 0
      %p71 = por %p69, %p70
      %s73 = sadd.s32 %s72, 1
      %p76 = scmp.eq.s32.totalorder %s17, 1
      %p77 = scmp.ne.s32.totalorder %s72, %s74
      %p78 = scmp.eq.s32.totalorder %s17, 0
      %p79 = por %p77, %p78
      %p80 = scmp.ne.s32.totalorder %s72, %s74
      %p81 = scmp.eq.s32.totalorder %s22, 1
      %p82 = por %p80, %p81
      %p83 = scmp.ne.s32.totalorder %s74, %s75
      %p84 = scmp.eq.s32.totalorder %s22, 0
      %p85 = por %p83, %p84
      %p86 = scmp.ne.s32.totalorder %s74, %s75
      %p87 = scmp.eq.s32.totalorder %s23, 1
      %p88 = por %p86, %p87
      %p90 = scmp.ne.s32.totalorder %s75, %s89
      %p91 = scmp.eq.s32.totalorder %s23, 0
      %p92 = por %p90, %p91
      %s94 = sadd.s32 %s93, 1
      %p97 = scmp.eq.s32.totalorder %s17, 1
      %p98 = scmp.ne.s32.totalorder %s93, %s95
      %p99 = scmp.eq.s32.totalorder %s17, 0
      %p100 = por %p98, %p99
      %p101 = scmp.ne.s32.totalorder %s93, %s95
      %p102 = scmp.eq.s32.totalorder %s22, 1
      %p103 = por %p101, %p102
      %p104 = scmp.ne.s32.totalorder %s95, %s96
      %p105 = scmp.eq.s32.totalorder %s22, 0
      %p106 = por %p104, %p105
      %p107 = scmp.ne.s32.totalorder %s95, %s96
      %p108 = scmp.eq.s32.totalorder %s23, 1
      %p109 = por %p107, %p108
      %p111 = scmp.ne.s32.totalorder %s96, %s110
      %p112 = scmp.eq.s32.totalorder %s23, 0
      %p113 = por %p111, %p112
      %s115 = sadd.s32 %s114, 1
      %p118 = scmp.eq.s32.totalorder %s17, 1
      %p119 = scmp.ne.s32.totalorder %s114, %s116
      %p120 = scmp.eq.s32.totalorder %s17, 0
      %p121 = por %p119, %p120
      %p122 = scmp.ne.s32.totalorder %s114, %s116
      %p123 = scmp.eq.s32.totalorder %s22, 1
      %p124 = por %p122, %p123
      %p125 = scmp.ne.s32.totalorder %s116, %s117
      %p126 = scmp.eq.s32.totalorder %s22, 0
      %p127 = por %p125, %p126
      %p128 = scmp.ne.s32.totalorder %s116, %s117
      %p129 = scmp.eq.s32.totalorder %s23, 1
      %p130 = por %p128, %p129
      %p132 = scmp.ne.s32.totalorder %s117, %s131
      %p133 = scmp.eq.s32.totalorder %s23, 0
      %p134 = por %p132, %p133
      %s135 = ssub.s32 %s17, %s24
      %p136 = scmp.eq.s32.totalorder %s135, 0
      %s138 = sadd.s32 %s137, 1
      %s139 = scalar_select %p136, %s137, %s138
      %p142 = pneg %p136
      %p143 = scmp.eq.s32.totalorder %s17, 1
      %p144 = por %p142, %p143
      %p145 = scmp.ne.s32.totalorder %s137, %s140
      %p146 = scmp.eq.s32.totalorder %s17, 0
      %p147 = por %p145, %p146
      %p148 = scmp.ne.s32.totalorder %s137, %s140
      %p149 = scmp.eq.s32.totalorder %s22, 1
      %p150 = por %p148, %p149
      %p151 = scmp.ne.s32.totalorder %s140, %s141
      %p152 = scmp.eq.s32.totalorder %s22, 0
      %p153 = por %p151, %p152
      %p154 = scmp.ne.s32.totalorder %s140, %s141
      %p155 = scmp.eq.s32.totalorder %s23, 1
      %p156 = por %p154, %p155
      %p158 = scmp.ne.s32.totalorder %s141, %s157
      %p159 = scmp.eq.s32.totalorder %s23, 0
      %p160 = por %p158, %p159
      %p161 = scmp.le.s32.totalorder 1, %s17
      %p162 = scmp.lt.s32.totalorder %s17, 3
      %p163 = pnand %p161, %p162
      %p164 = pneg %p163
      // Predicated region
      $region9: #{_double_residual_conv_impl.1} parent=5 // pred_check
        _
      $region10: #{_double_residual_conv_impl.1} parent=5 // pred_check_branch
        %166 = sbr.rel (%p163) target = $region12
      $region11: #{_double_residual_conv_impl.1} parent=5 // pred_region
        %s167 = ssub.s32 %s17, 1
        // Predicated region
        $region13: #{_double_residual_conv_impl.1} parent=11 // pred_check
          %p168 = pneg %p64
        $region14: #{_double_residual_conv_impl.1} parent=11 // pred_check_branch
          %170 = sbr.rel (%p168) target = $region16
        $region15: #{_double_residual_conv_impl.1} parent=11 // pred_region
          %172 = vsyncadd [#allocation6], 0
          %s174 = sshll.u32 %s1, 4
          %s175 = int_to_ptr.vmem [resolvable:$true] %s174
          %177 = dma.vmem_to_smem %s175, 32, [#allocation4], [#allocation6]
        $region16: #{_double_residual_conv_impl.1} parent=11 // pred_fallthru
          _
        // Predicated region
        $region17: #{_double_residual_conv_impl.1} parent=11 // pred_check
          %p178 = pneg %p85
        $region18: #{_double_residual_conv_impl.1} parent=11 // pred_check_branch
          %180 = sbr.rel (%p178) target = $region20
        $region19: #{_double_residual_conv_impl.1} parent=11 // pred_region
          %182 = vsyncadd [#allocation8], 0
          %s184 = sshll.u32 %s2, 4
          %s185 = int_to_ptr.vmem [resolvable:$true] %s184
          %187 = dma.vmem_to_smem %s185, 16, [#allocation7], [#allocation8]
        $region20: #{_double_residual_conv_impl.1} parent=11 // pred_fallthru
          _
        // Predicated region
        $region21: #{_double_residual_conv_impl.1} parent=11 // pred_check
          %p188 = pneg %p106
        $region22: #{_double_residual_conv_impl.1} parent=11 // pred_check_branch
          %190 = sbr.rel (%p188) target = $region24
        $region23: #{_double_residual_conv_impl.1} parent=11 // pred_region
          %192 = vsyncadd [#allocation8], 0
          %s194 = sshll.u32 %s3, 4
          %s195 = int_to_ptr.vmem [resolvable:$true] %s194
          %197 = dma.vmem_to_smem %s195, 32, [#allocation9], [#allocation8]
        $region24: #{_double_residual_conv_impl.1} parent=11 // pred_fallthru
          _
        // Predicated region
        $region25: #{_double_residual_conv_impl.1} parent=11 // pred_check
          %p198 = pneg %p127
        $region26: #{_double_residual_conv_impl.1} parent=11 // pred_check_branch
          %200 = sbr.rel (%p198) target = $region28
        $region27: #{_double_residual_conv_impl.1} parent=11 // pred_region
          %202 = vsyncadd [#allocation11], 0
          %s204 = sshll.u32 %s4, 4
          %s205 = int_to_ptr.vmem [resolvable:$true] %s204
          %207 = dma.vmem_to_smem %s205, 16, [#allocation10], [#allocation11]
        $region28: #{_double_residual_conv_impl.1} parent=11 // pred_fallthru
          _
      $region12: #{_double_residual_conv_impl.1} parent=5 // pred_fallthru
        _
      %p208 = scmp.lt.s32.totalorder %s17, 2
      // Predicated region
      $region29: #{_double_residual_conv_impl.1} parent=5 // pred_check
        %p209 = pneg %p208
      $region30: #{_double_residual_conv_impl.1} parent=5 // pred_check_branch
        %211 = sbr.rel (%p209) target = $region32
      $region31: #{_double_residual_conv_impl.1} parent=5 // pred_region
        // Predicated region
        $region33: #{_double_residual_conv_impl.1} parent=31 // pred_check
          %p212 = pneg %p37
        $region34: #{_double_residual_conv_impl.1} parent=31 // pred_check_branch
          %214 = sbr.rel (%p212) target = $region36
        $region35: #{_double_residual_conv_impl.1} parent=31 // pred_region
          %p215 = scmp.lt.s32.totalorder %s17, 1
          %s216 = scalar_select %p215, %s17, 1
          %s217 = smul.addr %s216, 8
          %s218 = smul.addr %s217, 8
          %s219 = scalar_lea.vmem %s0, %s218
        $region36: #{_double_residual_conv_impl.1} parent=31 // pred_fallthru
          _
      $region32: #{_double_residual_conv_impl.1} parent=5 // pred_fallthru
        _
      %p220 = scmp.le.s32.totalorder 1, %s17
      %p221 = scmp.lt.s32.totalorder %s17, 3
      %p222 = pnand %p220, %p221
      %p223 = pneg %p222
      // Predicated region
      $region37: #{_double_residual_conv_impl.1} parent=5 // pred_check
        _
      $region38: #{_double_residual_conv_impl.1} parent=5 // pred_check_branch
        %225 = sbr.rel (%p222) target = $region40
      $region39: #{_double_residual_conv_impl.1} parent=5 // pred_region
        %s226 = ssub.s32 %s17, 1
        // Predicated region
        $region41: #{_double_residual_conv_impl.1} parent=39 // pred_check
          %p227 = pneg %p64
        $region42: #{_double_residual_conv_impl.1} parent=39 // pred_check_branch
          %229 = sbr.rel (%p227) target = $region44
        $region43: #{_double_residual_conv_impl.1} parent=39 // pred_region
          %231 = dma.done [#allocation6], 32
        $region44: #{_double_residual_conv_impl.1} parent=39 // pred_fallthru
          _
        // Predicated region
        $region45: #{_double_residual_conv_impl.1} parent=39 // pred_check
          %p232 = pneg %p85
        $region46: #{_double_residual_conv_impl.1} parent=39 // pred_check_branch
          %234 = sbr.rel (%p232) target = $region48
        $region47: #{_double_residual_conv_impl.1} parent=39 // pred_region
          %236 = dma.done [#allocation8], 16
        $region48: #{_double_residual_conv_impl.1} parent=39 // pred_fallthru
          _
        // Predicated region
        $region49: #{_double_residual_conv_impl.1} parent=39 // pred_check
          %p237 = pneg %p106
        $region50: #{_double_residual_conv_impl.1} parent=39 // pred_check_branch
          %239 = sbr.rel (%p237) target = $region52
        $region51: #{_double_residual_conv_impl.1} parent=39 // pred_region
          %241 = dma.done [#allocation8], 32
        $region52: #{_double_residual_conv_impl.1} parent=39 // pred_fallthru
          _
        // Predicated region
        $region53: #{_double_residual_conv_impl.1} parent=39 // pred_check
          %p242 = pneg %p127
        $region54: #{_double_residual_conv_impl.1} parent=39 // pred_check_branch
          %244 = sbr.rel (%p242) target = $region56
        $region55: #{_double_residual_conv_impl.1} parent=39 // pred_region
          %246 = dma.done [#allocation11], 16
        $region56: #{_double_residual_conv_impl.1} parent=39 // pred_fallthru
          _
        %247 = sfence
        %p248 = scmp.lt.s32.totalorder %s22, 1
        %s249 = scalar_select %p248, %s22, 1
        %s250 = smul.addr %s249, 8
        %s251 = smul.addr %s250, 8
        %s252 = scalar_lea.vmem %s0, %s251
        %p253 = pneg %p43
        %p254 = pneg %p40
        %p255 = pneg %p64
        %p256 = pneg %p61
        %p257 = pneg %p85
        %p258 = pneg %p82
        %p259 = pneg %p106
        %p260 = pneg %p103
        %p261 = pneg %p127
        %p262 = pneg %p124
        %p263 = pneg %p153
        %p264 = pneg %p150
        %s265 = sand.u32 %s140, 1
        %s266 = scalar_lea.sflag [#allocation5], %s265
        %s267 = sand.u32 %s140, 1
        %s268 = smul.addr %s267, 64
        %s269 = scalar_lea.vmem [#allocation12], %s268
        %p270 = scmp.lt.s32.totalorder %s22, 1
        %s271 = scalar_select %p270, %s22, 1
        %s272 = smul.addr %s271, 8
        %s273 = smul.addr %s272, 8
        %s274 = scalar_lea.vmem %s0, %s273
        %vm275 = vcmask 146432
        %276 = vst.msk [vmem:[#allocation2] sm:$0xff] %vm275, 0.0
        %277 = vst.msk [vmem:[#allocation2 + $0x8] sm:$0xff] %vm275, 0.0
        %vm278 = vcmask 140288
        %279 = vst.msk [vmem:[#allocation2 + $0x10] sm:$0x3] %vm278, 0.0
        %280 = vst.msk [vmem:[#allocation2 + $0x18] sm:$0xff] %vm275, 0.0
        %281 = vst.msk [vmem:[#allocation2 + $0x20] sm:$0xff] %vm275, 0.0
        %282 = vst.msk [vmem:[#allocation2 + $0x28] sm:$0x3] %vm278, 0.0
        %283 = vst.msk [vmem:[#allocation2 + $0x30] sm:$0xff] %vm275, 0.0
        %284 = vst.msk [vmem:[#allocation2 + $0x38] sm:$0xff] %vm275, 0.0
        %285 = vst.msk [vmem:[#allocation2 + $0x40] sm:$0x3] %vm278, 0.0
        %286 = vst.msk [vmem:[#allocation2 + $0x48] sm:$0xff] %vm275, 0.0
        %287 = vst.msk [vmem:[#allocation2 + $0x50] sm:$0xff] %vm275, 0.0
        %288 = vst.msk [vmem:[#allocation2 + $0x58] sm:$0x3] %vm278, 0.0
        %v289 = vld [vmem:[%s274] sm:$0xff]
        %v290 = vld [vmem:[%s274 + $0x8] sm:$0xff]
        %293 = vrot.lane.b32.xlu0 %v289, 1
        %v294 = vpop.permute.xlu0 %293
        %295 = vrot.lane.b32.xlu0 %v290, 1
        %v296 = vpop.permute.xlu0 %295
        %vm299 = vcmask 138248
        %300 = vst.msk [vmem:[#allocation2 + $0x1] sm:$0xff] %vm299, %v294
        %301 = vst.msk [vmem:[#allocation2 + $0x9] sm:$0xff] %vm299, %v296
        %s302 = scalar_lea.vmem %s274, 16
        %v303 = vld [vmem:[%s302] sm:$0xff]
        %v304 = vld [vmem:[%s302 + $0x8] sm:$0xff]
        %307 = vrot.lane.b32.xlu0 %v303, 1
        %v308 = vpop.permute.xlu0 %307
        %309 = vrot.lane.b32.xlu0 %v304, 1
        %v310 = vpop.permute.xlu0 %309
        %s313 = scalar_lea.vmem [#allocation2], 24
        %314 = vst.msk [vmem:[%s313 + $0x1] sm:$0xff] %vm299, %v308
        %315 = vst.msk [vmem:[%s313 + $0x9] sm:$0xff] %vm299, %v310
        %s316 = scalar_lea.vmem %s274, 32
        %v317 = vld [vmem:[%s316] sm:$0xff]
        %v318 = vld [vmem:[%s316 + $0x8] sm:$0xff]
        %321 = vrot.lane.b32.xlu0 %v317, 1
        %v322 = vpop.permute.xlu0 %321
        %323 = vrot.lane.b32.xlu0 %v318, 1
        %v324 = vpop.permute.xlu0 %323
        %s327 = scalar_lea.vmem [#allocation2], 48
        %328 = vst.msk [vmem:[%s327 + $0x1] sm:$0xff] %vm299, %v322
        %329 = vst.msk [vmem:[%s327 + $0x9] sm:$0xff] %vm299, %v324
        %s330 = scalar_lea.vmem %s274, 48
        %v331 = vld [vmem:[%s330] sm:$0xff]
        %v332 = vld [vmem:[%s330 + $0x8] sm:$0xff]
        %335 = vrot.lane.b32.xlu0 %v331, 1
        %v336 = vpop.permute.xlu0 %335
        %337 = vrot.lane.b32.xlu0 %v332, 1
        %v338 = vpop.permute.xlu0 %337
        %s341 = scalar_lea.vmem [#allocation2], 72
        %342 = vst.msk [vmem:[%s341 + $0x1] sm:$0xff] %vm299, %v336
        %343 = vst.msk [vmem:[%s341 + $0x9] sm:$0xff] %vm299, %v338
        %s344 = sld [smem:[#allocation7]]
        %v345 = vstv %s344
        %s346 = sld [smem:[#allocation7 + $0x1]]
        %v347 = vstv %s346
        %s348 = sld [smem:[#allocation7 + $0x2]]
        %v349 = vstv %s348
        %s350 = sld [smem:[#allocation7 + $0x3]]
        %v351 = vstv %s350
        %v352 = vld [vmem:[#allocation2] sm:$0xff]
        %v353 = vld [vmem:[#allocation2 + $0x8] sm:$0xff]
        %s354 = sld [smem:[#allocation4]]
        %v355 = vstv %s354
        %v356 = vmul.f32 %v352, %v355
        %v357 = vmul.f32 %v353, %v355
        %v358 = vadd.f32 %v345, %v356
        %v359 = vadd.f32 %v345, %v357
        %s360 = sld [smem:[#allocation4 + $0x24]]
        %v361 = vstv %s360
        %v362 = vmul.f32 %v352, %v361
        %v363 = vmul.f32 %v353, %v361
        %v364 = vadd.f32 %v347, %v362
        %v365 = vadd.f32 %v347, %v363
        %s366 = sld [smem:[#allocation4 + $0x48]]
        %v367 = vstv %s366
        %v368 = vmul.f32 %v352, %v367
        %v369 = vmul.f32 %v353, %v367
        %v370 = vadd.f32 %v349, %v368
        %v371 = vadd.f32 %v349, %v369
        %s372 = sld [smem:[#allocation4 + $0x6c]]
        %v373 = vstv %s372
        %v374 = vmul.f32 %v352, %v373
        %v375 = vmul.f32 %v353, %v373
        %v376 = vadd.f32 %v351, %v374
        %v377 = vadd.f32 %v351, %v375
        %s378 = sld [smem:[#allocation4 + $0x1]]
        %v379 = vstv %s378
        %v380 = vmul.f32 %v352, %v379
        %v381 = vmul.f32 %v353, %v379
        %384 = vrot.lane.b32.xlu0 %v380, 127
        %v385 = vpop.permute.xlu0 %384
        %386 = vrot.lane.b32.xlu0 %v381, 127
        %v387 = vpop.permute.xlu0 %386
        %v390 = vadd.f32 %v358, %v385
        %v391 = vadd.f32 %v359, %v387
        %s392 = sld [smem:[#allocation4 + $0x25]]
        %v393 = vstv %s392
        %v394 = vmul.f32 %v352, %v393
        %v395 = vmul.f32 %v353, %v393
        %398 = vrot.lane.b32.xlu0 %v394, 127
        %v399 = vpop.permute.xlu0 %398
        %400 = vrot.lane.b32.xlu0 %v395, 127
        %v401 = vpop.permute.xlu0 %400
        %v404 = vadd.f32 %v364, %v399
        %v405 = vadd.f32 %v365, %v401
        %s406 = sld [smem:[#allocation4 + $0x49]]
        %v407 = vstv %s406
        %v408 = vmul.f32 %v352, %v407
        %v409 = vmul.f32 %v353, %v407
        %412 = vrot.lane.b32.xlu0 %v408, 127
        %v413 = vpop.permute.xlu0 %412
        %414 = vrot.lane.b32.xlu0 %v409, 127
        %v415 = vpop.permute.xlu0 %414
        %v418 = vadd.f32 %v370, %v413
        %v419 = vadd.f32 %v371, %v415
        %s420 = sld [smem:[#allocation4 + $0x6d]]
        %v421 = vstv %s420
        %v422 = vmul.f32 %v352, %v421
        %v423 = vmul.f32 %v353, %v421
        %426 = vrot.lane.b32.xlu0 %v422, 127
        %v427 = vpop.permute.xlu0 %426
        %428 = vrot.lane.b32.xlu0 %v423, 127
        %v429 = vpop.permute.xlu0 %428
        %v432 = vadd.f32 %v376, %v427
        %v433 = vadd.f32 %v377, %v429
        %s434 = sld [smem:[#allocation4 + $0x2]]
        %v435 = vstv %s434
        %v436 = vmul.f32 %v352, %v435
        %v437 = vmul.f32 %v353, %v435
        %440 = vrot.lane.b32.xlu0 %v436, 126
        %v441 = vpop.permute.xlu0 %440
        %442 = vrot.lane.b32.xlu0 %v437, 126
        %v443 = vpop.permute.xlu0 %442
        %v446 = vadd.f32 %v390, %v441
        %v447 = vadd.f32 %v391, %v443
        %s448 = sld [smem:[#allocation4 + $0x26]]
        %v449 = vstv %s448
        %v450 = vmul.f32 %v352, %v449
        %v451 = vmul.f32 %v353, %v449
        %454 = vrot.lane.b32.xlu0 %v450, 126
        %v455 = vpop.permute.xlu0 %454
        %456 = vrot.lane.b32.xlu0 %v451, 126
        %v457 = vpop.permute.xlu0 %456
        %v460 = vadd.f32 %v404, %v455
        %v461 = vadd.f32 %v405, %v457
        %s462 = sld [smem:[#allocation4 + $0x4a]]
        %v463 = vstv %s462
        %v464 = vmul.f32 %v352, %v463
        %v465 = vmul.f32 %v353, %v463
        %468 = vrot.lane.b32.xlu0 %v464, 126
        %v469 = vpop.permute.xlu0 %468
        %470 = vrot.lane.b32.xlu0 %v465, 126
        %v471 = vpop.permute.xlu0 %470
        %v474 = vadd.f32 %v418, %v469
        %v475 = vadd.f32 %v419, %v471
        %s476 = sld [smem:[#allocation4 + $0x6e]]
        %v477 = vstv %s476
        %v478 = vmul.f32 %v352, %v477
        %v479 = vmul.f32 %v353, %v477
        %482 = vrot.lane.b32.xlu0 %v478, 126
        %v483 = vpop.permute.xlu0 %482
        %484 = vrot.lane.b32.xlu0 %v479, 126
        %v485 = vpop.permute.xlu0 %484
        %v488 = vadd.f32 %v432, %v483
        %v489 = vadd.f32 %v433, %v485
        %v490 = vld [vmem:[#allocation2 + $0x1] sm:$0xff]
        %v491 = vld [vmem:[#allocation2 + $0x9] sm:$0xff]
        %s492 = sld [smem:[#allocation4 + $0x3]]
        %v493 = vstv %s492
        %v494 = vmul.f32 %v490, %v493
        %v495 = vmul.f32 %v491, %v493
        %v496 = vadd.f32 %v446, %v494
        %v497 = vadd.f32 %v447, %v495
        %s498 = sld [smem:[#allocation4 + $0x27]]
        %v499 = vstv %s498
        %v500 = vmul.f32 %v490, %v499
        %v501 = vmul.f32 %v491, %v499
        %v502 = vadd.f32 %v460, %v500
        %v503 = vadd.f32 %v461, %v501
        %s504 = sld [smem:[#allocation4 + $0x4b]]
        %v505 = vstv %s504
        %v506 = vmul.f32 %v490, %v505
        %v507 = vmul.f32 %v491, %v505
        %v508 = vadd.f32 %v474, %v506
        %v509 = vadd.f32 %v475, %v507
        %s510 = sld [smem:[#allocation4 + $0x6f]]
        %v511 = vstv %s510
        %v512 = vmul.f32 %v490, %v511
        %v513 = vmul.f32 %v491, %v511
        %v514 = vadd.f32 %v488, %v512
        %v515 = vadd.f32 %v489, %v513
        %s516 = sld [smem:[#allocation4 + $0x4]]
        %v517 = vstv %s516
        %v518 = vmul.f32 %v490, %v517
        %v519 = vmul.f32 %v491, %v517
        %522 = vrot.lane.b32.xlu0 %v518, 127
        %v523 = vpop.permute.xlu0 %522
        %524 = vrot.lane.b32.xlu0 %v519, 127
        %v525 = vpop.permute.xlu0 %524
        %v528 = vadd.f32 %v496, %v523
        %v529 = vadd.f32 %v497, %v525
        %s530 = sld [smem:[#allocation4 + $0x28]]
        %v531 = vstv %s530
        %v532 = vmul.f32 %v490, %v531
        %v533 = vmul.f32 %v491, %v531
        %536 = vrot.lane.b32.xlu0 %v532, 127
        %v537 = vpop.permute.xlu0 %536
        %538 = vrot.lane.b32.xlu0 %v533, 127
        %v539 = vpop.permute.xlu0 %538
        %v542 = vadd.f32 %v502, %v537
        %v543 = vadd.f32 %v503, %v539
        %s544 = sld [smem:[#allocation4 + $0x4c]]
        %v545 = vstv %s544
        %v546 = vmul.f32 %v490, %v545
        %v547 = vmul.f32 %v491, %v545
        %550 = vrot.lane.b32.xlu0 %v546, 127
        %v551 = vpop.permute.xlu0 %550
        %552 = vrot.lane.b32.xlu0 %v547, 127
        %v553 = vpop.permute.xlu0 %552
        %v556 = vadd.f32 %v508, %v551
        %v557 = vadd.f32 %v509, %v553
        %s558 = sld [smem:[#allocation4 + $0x70]]
        %v559 = vstv %s558
        %v560 = vmul.f32 %v490, %v559
        %v561 = vmul.f32 %v491, %v559
        %564 = vrot.lane.b32.xlu0 %v560, 127
        %v565 = vpop.permute.xlu0 %564
        %566 = vrot.lane.b32.xlu0 %v561, 127
        %v567 = vpop.permute.xlu0 %566
        %v570 = vadd.f32 %v514, %v565
        %v571 = vadd.f32 %v515, %v567
        %s572 = sld [smem:[#allocation4 + $0x5]]
        %v573 = vstv %s572
        %v574 = vmul.f32 %v490, %v573
        %v575 = vmul.f32 %v491, %v573
        %578 = vrot.lane.b32.xlu0 %v574, 126
        %v579 = vpop.permute.xlu0 %578
        %580 = vrot.lane.b32.xlu0 %v575, 126
        %v581 = vpop.permute.xlu0 %580
        %v584 = vadd.f32 %v528, %v579
        %v585 = vadd.f32 %v529, %v581
        %s586 = sld [smem:[#allocation4 + $0x29]]
        %v587 = vstv %s586
        %v588 = vmul.f32 %v490, %v587
        %v589 = vmul.f32 %v491, %v587
        %592 = vrot.lane.b32.xlu0 %v588, 126
        %v593 = vpop.permute.xlu0 %592
        %594 = vrot.lane.b32.xlu0 %v589, 126
        %v595 = vpop.permute.xlu0 %594
        %v598 = vadd.f32 %v542, %v593
        %v599 = vadd.f32 %v543, %v595
        %s600 = sld [smem:[#allocation4 + $0x4d]]
        %v601 = vstv %s600
        %v602 = vmul.f32 %v490, %v601
        %v603 = vmul.f32 %v491, %v601
        %606 = vrot.lane.b32.xlu0 %v602, 126
        %v607 = vpop.permute.xlu0 %606
        %608 = vrot.lane.b32.xlu0 %v603, 126
        %v609 = vpop.permute.xlu0 %608
        %v612 = vadd.f32 %v556, %v607
        %v613 = vadd.f32 %v557, %v609
        %s614 = sld [smem:[#allocation4 + $0x71]]
        %v615 = vstv %s614
        %v616 = vmul.f32 %v490, %v615
        %v617 = vmul.f32 %v491, %v615
        %620 = vrot.lane.b32.xlu0 %v616, 126
        %v621 = vpop.permute.xlu0 %620
        %622 = vrot.lane.b32.xlu0 %v617, 126
        %v623 = vpop.permute.xlu0 %622
        %v626 = vadd.f32 %v570, %v621
        %v627 = vadd.f32 %v571, %v623
        %v628 = vld [vmem:[#allocation2 + $0x2] sm:$0xff]
        %v629 = vld [vmem:[#allocation2 + $0xa] sm:$0xff]
        %s630 = sld [smem:[#allocation4 + $0x6]]
        %v631 = vstv %s630
        %v632 = vmul.f32 %v628, %v631
        %v633 = vmul.f32 %v629, %v631
        %v634 = vadd.f32 %v584, %v632
        %v635 = vadd.f32 %v585, %v633
        %s636 = sld [smem:[#allocation4 + $0x2a]]
        %v637 = vstv %s636
        %v638 = vmul.f32 %v628, %v637
        %v639 = vmul.f32 %v629, %v637
        %v640 = vadd.f32 %v598, %v638
        %v641 = vadd.f32 %v599, %v639
        %s642 = sld [smem:[#allocation4 + $0x4e]]
        %v643 = vstv %s642
        %v644 = vmul.f32 %v628, %v643
        %v645 = vmul.f32 %v629, %v643
        %v646 = vadd.f32 %v612, %v644
        %v647 = vadd.f32 %v613, %v645
        %s648 = sld [smem:[#allocation4 + $0x72]]
        %v649 = vstv %s648
        %v650 = vmul.f32 %v628, %v649
        %v651 = vmul.f32 %v629, %v649
        %v652 = vadd.f32 %v626, %v650
        %v653 = vadd.f32 %v627, %v651
        %s654 = sld [smem:[#allocation4 + $0x7]]
        %v655 = vstv %s654
        %v656 = vmul.f32 %v628, %v655
        %v657 = vmul.f32 %v629, %v655
        %660 = vrot.lane.b32.xlu0 %v656, 127
        %v661 = vpop.permute.xlu0 %660
        %662 = vrot.lane.b32.xlu0 %v657, 127
        %v663 = vpop.permute.xlu0 %662
        %v666 = vadd.f32 %v634, %v661
        %v667 = vadd.f32 %v635, %v663
        %s668 = sld [smem:[#allocation4 + $0x2b]]
        %v669 = vstv %s668
        %v670 = vmul.f32 %v628, %v669
        %v671 = vmul.f32 %v629, %v669
        %674 = vrot.lane.b32.xlu0 %v670, 127
        %v675 = vpop.permute.xlu0 %674
        %676 = vrot.lane.b32.xlu0 %v671, 127
        %v677 = vpop.permute.xlu0 %676
        %v680 = vadd.f32 %v640, %v675
        %v681 = vadd.f32 %v641, %v677
        %s682 = sld [smem:[#allocation4 + $0x4f]]
        %v683 = vstv %s682
        %v684 = vmul.f32 %v628, %v683
        %v685 = vmul.f32 %v629, %v683
        %688 = vrot.lane.b32.xlu0 %v684, 127
        %v689 = vpop.permute.xlu0 %688
        %690 = vrot.lane.b32.xlu0 %v685, 127
        %v691 = vpop.permute.xlu0 %690
        %v694 = vadd.f32 %v646, %v689
        %v695 = vadd.f32 %v647, %v691
        %s696 = sld [smem:[#allocation4 + $0x73]]
        %v697 = vstv %s696
        %v698 = vmul.f32 %v628, %v697
        %v699 = vmul.f32 %v629, %v697
        %702 = vrot.lane.b32.xlu0 %v698, 127
        %v703 = vpop.permute.xlu0 %702
        %704 = vrot.lane.b32.xlu0 %v699, 127
        %v705 = vpop.permute.xlu0 %704
        %v708 = vadd.f32 %v652, %v703
        %v709 = vadd.f32 %v653, %v705
        %s710 = sld [smem:[#allocation4 + $0x8]]
        %v711 = vstv %s710
        %v712 = vmul.f32 %v628, %v711
        %v713 = vmul.f32 %v629, %v711
        %716 = vrot.lane.b32.xlu0 %v712, 126
        %v717 = vpop.permute.xlu0 %716
        %718 = vrot.lane.b32.xlu0 %v713, 126
        %v719 = vpop.permute.xlu0 %718
        %v722 = vadd.f32 %v666, %v717
        %v723 = vadd.f32 %v667, %v719
        %s724 = sld [smem:[#allocation4 + $0x2c]]
        %v725 = vstv %s724
        %v726 = vmul.f32 %v628, %v725
        %v727 = vmul.f32 %v629, %v725
        %730 = vrot.lane.b32.xlu0 %v726, 126
        %v731 = vpop.permute.xlu0 %730
        %732 = vrot.lane.b32.xlu0 %v727, 126
        %v733 = vpop.permute.xlu0 %732
        %v736 = vadd.f32 %v680, %v731
        %v737 = vadd.f32 %v681, %v733
        %s738 = sld [smem:[#allocation4 + $0x50]]
        %v739 = vstv %s738
        %v740 = vmul.f32 %v628, %v739
        %v741 = vmul.f32 %v629, %v739
        %744 = vrot.lane.b32.xlu0 %v740, 126
        %v745 = vpop.permute.xlu0 %744
        %746 = vrot.lane.b32.xlu0 %v741, 126
        %v747 = vpop.permute.xlu0 %746
        %v750 = vadd.f32 %v694, %v745
        %v751 = vadd.f32 %v695, %v747
        %s752 = sld [smem:[#allocation4 + $0x74]]
        %v753 = vstv %s752
        %v754 = vmul.f32 %v628, %v753
        %v755 = vmul.f32 %v629, %v753
        %758 = vrot.lane.b32.xlu0 %v754, 126
        %v759 = vpop.permute.xlu0 %758
        %760 = vrot.lane.b32.xlu0 %v755, 126
        %v761 = vpop.permute.xlu0 %760
        %v764 = vadd.f32 %v708, %v759
        %v765 = vadd.f32 %v709, %v761
        %v766 = vld [vmem:[%s313] sm:$0xff]
        %v767 = vld [vmem:[%s313 + $0x8] sm:$0xff]
        %s768 = sld [smem:[#allocation4 + $0x9]]
        %v769 = vstv %s768
        %v770 = vmul.f32 %v766, %v769
        %v771 = vmul.f32 %v767, %v769
        %v772 = vadd.f32 %v722, %v770
        %v773 = vadd.f32 %v723, %v771
        %s774 = sld [smem:[#allocation4 + $0x2d]]
        %v775 = vstv %s774
        %v776 = vmul.f32 %v766, %v775
        %v777 = vmul.f32 %v767, %v775
        %v778 = vadd.f32 %v736, %v776
        %v779 = vadd.f32 %v737, %v777
        %s780 = sld [smem:[#allocation4 + $0x51]]
        %v781 = vstv %s780
        %v782 = vmul.f32 %v766, %v781
        %v783 = vmul.f32 %v767, %v781
        %v784 = vadd.f32 %v750, %v782
        %v785 = vadd.f32 %v751, %v783
        %s786 = sld [smem:[#allocation4 + $0x75]]
        %v787 = vstv %s786
        %v788 = vmul.f32 %v766, %v787
        %v789 = vmul.f32 %v767, %v787
        %v790 = vadd.f32 %v764, %v788
        %v791 = vadd.f32 %v765, %v789
        %s792 = sld [smem:[#allocation4 + $0xa]]
        %v793 = vstv %s792
        %v794 = vmul.f32 %v766, %v793
        %v795 = vmul.f32 %v767, %v793
        %798 = vrot.lane.b32.xlu0 %v794, 127
        %v799 = vpop.permute.xlu0 %798
        %800 = vrot.lane.b32.xlu0 %v795, 127
        %v801 = vpop.permute.xlu0 %800
        %v804 = vadd.f32 %v772, %v799
        %v805 = vadd.f32 %v773, %v801
        %s806 = sld [smem:[#allocation4 + $0x2e]]
        %v807 = vstv %s806
        %v808 = vmul.f32 %v766, %v807
        %v809 = vmul.f32 %v767, %v807
        %812 = vrot.lane.b32.xlu0 %v808, 127
        %v813 = vpop.permute.xlu0 %812
        %814 = vrot.lane.b32.xlu0 %v809, 127
        %v815 = vpop.permute.xlu0 %814
        %v818 = vadd.f32 %v778, %v813
        %v819 = vadd.f32 %v779, %v815
        %s820 = sld [smem:[#allocation4 + $0x52]]
        %v821 = vstv %s820
        %v822 = vmul.f32 %v766, %v821
        %v823 = vmul.f32 %v767, %v821
        %826 = vrot.lane.b32.xlu0 %v822, 127
        %v827 = vpop.permute.xlu0 %826
        %828 = vrot.lane.b32.xlu0 %v823, 127
        %v829 = vpop.permute.xlu0 %828
        %v832 = vadd.f32 %v784, %v827
        %v833 = vadd.f32 %v785, %v829
        %s834 = sld [smem:[#allocation4 + $0x76]]
        %v835 = vstv %s834
        %v836 = vmul.f32 %v766, %v835
        %v837 = vmul.f32 %v767, %v835
        %840 = vrot.lane.b32.xlu0 %v836, 127
        %v841 = vpop.permute.xlu0 %840
        %842 = vrot.lane.b32.xlu0 %v837, 127
        %v843 = vpop.permute.xlu0 %842
        %v846 = vadd.f32 %v790, %v841
        %v847 = vadd.f32 %v791, %v843
        %s848 = sld [smem:[#allocation4 + $0xb]]
        %v849 = vstv %s848
        %v850 = vmul.f32 %v766, %v849
        %v851 = vmul.f32 %v767, %v849
        %854 = vrot.lane.b32.xlu0 %v850, 126
        %v855 = vpop.permute.xlu0 %854
        %856 = vrot.lane.b32.xlu0 %v851, 126
        %v857 = vpop.permute.xlu0 %856
        %v860 = vadd.f32 %v804, %v855
        %v861 = vadd.f32 %v805, %v857
        %s862 = sld [smem:[#allocation4 + $0x2f]]
        %v863 = vstv %s862
        %v864 = vmul.f32 %v766, %v863
        %v865 = vmul.f32 %v767, %v863
        %868 = vrot.lane.b32.xlu0 %v864, 126
        %v869 = vpop.permute.xlu0 %868
        %870 = vrot.lane.b32.xlu0 %v865, 126
        %v871 = vpop.permute.xlu0 %870
        %v874 = vadd.f32 %v818, %v869
        %v875 = vadd.f32 %v819, %v871
        %s876 = sld [smem:[#allocation4 + $0x53]]
        %v877 = vstv %s876
        %v878 = vmul.f32 %v766, %v877
        %v879 = vmul.f32 %v767, %v877
        %882 = vrot.lane.b32.xlu0 %v878, 126
        %v883 = vpop.permute.xlu0 %882
        %884 = vrot.lane.b32.xlu0 %v879, 126
        %v885 = vpop.permute.xlu0 %884
        %v888 = vadd.f32 %v832, %v883
        %v889 = vadd.f32 %v833, %v885
        %s890 = sld [smem:[#allocation4 + $0x77]]
        %v891 = vstv %s890
        %v892 = vmul.f32 %v766, %v891
        %v893 = vmul.f32 %v767, %v891
        %896 = vrot.lane.b32.xlu0 %v892, 126
        %v897 = vpop.permute.xlu0 %896
        %898 = vrot.lane.b32.xlu0 %v893, 126
        %v899 = vpop.permute.xlu0 %898
        %v902 = vadd.f32 %v846, %v897
        %v903 = vadd.f32 %v847, %v899
        %v904 = vld [vmem:[%s313 + $0x1] sm:$0xff]
        %v905 = vld [vmem:[%s313 + $0x9] sm:$0xff]
        %s906 = sld [smem:[#allocation4 + $0xc]]
        %v907 = vstv %s906
        %v908 = vmul.f32 %v904, %v907
        %v909 = vmul.f32 %v905, %v907
        %v910 = vadd.f32 %v860, %v908
        %v911 = vadd.f32 %v861, %v909
        %s912 = sld [smem:[#allocation4 + $0x30]]
        %v913 = vstv %s912
        %v914 = vmul.f32 %v904, %v913
        %v915 = vmul.f32 %v905, %v913
        %v916 = vadd.f32 %v874, %v914
        %v917 = vadd.f32 %v875, %v915
        %s918 = sld [smem:[#allocation4 + $0x54]]
        %v919 = vstv %s918
        %v920 = vmul.f32 %v904, %v919
        %v921 = vmul.f32 %v905, %v919
        %v922 = vadd.f32 %v888, %v920
        %v923 = vadd.f32 %v889, %v921
        %s924 = sld [smem:[#allocation4 + $0x78]]
        %v925 = vstv %s924
        %v926 = vmul.f32 %v904, %v925
        %v927 = vmul.f32 %v905, %v925
        %v928 = vadd.f32 %v902, %v926
        %v929 = vadd.f32 %v903, %v927
        %s930 = sld [smem:[#allocation4 + $0xd]]
        %v931 = vstv %s930
        %v932 = vmul.f32 %v904, %v931
        %v933 = vmul.f32 %v905, %v931
        %936 = vrot.lane.b32.xlu0 %v932, 127
        %v937 = vpop.permute.xlu0 %936
        %938 = vrot.lane.b32.xlu0 %v933, 127
        %v939 = vpop.permute.xlu0 %938
        %v942 = vadd.f32 %v910, %v937
        %v943 = vadd.f32 %v911, %v939
        %s944 = sld [smem:[#allocation4 + $0x31]]
        %v945 = vstv %s944
        %v946 = vmul.f32 %v904, %v945
        %v947 = vmul.f32 %v905, %v945
        %950 = vrot.lane.b32.xlu0 %v946, 127
        %v951 = vpop.permute.xlu0 %950
        %952 = vrot.lane.b32.xlu0 %v947, 127
        %v953 = vpop.permute.xlu0 %952
        %v956 = vadd.f32 %v916, %v951
        %v957 = vadd.f32 %v917, %v953
        %s958 = sld [smem:[#allocation4 + $0x55]]
        %v959 = vstv %s958
        %v960 = vmul.f32 %v904, %v959
        %v961 = vmul.f32 %v905, %v959
        %964 = vrot.lane.b32.xlu0 %v960, 127
        %v965 = vpop.permute.xlu0 %964
        %966 = vrot.lane.b32.xlu0 %v961, 127
        %v967 = vpop.permute.xlu0 %966
        %v970 = vadd.f32 %v922, %v965
        %v971 = vadd.f32 %v923, %v967
        %s972 = sld [smem:[#allocation4 + $0x79]]
        %v973 = vstv %s972
        %v974 = vmul.f32 %v904, %v973
        %v975 = vmul.f32 %v905, %v973
        %978 = vrot.lane.b32.xlu0 %v974, 127
        %v979 = vpop.permute.xlu0 %978
        %980 = vrot.lane.b32.xlu0 %v975, 127
        %v981 = vpop.permute.xlu0 %980
        %v984 = vadd.f32 %v928, %v979
        %v985 = vadd.f32 %v929, %v981
        %s986 = sld [smem:[#allocation4 + $0xe]]
        %v987 = vstv %s986
        %v988 = vmul.f32 %v904, %v987
        %v989 = vmul.f32 %v905, %v987
        %992 = vrot.lane.b32.xlu0 %v988, 126
        %v993 = vpop.permute.xlu0 %992
        %994 = vrot.lane.b32.xlu0 %v989, 126
        %v995 = vpop.permute.xlu0 %994
        %v998 = vadd.f32 %v942, %v993
        %v999 = vadd.f32 %v943, %v995
        %s1000 = sld [smem:[#allocation4 + $0x32]]
        %v1001 = vstv %s1000
        %v1002 = vmul.f32 %v904, %v1001
        %v1003 = vmul.f32 %v905, %v1001
        %1006 = vrot.lane.b32.xlu0 %v1002, 126
        %v1007 = vpop.permute.xlu0 %1006
        %1008 = vrot.lane.b32.xlu0 %v1003, 126
        %v1009 = vpop.permute.xlu0 %1008
        %v1012 = vadd.f32 %v956, %v1007
        %v1013 = vadd.f32 %v957, %v1009
        %s1014 = sld [smem:[#allocation4 + $0x56]]
        %v1015 = vstv %s1014
        %v1016 = vmul.f32 %v904, %v1015
        %v1017 = vmul.f32 %v905, %v1015
        %1020 = vrot.lane.b32.xlu0 %v1016, 126
        %v1021 = vpop.permute.xlu0 %1020
        %1022 = vrot.lane.b32.xlu0 %v1017, 126
        %v1023 = vpop.permute.xlu0 %1022
        %v1026 = vadd.f32 %v970, %v1021
        %v1027 = vadd.f32 %v971, %v1023
        %s1028 = sld [smem:[#allocation4 + $0x7a]]
        %v1029 = vstv %s1028
        %v1030 = vmul.f32 %v904, %v1029
        %v1031 = vmul.f32 %v905, %v1029
        %1034 = vrot.lane.b32.xlu0 %v1030, 126
        %v1035 = vpop.permute.xlu0 %1034
        %1036 = vrot.lane.b32.xlu0 %v1031, 126
        %v1037 = vpop.permute.xlu0 %1036
        %v1040 = vadd.f32 %v984, %v1035
        %v1041 = vadd.f32 %v985, %v1037
        %v1042 = vld [vmem:[%s313 + $0x2] sm:$0xff]
        %v1043 = vld [vmem:[%s313 + $0xa] sm:$0xff]
        %s1044 = sld [smem:[#allocation4 + $0xf]]
        %v1045 = vstv %s1044
        %v1046 = vmul.f32 %v1042, %v1045
        %v1047 = vmul.f32 %v1043, %v1045
        %v1048 = vadd.f32 %v998, %v1046
        %v1049 = vadd.f32 %v999, %v1047
        %s1050 = sld [smem:[#allocation4 + $0x33]]
        %v1051 = vstv %s1050
        %v1052 = vmul.f32 %v1042, %v1051
        %v1053 = vmul.f32 %v1043, %v1051
        %v1054 = vadd.f32 %v1012, %v1052
        %v1055 = vadd.f32 %v1013, %v1053
        %s1056 = sld [smem:[#allocation4 + $0x57]]
        %v1057 = vstv %s1056
        %v1058 = vmul.f32 %v1042, %v1057
        %v1059 = vmul.f32 %v1043, %v1057
        %v1060 = vadd.f32 %v1026, %v1058
        %v1061 = vadd.f32 %v1027, %v1059
        %s1062 = sld [smem:[#allocation4 + $0x7b]]
        %v1063 = vstv %s1062
        %v1064 = vmul.f32 %v1042, %v1063
        %v1065 = vmul.f32 %v1043, %v1063
        %v1066 = vadd.f32 %v1040, %v1064
        %v1067 = vadd.f32 %v1041, %v1065
        %s1068 = sld [smem:[#allocation4 + $0x10]]
        %v1069 = vstv %s1068
        %v1070 = vmul.f32 %v1042, %v1069
        %v1071 = vmul.f32 %v1043, %v1069
        %1074 = vrot.lane.b32.xlu0 %v1070, 127
        %v1075 = vpop.permute.xlu0 %1074
        %1076 = vrot.lane.b32.xlu0 %v1071, 127
        %v1077 = vpop.permute.xlu0 %1076
        %v1080 = vadd.f32 %v1048, %v1075
        %v1081 = vadd.f32 %v1049, %v1077
        %s1082 = sld [smem:[#allocation4 + $0x34]]
        %v1083 = vstv %s1082
        %v1084 = vmul.f32 %v1042, %v1083
        %v1085 = vmul.f32 %v1043, %v1083
        %1088 = vrot.lane.b32.xlu0 %v1084, 127
        %v1089 = vpop.permute.xlu0 %1088
        %1090 = vrot.lane.b32.xlu0 %v1085, 127
        %v1091 = vpop.permute.xlu0 %1090
        %v1094 = vadd.f32 %v1054, %v1089
        %v1095 = vadd.f32 %v1055, %v1091
        %s1096 = sld [smem:[#allocation4 + $0x58]]
        %v1097 = vstv %s1096
        %v1098 = vmul.f32 %v1042, %v1097
        %v1099 = vmul.f32 %v1043, %v1097
        %1102 = vrot.lane.b32.xlu0 %v1098, 127
        %v1103 = vpop.permute.xlu0 %1102
        %1104 = vrot.lane.b32.xlu0 %v1099, 127
        %v1105 = vpop.permute.xlu0 %1104
        %v1108 = vadd.f32 %v1060, %v1103
        %v1109 = vadd.f32 %v1061, %v1105
        %s1110 = sld [smem:[#allocation4 + $0x7c]]
        %v1111 = vstv %s1110
        %v1112 = vmul.f32 %v1042, %v1111
        %v1113 = vmul.f32 %v1043, %v1111
        %1116 = vrot.lane.b32.xlu0 %v1112, 127
        %v1117 = vpop.permute.xlu0 %1116
        %1118 = vrot.lane.b32.xlu0 %v1113, 127
        %v1119 = vpop.permute.xlu0 %1118
        %v1122 = vadd.f32 %v1066, %v1117
        %v1123 = vadd.f32 %v1067, %v1119
        %s1124 = sld [smem:[#allocation4 + $0x11]]
        %v1125 = vstv %s1124
        %v1126 = vmul.f32 %v1042, %v1125
        %v1127 = vmul.f32 %v1043, %v1125
        %1130 = vrot.lane.b32.xlu0 %v1126, 126
        %v1131 = vpop.permute.xlu0 %1130
        %1132 = vrot.lane.b32.xlu0 %v1127, 126
        %v1133 = vpop.permute.xlu0 %1132
        %v1136 = vadd.f32 %v1080, %v1131
        %v1137 = vadd.f32 %v1081, %v1133
        %s1138 = sld [smem:[#allocation4 + $0x35]]
        %v1139 = vstv %s1138
        %v1140 = vmul.f32 %v1042, %v1139
        %v1141 = vmul.f32 %v1043, %v1139
        %1144 = vrot.lane.b32.xlu0 %v1140, 126
        %v1145 = vpop.permute.xlu0 %1144
        %1146 = vrot.lane.b32.xlu0 %v1141, 126
        %v1147 = vpop.permute.xlu0 %1146
        %v1150 = vadd.f32 %v1094, %v1145
        %v1151 = vadd.f32 %v1095, %v1147
        %s1152 = sld [smem:[#allocation4 + $0x59]]
        %v1153 = vstv %s1152
        %v1154 = vmul.f32 %v1042, %v1153
        %v1155 = vmul.f32 %v1043, %v1153
        %1158 = vrot.lane.b32.xlu0 %v1154, 126
        %v1159 = vpop.permute.xlu0 %1158
        %1160 = vrot.lane.b32.xlu0 %v1155, 126
        %v1161 = vpop.permute.xlu0 %1160
        %v1164 = vadd.f32 %v1108, %v1159
        %v1165 = vadd.f32 %v1109, %v1161
        %s1166 = sld [smem:[#allocation4 + $0x7d]]
        %v1167 = vstv %s1166
        %v1168 = vmul.f32 %v1042, %v1167
        %v1169 = vmul.f32 %v1043, %v1167
        %1172 = vrot.lane.b32.xlu0 %v1168, 126
        %v1173 = vpop.permute.xlu0 %1172
        %1174 = vrot.lane.b32.xlu0 %v1169, 126
        %v1175 = vpop.permute.xlu0 %1174
        %v1178 = vadd.f32 %v1122, %v1173
        %v1179 = vadd.f32 %v1123, %v1175
        %v1180 = vld [vmem:[%s327] sm:$0xff]
        %v1181 = vld [vmem:[%s327 + $0x8] sm:$0xff]
        %s1182 = sld [smem:[#allocation4 + $0x12]]
        %v1183 = vstv %s1182
        %v1184 = vmul.f32 %v1180, %v1183
        %v1185 = vmul.f32 %v1181, %v1183
        %v1186 = vadd.f32 %v1136, %v1184
        %v1187 = vadd.f32 %v1137, %v1185
        %s1188 = sld [smem:[#allocation4 + $0x36]]
        %v1189 = vstv %s1188
        %v1190 = vmul.f32 %v1180, %v1189
        %v1191 = vmul.f32 %v1181, %v1189
        %v1192 = vadd.f32 %v1150, %v1190
        %v1193 = vadd.f32 %v1151, %v1191
        %s1194 = sld [smem:[#allocation4 + $0x5a]]
        %v1195 = vstv %s1194
        %v1196 = vmul.f32 %v1180, %v1195
        %v1197 = vmul.f32 %v1181, %v1195
        %v1198 = vadd.f32 %v1164, %v1196
        %v1199 = vadd.f32 %v1165, %v1197
        %s1200 = sld [smem:[#allocation4 + $0x7e]]
        %v1201 = vstv %s1200
        %v1202 = vmul.f32 %v1180, %v1201
        %v1203 = vmul.f32 %v1181, %v1201
        %v1204 = vadd.f32 %v1178, %v1202
        %v1205 = vadd.f32 %v1179, %v1203
        %s1206 = sld [smem:[#allocation4 + $0x13]]
        %v1207 = vstv %s1206
        %v1208 = vmul.f32 %v1180, %v1207
        %v1209 = vmul.f32 %v1181, %v1207
        %1212 = vrot.lane.b32.xlu0 %v1208, 127
        %v1213 = vpop.permute.xlu0 %1212
        %1214 = vrot.lane.b32.xlu0 %v1209, 127
        %v1215 = vpop.permute.xlu0 %1214
        %v1218 = vadd.f32 %v1186, %v1213
        %v1219 = vadd.f32 %v1187, %v1215
        %s1220 = sld [smem:[#allocation4 + $0x37]]
        %v1221 = vstv %s1220
        %v1222 = vmul.f32 %v1180, %v1221
        %v1223 = vmul.f32 %v1181, %v1221
        %1226 = vrot.lane.b32.xlu0 %v1222, 127
        %v1227 = vpop.permute.xlu0 %1226
        %1228 = vrot.lane.b32.xlu0 %v1223, 127
        %v1229 = vpop.permute.xlu0 %1228
        %v1232 = vadd.f32 %v1192, %v1227
        %v1233 = vadd.f32 %v1193, %v1229
        %s1234 = sld [smem:[#allocation4 + $0x5b]]
        %v1235 = vstv %s1234
        %v1236 = vmul.f32 %v1180, %v1235
        %v1237 = vmul.f32 %v1181, %v1235
        %1240 = vrot.lane.b32.xlu0 %v1236, 127
        %v1241 = vpop.permute.xlu0 %1240
        %1242 = vrot.lane.b32.xlu0 %v1237, 127
        %v1243 = vpop.permute.xlu0 %1242
        %v1246 = vadd.f32 %v1198, %v1241
        %v1247 = vadd.f32 %v1199, %v1243
        %s1248 = sld [smem:[#allocation4 + $0x7f]]
        %v1249 = vstv %s1248
        %v1250 = vmul.f32 %v1180, %v1249
        %v1251 = vmul.f32 %v1181, %v1249
        %1254 = vrot.lane.b32.xlu0 %v1250, 127
        %v1255 = vpop.permute.xlu0 %1254
        %1256 = vrot.lane.b32.xlu0 %v1251, 127
        %v1257 = vpop.permute.xlu0 %1256
        %v1260 = vadd.f32 %v1204, %v1255
        %v1261 = vadd.f32 %v1205, %v1257
        %s1262 = sld [smem:[#allocation4 + $0x14]]
        %v1263 = vstv %s1262
        %v1264 = vmul.f32 %v1180, %v1263
        %v1265 = vmul.f32 %v1181, %v1263
        %1268 = vrot.lane.b32.xlu0 %v1264, 126
        %v1269 = vpop.permute.xlu0 %1268
        %1270 = vrot.lane.b32.xlu0 %v1265, 126
        %v1271 = vpop.permute.xlu0 %1270
        %v1274 = vadd.f32 %v1218, %v1269
        %v1275 = vadd.f32 %v1219, %v1271
        %s1276 = sld [smem:[#allocation4 + $0x38]]
        %v1277 = vstv %s1276
        %v1278 = vmul.f32 %v1180, %v1277
        %v1279 = vmul.f32 %v1181, %v1277
        %1282 = vrot.lane.b32.xlu0 %v1278, 126
        %v1283 = vpop.permute.xlu0 %1282
        %1284 = vrot.lane.b32.xlu0 %v1279, 126
        %v1285 = vpop.permute.xlu0 %1284
        %v1288 = vadd.f32 %v1232, %v1283
        %v1289 = vadd.f32 %v1233, %v1285
        %s1290 = sld [smem:[#allocation4 + $0x5c]]
        %v1291 = vstv %s1290
        %v1292 = vmul.f32 %v1180, %v1291
        %v1293 = vmul.f32 %v1181, %v1291
        %1296 = vrot.lane.b32.xlu0 %v1292, 126
        %v1297 = vpop.permute.xlu0 %1296
        %1298 = vrot.lane.b32.xlu0 %v1293, 126
        %v1299 = vpop.permute.xlu0 %1298
        %v1302 = vadd.f32 %v1246, %v1297
        %v1303 = vadd.f32 %v1247, %v1299
        %s1304 = sld [smem:[#allocation4 + $0x80]]
        %v1305 = vstv %s1304
        %v1306 = vmul.f32 %v1180, %v1305
        %v1307 = vmul.f32 %v1181, %v1305
        %1310 = vrot.lane.b32.xlu0 %v1306, 126
        %v1311 = vpop.permute.xlu0 %1310
        %1312 = vrot.lane.b32.xlu0 %v1307, 126
        %v1313 = vpop.permute.xlu0 %1312
        %v1316 = vadd.f32 %v1260, %v1311
        %v1317 = vadd.f32 %v1261, %v1313
        %v1318 = vld [vmem:[%s327 + $0x1] sm:$0xff]
        %v1319 = vld [vmem:[%s327 + $0x9] sm:$0xff]
        %s1320 = sld [smem:[#allocation4 + $0x15]]
        %v1321 = vstv %s1320
        %v1322 = vmul.f32 %v1318, %v1321
        %v1323 = vmul.f32 %v1319, %v1321
        %v1324 = vadd.f32 %v1274, %v1322
        %v1325 = vadd.f32 %v1275, %v1323
        %s1326 = sld [smem:[#allocation4 + $0x39]]
        %v1327 = vstv %s1326
        %v1328 = vmul.f32 %v1318, %v1327
        %v1329 = vmul.f32 %v1319, %v1327
        %v1330 = vadd.f32 %v1288, %v1328
        %v1331 = vadd.f32 %v1289, %v1329
        %s1332 = sld [smem:[#allocation4 + $0x5d]]
        %v1333 = vstv %s1332
        %v1334 = vmul.f32 %v1318, %v1333
        %v1335 = vmul.f32 %v1319, %v1333
        %v1336 = vadd.f32 %v1302, %v1334
        %v1337 = vadd.f32 %v1303, %v1335
        %s1338 = sld [smem:[#allocation4 + $0x81]]
        %v1339 = vstv %s1338
        %v1340 = vmul.f32 %v1318, %v1339
        %v1341 = vmul.f32 %v1319, %v1339
        %v1342 = vadd.f32 %v1316, %v1340
        %v1343 = vadd.f32 %v1317, %v1341
        %s1344 = sld [smem:[#allocation4 + $0x16]]
        %v1345 = vstv %s1344
        %v1346 = vmul.f32 %v1318, %v1345
        %v1347 = vmul.f32 %v1319, %v1345
        %1350 = vrot.lane.b32.xlu0 %v1346, 127
        %v1351 = vpop.permute.xlu0 %1350
        %1352 = vrot.lane.b32.xlu0 %v1347, 127
        %v1353 = vpop.permute.xlu0 %1352
        %v1356 = vadd.f32 %v1324, %v1351
        %v1357 = vadd.f32 %v1325, %v1353
        %s1358 = sld [smem:[#allocation4 + $0x3a]]
        %v1359 = vstv %s1358
        %v1360 = vmul.f32 %v1318, %v1359
        %v1361 = vmul.f32 %v1319, %v1359
        %1364 = vrot.lane.b32.xlu0 %v1360, 127
        %v1365 = vpop.permute.xlu0 %1364
        %1366 = vrot.lane.b32.xlu0 %v1361, 127
        %v1367 = vpop.permute.xlu0 %1366
        %v1370 = vadd.f32 %v1330, %v1365
        %v1371 = vadd.f32 %v1331, %v1367
        %s1372 = sld [smem:[#allocation4 + $0x5e]]
        %v1373 = vstv %s1372
        %v1374 = vmul.f32 %v1318, %v1373
        %v1375 = vmul.f32 %v1319, %v1373
        %1378 = vrot.lane.b32.xlu0 %v1374, 127
        %v1379 = vpop.permute.xlu0 %1378
        %1380 = vrot.lane.b32.xlu0 %v1375, 127
        %v1381 = vpop.permute.xlu0 %1380
        %v1384 = vadd.f32 %v1336, %v1379
        %v1385 = vadd.f32 %v1337, %v1381
        %s1386 = sld [smem:[#allocation4 + $0x82]]
        %v1387 = vstv %s1386
        %v1388 = vmul.f32 %v1318, %v1387
        %v1389 = vmul.f32 %v1319, %v1387
        %1392 = vrot.lane.b32.xlu0 %v1388, 127
        %v1393 = vpop.permute.xlu0 %1392
        %1394 = vrot.lane.b32.xlu0 %v1389, 127
        %v1395 = vpop.permute.xlu0 %1394
        %v1398 = vadd.f32 %v1342, %v1393
        %v1399 = vadd.f32 %v1343, %v1395
        %s1400 = sld [smem:[#allocation4 + $0x17]]
        %v1401 = vstv %s1400
        %v1402 = vmul.f32 %v1318, %v1401
        %v1403 = vmul.f32 %v1319, %v1401
        %1406 = vrot.lane.b32.xlu0 %v1402, 126
        %v1407 = vpop.permute.xlu0 %1406
        %1408 = vrot.lane.b32.xlu0 %v1403, 126
        %v1409 = vpop.permute.xlu0 %1408
        %v1412 = vadd.f32 %v1356, %v1407
        %v1413 = vadd.f32 %v1357, %v1409
        %s1414 = sld [smem:[#allocation4 + $0x3b]]
        %v1415 = vstv %s1414
        %v1416 = vmul.f32 %v1318, %v1415
        %v1417 = vmul.f32 %v1319, %v1415
        %1420 = vrot.lane.b32.xlu0 %v1416, 126
        %v1421 = vpop.permute.xlu0 %1420
        %1422 = vrot.lane.b32.xlu0 %v1417, 126
        %v1423 = vpop.permute.xlu0 %1422
        %v1426 = vadd.f32 %v1370, %v1421
        %v1427 = vadd.f32 %v1371, %v1423
        %s1428 = sld [smem:[#allocation4 + $0x5f]]
        %v1429 = vstv %s1428
        %v1430 = vmul.f32 %v1318, %v1429
        %v1431 = vmul.f32 %v1319, %v1429
        %1434 = vrot.lane.b32.xlu0 %v1430, 126
        %v1435 = vpop.permute.xlu0 %1434
        %1436 = vrot.lane.b32.xlu0 %v1431, 126
        %v1437 = vpop.permute.xlu0 %1436
        %v1440 = vadd.f32 %v1384, %v1435
        %v1441 = vadd.f32 %v1385, %v1437
        %s1442 = sld [smem:[#allocation4 + $0x83]]
        %v1443 = vstv %s1442
        %v1444 = vmul.f32 %v1318, %v1443
        %v1445 = vmul.f32 %v1319, %v1443
        %1448 = vrot.lane.b32.xlu0 %v1444, 126
        %v1449 = vpop.permute.xlu0 %1448
        %1450 = vrot.lane.b32.xlu0 %v1445, 126
        %v1451 = vpop.permute.xlu0 %1450
        %v1454 = vadd.f32 %v1398, %v1449
        %v1455 = vadd.f32 %v1399, %v1451
        %v1456 = vld [vmem:[%s327 + $0x2] sm:$0xff]
        %v1457 = vld [vmem:[%s327 + $0xa] sm:$0xff]
        %s1458 = sld [smem:[#allocation4 + $0x18]]
        %v1459 = vstv %s1458
        %v1460 = vmul.f32 %v1456, %v1459
        %v1461 = vmul.f32 %v1457, %v1459
        %v1462 = vadd.f32 %v1412, %v1460
        %v1463 = vadd.f32 %v1413, %v1461
        %s1464 = sld [smem:[#allocation4 + $0x3c]]
        %v1465 = vstv %s1464
        %v1466 = vmul.f32 %v1456, %v1465
        %v1467 = vmul.f32 %v1457, %v1465
        %v1468 = vadd.f32 %v1426, %v1466
        %v1469 = vadd.f32 %v1427, %v1467
        %s1470 = sld [smem:[#allocation4 + $0x60]]
        %v1471 = vstv %s1470
        %v1472 = vmul.f32 %v1456, %v1471
        %v1473 = vmul.f32 %v1457, %v1471
        %v1474 = vadd.f32 %v1440, %v1472
        %v1475 = vadd.f32 %v1441, %v1473
        %s1476 = sld [smem:[#allocation4 + $0x84]]
        %v1477 = vstv %s1476
        %v1478 = vmul.f32 %v1456, %v1477
        %v1479 = vmul.f32 %v1457, %v1477
        %v1480 = vadd.f32 %v1454, %v1478
        %v1481 = vadd.f32 %v1455, %v1479
        %s1482 = sld [smem:[#allocation4 + $0x19]]
        %v1483 = vstv %s1482
        %v1484 = vmul.f32 %v1456, %v1483
        %v1485 = vmul.f32 %v1457, %v1483
        %1488 = vrot.lane.b32.xlu0 %v1484, 127
        %v1489 = vpop.permute.xlu0 %1488
        %1490 = vrot.lane.b32.xlu0 %v1485, 127
        %v1491 = vpop.permute.xlu0 %1490
        %v1494 = vadd.f32 %v1462, %v1489
        %v1495 = vadd.f32 %v1463, %v1491
        %s1496 = sld [smem:[#allocation4 + $0x3d]]
        %v1497 = vstv %s1496
        %v1498 = vmul.f32 %v1456, %v1497
        %v1499 = vmul.f32 %v1457, %v1497
        %1502 = vrot.lane.b32.xlu0 %v1498, 127
        %v1503 = vpop.permute.xlu0 %1502
        %1504 = vrot.lane.b32.xlu0 %v1499, 127
        %v1505 = vpop.permute.xlu0 %1504
        %v1508 = vadd.f32 %v1468, %v1503
        %v1509 = vadd.f32 %v1469, %v1505
        %s1510 = sld [smem:[#allocation4 + $0x61]]
        %v1511 = vstv %s1510
        %v1512 = vmul.f32 %v1456, %v1511
        %v1513 = vmul.f32 %v1457, %v1511
        %1516 = vrot.lane.b32.xlu0 %v1512, 127
        %v1517 = vpop.permute.xlu0 %1516
        %1518 = vrot.lane.b32.xlu0 %v1513, 127
        %v1519 = vpop.permute.xlu0 %1518
        %v1522 = vadd.f32 %v1474, %v1517
        %v1523 = vadd.f32 %v1475, %v1519
        %s1524 = sld [smem:[#allocation4 + $0x85]]
        %v1525 = vstv %s1524
        %v1526 = vmul.f32 %v1456, %v1525
        %v1527 = vmul.f32 %v1457, %v1525
        %1530 = vrot.lane.b32.xlu0 %v1526, 127
        %v1531 = vpop.permute.xlu0 %1530
        %1532 = vrot.lane.b32.xlu0 %v1527, 127
        %v1533 = vpop.permute.xlu0 %1532
        %v1536 = vadd.f32 %v1480, %v1531
        %v1537 = vadd.f32 %v1481, %v1533
        %s1538 = sld [smem:[#allocation4 + $0x1a]]
        %v1539 = vstv %s1538
        %v1540 = vmul.f32 %v1456, %v1539
        %v1541 = vmul.f32 %v1457, %v1539
        %1544 = vrot.lane.b32.xlu0 %v1540, 126
        %v1545 = vpop.permute.xlu0 %1544
        %1546 = vrot.lane.b32.xlu0 %v1541, 126
        %v1547 = vpop.permute.xlu0 %1546
        %v1550 = vadd.f32 %v1494, %v1545
        %v1551 = vadd.f32 %v1495, %v1547
        %s1552 = sld [smem:[#allocation4 + $0x3e]]
        %v1553 = vstv %s1552
        %v1554 = vmul.f32 %v1456, %v1553
        %v1555 = vmul.f32 %v1457, %v1553
        %1558 = vrot.lane.b32.xlu0 %v1554, 126
        %v1559 = vpop.permute.xlu0 %1558
        %1560 = vrot.lane.b32.xlu0 %v1555, 126
        %v1561 = vpop.permute.xlu0 %1560
        %v1564 = vadd.f32 %v1508, %v1559
        %v1565 = vadd.f32 %v1509, %v1561
        %s1566 = sld [smem:[#allocation4 + $0x62]]
        %v1567 = vstv %s1566
        %v1568 = vmul.f32 %v1456, %v1567
        %v1569 = vmul.f32 %v1457, %v1567
        %1572 = vrot.lane.b32.xlu0 %v1568, 126
        %v1573 = vpop.permute.xlu0 %1572
        %1574 = vrot.lane.b32.xlu0 %v1569, 126
        %v1575 = vpop.permute.xlu0 %1574
        %v1578 = vadd.f32 %v1522, %v1573
        %v1579 = vadd.f32 %v1523, %v1575
        %s1580 = sld [smem:[#allocation4 + $0x86]]
        %v1581 = vstv %s1580
        %v1582 = vmul.f32 %v1456, %v1581
        %v1583 = vmul.f32 %v1457, %v1581
        %1586 = vrot.lane.b32.xlu0 %v1582, 126
        %v1587 = vpop.permute.xlu0 %1586
        %1588 = vrot.lane.b32.xlu0 %v1583, 126
        %v1589 = vpop.permute.xlu0 %1588
        %v1592 = vadd.f32 %v1536, %v1587
        %v1593 = vadd.f32 %v1537, %v1589
        %v1594 = vld [vmem:[%s341] sm:$0xff]
        %v1595 = vld [vmem:[%s341 + $0x8] sm:$0xff]
        %s1596 = sld [smem:[#allocation4 + $0x1b]]
        %v1597 = vstv %s1596
        %v1598 = vmul.f32 %v1594, %v1597
        %v1599 = vmul.f32 %v1595, %v1597
        %v1600 = vadd.f32 %v1550, %v1598
        %v1601 = vadd.f32 %v1551, %v1599
        %s1602 = sld [smem:[#allocation4 + $0x3f]]
        %v1603 = vstv %s1602
        %v1604 = vmul.f32 %v1594, %v1603
        %v1605 = vmul.f32 %v1595, %v1603
        %v1606 = vadd.f32 %v1564, %v1604
        %v1607 = vadd.f32 %v1565, %v1605
        %s1608 = sld [smem:[#allocation4 + $0x63]]
        %v1609 = vstv %s1608
        %v1610 = vmul.f32 %v1594, %v1609
        %v1611 = vmul.f32 %v1595, %v1609
        %v1612 = vadd.f32 %v1578, %v1610
        %v1613 = vadd.f32 %v1579, %v1611
        %s1614 = sld [smem:[#allocation4 + $0x87]]
        %v1615 = vstv %s1614
        %v1616 = vmul.f32 %v1594, %v1615
        %v1617 = vmul.f32 %v1595, %v1615
        %v1618 = vadd.f32 %v1592, %v1616
        %v1619 = vadd.f32 %v1593, %v1617
        %s1620 = sld [smem:[#allocation4 + $0x1c]]
        %v1621 = vstv %s1620
        %v1622 = vmul.f32 %v1594, %v1621
        %v1623 = vmul.f32 %v1595, %v1621
        %1626 = vrot.lane.b32.xlu0 %v1622, 127
        %v1627 = vpop.permute.xlu0 %1626
        %1628 = vrot.lane.b32.xlu0 %v1623, 127
        %v1629 = vpop.permute.xlu0 %1628
        %v1632 = vadd.f32 %v1600, %v1627
        %v1633 = vadd.f32 %v1601, %v1629
        %s1634 = sld [smem:[#allocation4 + $0x40]]
        %v1635 = vstv %s1634
        %v1636 = vmul.f32 %v1594, %v1635
        %v1637 = vmul.f32 %v1595, %v1635
        %1640 = vrot.lane.b32.xlu0 %v1636, 127
        %v1641 = vpop.permute.xlu0 %1640
        %1642 = vrot.lane.b32.xlu0 %v1637, 127
        %v1643 = vpop.permute.xlu0 %1642
        %v1646 = vadd.f32 %v1606, %v1641
        %v1647 = vadd.f32 %v1607, %v1643
        %s1648 = sld [smem:[#allocation4 + $0x64]]
        %v1649 = vstv %s1648
        %v1650 = vmul.f32 %v1594, %v1649
        %v1651 = vmul.f32 %v1595, %v1649
        %1654 = vrot.lane.b32.xlu0 %v1650, 127
        %v1655 = vpop.permute.xlu0 %1654
        %1656 = vrot.lane.b32.xlu0 %v1651, 127
        %v1657 = vpop.permute.xlu0 %1656
        %v1660 = vadd.f32 %v1612, %v1655
        %v1661 = vadd.f32 %v1613, %v1657
        %s1662 = sld [smem:[#allocation4 + $0x88]]
        %v1663 = vstv %s1662
        %v1664 = vmul.f32 %v1594, %v1663
        %v1665 = vmul.f32 %v1595, %v1663
        %1668 = vrot.lane.b32.xlu0 %v1664, 127
        %v1669 = vpop.permute.xlu0 %1668
        %1670 = vrot.lane.b32.xlu0 %v1665, 127
        %v1671 = vpop.permute.xlu0 %1670
        %v1674 = vadd.f32 %v1618, %v1669
        %v1675 = vadd.f32 %v1619, %v1671
        %s1676 = sld [smem:[#allocation4 + $0x1d]]
        %v1677 = vstv %s1676
        %v1678 = vmul.f32 %v1594, %v1677
        %v1679 = vmul.f32 %v1595, %v1677
        %1682 = vrot.lane.b32.xlu0 %v1678, 126
        %v1683 = vpop.permute.xlu0 %1682
        %1684 = vrot.lane.b32.xlu0 %v1679, 126
        %v1685 = vpop.permute.xlu0 %1684
        %v1688 = vadd.f32 %v1632, %v1683
        %v1689 = vadd.f32 %v1633, %v1685
        %s1690 = sld [smem:[#allocation4 + $0x41]]
        %v1691 = vstv %s1690
        %v1692 = vmul.f32 %v1594, %v1691
        %v1693 = vmul.f32 %v1595, %v1691
        %1696 = vrot.lane.b32.xlu0 %v1692, 126
        %v1697 = vpop.permute.xlu0 %1696
        %1698 = vrot.lane.b32.xlu0 %v1693, 126
        %v1699 = vpop.permute.xlu0 %1698
        %v1702 = vadd.f32 %v1646, %v1697
        %v1703 = vadd.f32 %v1647, %v1699
        %s1704 = sld [smem:[#allocation4 + $0x65]]
        %v1705 = vstv %s1704
        %v1706 = vmul.f32 %v1594, %v1705
        %v1707 = vmul.f32 %v1595, %v1705
        %1710 = vrot.lane.b32.xlu0 %v1706, 126
        %v1711 = vpop.permute.xlu0 %1710
        %1712 = vrot.lane.b32.xlu0 %v1707, 126
        %v1713 = vpop.permute.xlu0 %1712
        %v1716 = vadd.f32 %v1660, %v1711
        %v1717 = vadd.f32 %v1661, %v1713
        %s1718 = sld [smem:[#allocation4 + $0x89]]
        %v1719 = vstv %s1718
        %v1720 = vmul.f32 %v1594, %v1719
        %v1721 = vmul.f32 %v1595, %v1719
        %1724 = vrot.lane.b32.xlu0 %v1720, 126
        %v1725 = vpop.permute.xlu0 %1724
        %1726 = vrot.lane.b32.xlu0 %v1721, 126
        %v1727 = vpop.permute.xlu0 %1726
        %v1730 = vadd.f32 %v1674, %v1725
        %v1731 = vadd.f32 %v1675, %v1727
        %v1732 = vld [vmem:[%s341 + $0x1] sm:$0xff]
        %v1733 = vld [vmem:[%s341 + $0x9] sm:$0xff]
        %s1734 = sld [smem:[#allocation4 + $0x1e]]
        %v1735 = vstv %s1734
        %v1736 = vmul.f32 %v1732, %v1735
        %v1737 = vmul.f32 %v1733, %v1735
        %v1738 = vadd.f32 %v1688, %v1736
        %v1739 = vadd.f32 %v1689, %v1737
        %s1740 = sld [smem:[#allocation4 + $0x42]]
        %v1741 = vstv %s1740
        %v1742 = vmul.f32 %v1732, %v1741
        %v1743 = vmul.f32 %v1733, %v1741
        %v1744 = vadd.f32 %v1702, %v1742
        %v1745 = vadd.f32 %v1703, %v1743
        %s1746 = sld [smem:[#allocation4 + $0x66]]
        %v1747 = vstv %s1746
        %v1748 = vmul.f32 %v1732, %v1747
        %v1749 = vmul.f32 %v1733, %v1747
        %v1750 = vadd.f32 %v1716, %v1748
        %v1751 = vadd.f32 %v1717, %v1749
        %s1752 = sld [smem:[#allocation4 + $0x8a]]
        %v1753 = vstv %s1752
        %v1754 = vmul.f32 %v1732, %v1753
        %v1755 = vmul.f32 %v1733, %v1753
        %v1756 = vadd.f32 %v1730, %v1754
        %v1757 = vadd.f32 %v1731, %v1755
        %s1758 = sld [smem:[#allocation4 + $0x1f]]
        %v1759 = vstv %s1758
        %v1760 = vmul.f32 %v1732, %v1759
        %v1761 = vmul.f32 %v1733, %v1759
        %1764 = vrot.lane.b32.xlu0 %v1760, 127
        %v1765 = vpop.permute.xlu0 %1764
        %1766 = vrot.lane.b32.xlu0 %v1761, 127
        %v1767 = vpop.permute.xlu0 %1766
        %v1770 = vadd.f32 %v1738, %v1765
        %v1771 = vadd.f32 %v1739, %v1767
        %s1772 = sld [smem:[#allocation4 + $0x43]]
        %v1773 = vstv %s1772
        %v1774 = vmul.f32 %v1732, %v1773
        %v1775 = vmul.f32 %v1733, %v1773
        %1778 = vrot.lane.b32.xlu0 %v1774, 127
        %v1779 = vpop.permute.xlu0 %1778
        %1780 = vrot.lane.b32.xlu0 %v1775, 127
        %v1781 = vpop.permute.xlu0 %1780
        %v1784 = vadd.f32 %v1744, %v1779
        %v1785 = vadd.f32 %v1745, %v1781
        %s1786 = sld [smem:[#allocation4 + $0x67]]
        %v1787 = vstv %s1786
        %v1788 = vmul.f32 %v1732, %v1787
        %v1789 = vmul.f32 %v1733, %v1787
        %1792 = vrot.lane.b32.xlu0 %v1788, 127
        %v1793 = vpop.permute.xlu0 %1792
        %1794 = vrot.lane.b32.xlu0 %v1789, 127
        %v1795 = vpop.permute.xlu0 %1794
        %v1798 = vadd.f32 %v1750, %v1793
        %v1799 = vadd.f32 %v1751, %v1795
        %s1800 = sld [smem:[#allocation4 + $0x8b]]
        %v1801 = vstv %s1800
        %v1802 = vmul.f32 %v1732, %v1801
        %v1803 = vmul.f32 %v1733, %v1801
        %1806 = vrot.lane.b32.xlu0 %v1802, 127
        %v1807 = vpop.permute.xlu0 %1806
        %1808 = vrot.lane.b32.xlu0 %v1803, 127
        %v1809 = vpop.permute.xlu0 %1808
        %v1812 = vadd.f32 %v1756, %v1807
        %v1813 = vadd.f32 %v1757, %v1809
        %s1814 = sld [smem:[#allocation4 + $0x20]]
        %v1815 = vstv %s1814
        %v1816 = vmul.f32 %v1732, %v1815
        %v1817 = vmul.f32 %v1733, %v1815
        %1820 = vrot.lane.b32.xlu0 %v1816, 126
        %v1821 = vpop.permute.xlu0 %1820
        %1822 = vrot.lane.b32.xlu0 %v1817, 126
        %v1823 = vpop.permute.xlu0 %1822
        %v1826 = vadd.f32 %v1770, %v1821
        %v1827 = vadd.f32 %v1771, %v1823
        %s1828 = sld [smem:[#allocation4 + $0x44]]
        %v1829 = vstv %s1828
        %v1830 = vmul.f32 %v1732, %v1829
        %v1831 = vmul.f32 %v1733, %v1829
        %1834 = vrot.lane.b32.xlu0 %v1830, 126
        %v1835 = vpop.permute.xlu0 %1834
        %1836 = vrot.lane.b32.xlu0 %v1831, 126
        %v1837 = vpop.permute.xlu0 %1836
        %v1840 = vadd.f32 %v1784, %v1835
        %v1841 = vadd.f32 %v1785, %v1837
        %s1842 = sld [smem:[#allocation4 + $0x68]]
        %v1843 = vstv %s1842
        %v1844 = vmul.f32 %v1732, %v1843
        %v1845 = vmul.f32 %v1733, %v1843
        %1848 = vrot.lane.b32.xlu0 %v1844, 126
        %v1849 = vpop.permute.xlu0 %1848
        %1850 = vrot.lane.b32.xlu0 %v1845, 126
        %v1851 = vpop.permute.xlu0 %1850
        %v1854 = vadd.f32 %v1798, %v1849
        %v1855 = vadd.f32 %v1799, %v1851
        %s1856 = sld [smem:[#allocation4 + $0x8c]]
        %v1857 = vstv %s1856
        %v1858 = vmul.f32 %v1732, %v1857
        %v1859 = vmul.f32 %v1733, %v1857
        %1862 = vrot.lane.b32.xlu0 %v1858, 126
        %v1863 = vpop.permute.xlu0 %1862
        %1864 = vrot.lane.b32.xlu0 %v1859, 126
        %v1865 = vpop.permute.xlu0 %1864
        %v1868 = vadd.f32 %v1812, %v1863
        %v1869 = vadd.f32 %v1813, %v1865
        %v1870 = vld [vmem:[%s341 + $0x2] sm:$0xff]
        %v1871 = vld [vmem:[%s341 + $0xa] sm:$0xff]
        %s1872 = sld [smem:[#allocation4 + $0x21]]
        %v1873 = vstv %s1872
        %v1874 = vmul.f32 %v1870, %v1873
        %v1875 = vmul.f32 %v1871, %v1873
        %v1876 = vadd.f32 %v1826, %v1874
        %v1877 = vadd.f32 %v1827, %v1875
        %s1878 = sld [smem:[#allocation4 + $0x45]]
        %v1879 = vstv %s1878
        %v1880 = vmul.f32 %v1870, %v1879
        %v1881 = vmul.f32 %v1871, %v1879
        %v1882 = vadd.f32 %v1840, %v1880
        %v1883 = vadd.f32 %v1841, %v1881
        %s1884 = sld [smem:[#allocation4 + $0x69]]
        %v1885 = vstv %s1884
        %v1886 = vmul.f32 %v1870, %v1885
        %v1887 = vmul.f32 %v1871, %v1885
        %v1888 = vadd.f32 %v1854, %v1886
        %v1889 = vadd.f32 %v1855, %v1887
        %s1890 = sld [smem:[#allocation4 + $0x8d]]
        %v1891 = vstv %s1890
        %v1892 = vmul.f32 %v1870, %v1891
        %v1893 = vmul.f32 %v1871, %v1891
        %v1894 = vadd.f32 %v1868, %v1892
        %v1895 = vadd.f32 %v1869, %v1893
        %s1896 = sld [smem:[#allocation4 + $0x22]]
        %v1897 = vstv %s1896
        %v1898 = vmul.f32 %v1870, %v1897
        %v1899 = vmul.f32 %v1871, %v1897
        %1902 = vrot.lane.b32.xlu0 %v1898, 127
        %v1903 = vpop.permute.xlu0 %1902
        %1904 = vrot.lane.b32.xlu0 %v1899, 127
        %v1905 = vpop.permute.xlu0 %1904
        %v1908 = vadd.f32 %v1876, %v1903
        %v1909 = vadd.f32 %v1877, %v1905
        %s1910 = sld [smem:[#allocation4 + $0x46]]
        %v1911 = vstv %s1910
        %v1912 = vmul.f32 %v1870, %v1911
        %v1913 = vmul.f32 %v1871, %v1911
        %1916 = vrot.lane.b32.xlu0 %v1912, 127
        %v1917 = vpop.permute.xlu0 %1916
        %1918 = vrot.lane.b32.xlu0 %v1913, 127
        %v1919 = vpop.permute.xlu0 %1918
        %v1922 = vadd.f32 %v1882, %v1917
        %v1923 = vadd.f32 %v1883, %v1919
        %s1924 = sld [smem:[#allocation4 + $0x6a]]
        %v1925 = vstv %s1924
        %v1926 = vmul.f32 %v1870, %v1925
        %v1927 = vmul.f32 %v1871, %v1925
        %1930 = vrot.lane.b32.xlu0 %v1926, 127
        %v1931 = vpop.permute.xlu0 %1930
        %1932 = vrot.lane.b32.xlu0 %v1927, 127
        %v1933 = vpop.permute.xlu0 %1932
        %v1936 = vadd.f32 %v1888, %v1931
        %v1937 = vadd.f32 %v1889, %v1933
        %s1938 = sld [smem:[#allocation4 + $0x8e]]
        %v1939 = vstv %s1938
        %v1940 = vmul.f32 %v1870, %v1939
        %v1941 = vmul.f32 %v1871, %v1939
        %1944 = vrot.lane.b32.xlu0 %v1940, 127
        %v1945 = vpop.permute.xlu0 %1944
        %1946 = vrot.lane.b32.xlu0 %v1941, 127
        %v1947 = vpop.permute.xlu0 %1946
        %v1950 = vadd.f32 %v1894, %v1945
        %v1951 = vadd.f32 %v1895, %v1947
        %s1952 = sld [smem:[#allocation4 + $0x23]]
        %v1953 = vstv %s1952
        %v1954 = vmul.f32 %v1870, %v1953
        %v1955 = vmul.f32 %v1871, %v1953
        %1958 = vrot.lane.b32.xlu0 %v1954, 126
        %v1959 = vpop.permute.xlu0 %1958
        %1960 = vrot.lane.b32.xlu0 %v1955, 126
        %v1961 = vpop.permute.xlu0 %1960
        %v1964 = vadd.f32 %v1908, %v1959
        %v1965 = vadd.f32 %v1909, %v1961
        %s1966 = sld [smem:[#allocation4 + $0x47]]
        %v1967 = vstv %s1966
        %v1968 = vmul.f32 %v1870, %v1967
        %v1969 = vmul.f32 %v1871, %v1967
        %1972 = vrot.lane.b32.xlu0 %v1968, 126
        %v1973 = vpop.permute.xlu0 %1972
        %1974 = vrot.lane.b32.xlu0 %v1969, 126
        %v1975 = vpop.permute.xlu0 %1974
        %v1978 = vadd.f32 %v1922, %v1973
        %v1979 = vadd.f32 %v1923, %v1975
        %s1980 = sld [smem:[#allocation4 + $0x6b]]
        %v1981 = vstv %s1980
        %v1982 = vmul.f32 %v1870, %v1981
        %v1983 = vmul.f32 %v1871, %v1981
        %1986 = vrot.lane.b32.xlu0 %v1982, 126
        %v1987 = vpop.permute.xlu0 %1986
        %1988 = vrot.lane.b32.xlu0 %v1983, 126
        %v1989 = vpop.permute.xlu0 %1988
        %v1992 = vadd.f32 %v1936, %v1987
        %v1993 = vadd.f32 %v1937, %v1989
        %s1994 = sld [smem:[#allocation4 + $0x8f]]
        %v1995 = vstv %s1994
        %v1996 = vmul.f32 %v1870, %v1995
        %v1997 = vmul.f32 %v1871, %v1995
        %2000 = vrot.lane.b32.xlu0 %v1996, 126
        %v2001 = vpop.permute.xlu0 %2000
        %2002 = vrot.lane.b32.xlu0 %v1997, 126
        %v2003 = vpop.permute.xlu0 %2002
        %v2006 = vadd.f32 %v1950, %v2001
        %v2007 = vadd.f32 %v1951, %v2003
        %v2008 = vmax.f32 %v1964, 0.0
        %v2009 = vmax.f32 %v1965, 0.0
        %v2010 = vmax.f32 %v1978, 0.0
        %v2011 = vmax.f32 %v1979, 0.0
        %v2012 = vmax.f32 %v1992, 0.0
        %v2013 = vmax.f32 %v1993, 0.0
        %v2014 = vmax.f32 %v2006, 0.0
        %v2015 = vmax.f32 %v2007, 0.0
        %2016 = vst.msk [vmem:[#allocation3] sm:$0xff] %vm275, 0.0
        %2017 = vst.msk [vmem:[#allocation3 + $0x8] sm:$0xff] %vm275, 0.0
        %2018 = vst.msk [vmem:[#allocation3 + $0x10] sm:$0x3] %vm278, 0.0
        %2019 = vst.msk [vmem:[#allocation3 + $0x18] sm:$0xff] %vm275, 0.0
        %2020 = vst.msk [vmem:[#allocation3 + $0x20] sm:$0xff] %vm275, 0.0
        %2021 = vst.msk [vmem:[#allocation3 + $0x28] sm:$0x3] %vm278, 0.0
        %2022 = vst.msk [vmem:[#allocation3 + $0x30] sm:$0xff] %vm275, 0.0
        %2023 = vst.msk [vmem:[#allocation3 + $0x38] sm:$0xff] %vm275, 0.0
        %2024 = vst.msk [vmem:[#allocation3 + $0x40] sm:$0x3] %vm278, 0.0
        %2025 = vst.msk [vmem:[#allocation3 + $0x48] sm:$0xff] %vm275, 0.0
        %2026 = vst.msk [vmem:[#allocation3 + $0x50] sm:$0xff] %vm275, 0.0
        %2027 = vst.msk [vmem:[#allocation3 + $0x58] sm:$0x3] %vm278, 0.0
        %2030 = vrot.lane.b32.xlu0 %v2008, 1
        %v2031 = vpop.permute.xlu0 %2030
        %2032 = vrot.lane.b32.xlu0 %v2009, 1
        %v2033 = vpop.permute.xlu0 %2032
        %2036 = vst.msk [vmem:[#allocation3 + $0x1] sm:$0xff] %vm299, %v2031
        %2037 = vst.msk [vmem:[#allocation3 + $0x9] sm:$0xff] %vm299, %v2033
        %2040 = vrot.lane.b32.xlu0 %v2010, 1
        %v2041 = vpop.permute.xlu0 %2040
        %2042 = vrot.lane.b32.xlu0 %v2011, 1
        %v2043 = vpop.permute.xlu0 %2042
        %s2046 = scalar_lea.vmem [#allocation3], 24
        %2047 = vst.msk [vmem:[%s2046 + $0x1] sm:$0xff] %vm299, %v2041
        %2048 = vst.msk [vmem:[%s2046 + $0x9] sm:$0xff] %vm299, %v2043
        %2051 = vrot.lane.b32.xlu0 %v2012, 1
        %v2052 = vpop.permute.xlu0 %2051
        %2053 = vrot.lane.b32.xlu0 %v2013, 1
        %v2054 = vpop.permute.xlu0 %2053
        %s2057 = scalar_lea.vmem [#allocation3], 48
        %2058 = vst.msk [vmem:[%s2057 + $0x1] sm:$0xff] %vm299, %v2052
        %2059 = vst.msk [vmem:[%s2057 + $0x9] sm:$0xff] %vm299, %v2054
        %2062 = vrot.lane.b32.xlu0 %v2014, 1
        %v2063 = vpop.permute.xlu0 %2062
        %2064 = vrot.lane.b32.xlu0 %v2015, 1
        %v2065 = vpop.permute.xlu0 %2064
        %s2068 = scalar_lea.vmem [#allocation3], 72
        %2069 = vst.msk [vmem:[%s2068 + $0x1] sm:$0xff] %vm299, %v2063
        %2070 = vst.msk [vmem:[%s2068 + $0x9] sm:$0xff] %vm299, %v2065
        %s2071 = sld [smem:[#allocation10]]
        %v2072 = vstv %s2071
        %s2073 = sld [smem:[#allocation10 + $0x1]]
        %v2074 = vstv %s2073
        %s2075 = sld [smem:[#allocation10 + $0x2]]
        %v2076 = vstv %s2075
        %s2077 = sld [smem:[#allocation10 + $0x3]]
        %v2078 = vstv %s2077
        %v2079 = vld [vmem:[#allocation3] sm:$0xff]
        %v2080 = vld [vmem:[#allocation3 + $0x8] sm:$0xff]
        %s2081 = sld [smem:[#allocation9]]
        %v2082 = vstv %s2081
        %v2083 = vmul.f32 %v2079, %v2082
        %v2084 = vmul.f32 %v2080, %v2082
        %v2085 = vadd.f32 %v2072, %v2083
        %v2086 = vadd.f32 %v2072, %v2084
        %s2087 = sld [smem:[#allocation9 + $0x24]]
        %v2088 = vstv %s2087
        %v2089 = vmul.f32 %v2079, %v2088
        %v2090 = vmul.f32 %v2080, %v2088
        %v2091 = vadd.f32 %v2074, %v2089
        %v2092 = vadd.f32 %v2074, %v2090
        %s2093 = sld [smem:[#allocation9 + $0x48]]
        %v2094 = vstv %s2093
        %v2095 = vmul.f32 %v2079, %v2094
        %v2096 = vmul.f32 %v2080, %v2094
        %v2097 = vadd.f32 %v2076, %v2095
        %v2098 = vadd.f32 %v2076, %v2096
        %s2099 = sld [smem:[#allocation9 + $0x6c]]
        %v2100 = vstv %s2099
        %v2101 = vmul.f32 %v2079, %v2100
        %v2102 = vmul.f32 %v2080, %v2100
        %v2103 = vadd.f32 %v2078, %v2101
        %v2104 = vadd.f32 %v2078, %v2102
        %s2105 = sld [smem:[#allocation9 + $0x1]]
        %v2106 = vstv %s2105
        %v2107 = vmul.f32 %v2079, %v2106
        %v2108 = vmul.f32 %v2080, %v2106
        %2111 = vrot.lane.b32.xlu0 %v2107, 127
        %v2112 = vpop.permute.xlu0 %2111
        %2113 = vrot.lane.b32.xlu0 %v2108, 127
        %v2114 = vpop.permute.xlu0 %2113
        %v2117 = vadd.f32 %v2085, %v2112
        %v2118 = vadd.f32 %v2086, %v2114
        %s2119 = sld [smem:[#allocation9 + $0x25]]
        %v2120 = vstv %s2119
        %v2121 = vmul.f32 %v2079, %v2120
        %v2122 = vmul.f32 %v2080, %v2120
        %2125 = vrot.lane.b32.xlu0 %v2121, 127
        %v2126 = vpop.permute.xlu0 %2125
        %2127 = vrot.lane.b32.xlu0 %v2122, 127
        %v2128 = vpop.permute.xlu0 %2127
        %v2131 = vadd.f32 %v2091, %v2126
        %v2132 = vadd.f32 %v2092, %v2128
        %s2133 = sld [smem:[#allocation9 + $0x49]]
        %v2134 = vstv %s2133
        %v2135 = vmul.f32 %v2079, %v2134
        %v2136 = vmul.f32 %v2080, %v2134
        %2139 = vrot.lane.b32.xlu0 %v2135, 127
        %v2140 = vpop.permute.xlu0 %2139
        %2141 = vrot.lane.b32.xlu0 %v2136, 127
        %v2142 = vpop.permute.xlu0 %2141
        %v2145 = vadd.f32 %v2097, %v2140
        %v2146 = vadd.f32 %v2098, %v2142
        %s2147 = sld [smem:[#allocation9 + $0x6d]]
        %v2148 = vstv %s2147
        %v2149 = vmul.f32 %v2079, %v2148
        %v2150 = vmul.f32 %v2080, %v2148
        %2153 = vrot.lane.b32.xlu0 %v2149, 127
        %v2154 = vpop.permute.xlu0 %2153
        %2155 = vrot.lane.b32.xlu0 %v2150, 127
        %v2156 = vpop.permute.xlu0 %2155
        %v2159 = vadd.f32 %v2103, %v2154
        %v2160 = vadd.f32 %v2104, %v2156
        %s2161 = sld [smem:[#allocation9 + $0x2]]
        %v2162 = vstv %s2161
        %v2163 = vmul.f32 %v2079, %v2162
        %v2164 = vmul.f32 %v2080, %v2162
        %2167 = vrot.lane.b32.xlu0 %v2163, 126
        %v2168 = vpop.permute.xlu0 %2167
        %2169 = vrot.lane.b32.xlu0 %v2164, 126
        %v2170 = vpop.permute.xlu0 %2169
        %v2173 = vadd.f32 %v2117, %v2168
        %v2174 = vadd.f32 %v2118, %v2170
        %s2175 = sld [smem:[#allocation9 + $0x26]]
        %v2176 = vstv %s2175
        %v2177 = vmul.f32 %v2079, %v2176
        %v2178 = vmul.f32 %v2080, %v2176
        %2181 = vrot.lane.b32.xlu0 %v2177, 126
        %v2182 = vpop.permute.xlu0 %2181
        %2183 = vrot.lane.b32.xlu0 %v2178, 126
        %v2184 = vpop.permute.xlu0 %2183
        %v2187 = vadd.f32 %v2131, %v2182
        %v2188 = vadd.f32 %v2132, %v2184
        %s2189 = sld [smem:[#allocation9 + $0x4a]]
        %v2190 = vstv %s2189
        %v2191 = vmul.f32 %v2079, %v2190
        %v2192 = vmul.f32 %v2080, %v2190
        %2195 = vrot.lane.b32.xlu0 %v2191, 126
        %v2196 = vpop.permute.xlu0 %2195
        %2197 = vrot.lane.b32.xlu0 %v2192, 126
        %v2198 = vpop.permute.xlu0 %2197
        %v2201 = vadd.f32 %v2145, %v2196
        %v2202 = vadd.f32 %v2146, %v2198
        %s2203 = sld [smem:[#allocation9 + $0x6e]]
        %v2204 = vstv %s2203
        %v2205 = vmul.f32 %v2079, %v2204
        %v2206 = vmul.f32 %v2080, %v2204
        %2209 = vrot.lane.b32.xlu0 %v2205, 126
        %v2210 = vpop.permute.xlu0 %2209
        %2211 = vrot.lane.b32.xlu0 %v2206, 126
        %v2212 = vpop.permute.xlu0 %2211
        %v2215 = vadd.f32 %v2159, %v2210
        %v2216 = vadd.f32 %v2160, %v2212
        %v2217 = vld [vmem:[#allocation3 + $0x1] sm:$0xff]
        %v2218 = vld [vmem:[#allocation3 + $0x9] sm:$0xff]
        %s2219 = sld [smem:[#allocation9 + $0x3]]
        %v2220 = vstv %s2219
        %v2221 = vmul.f32 %v2217, %v2220
        %v2222 = vmul.f32 %v2218, %v2220
        %v2223 = vadd.f32 %v2173, %v2221
        %v2224 = vadd.f32 %v2174, %v2222
        %s2225 = sld [smem:[#allocation9 + $0x27]]
        %v2226 = vstv %s2225
        %v2227 = vmul.f32 %v2217, %v2226
        %v2228 = vmul.f32 %v2218, %v2226
        %v2229 = vadd.f32 %v2187, %v2227
        %v2230 = vadd.f32 %v2188, %v2228
        %s2231 = sld [smem:[#allocation9 + $0x4b]]
        %v2232 = vstv %s2231
        %v2233 = vmul.f32 %v2217, %v2232
        %v2234 = vmul.f32 %v2218, %v2232
        %v2235 = vadd.f32 %v2201, %v2233
        %v2236 = vadd.f32 %v2202, %v2234
        %s2237 = sld [smem:[#allocation9 + $0x6f]]
        %v2238 = vstv %s2237
        %v2239 = vmul.f32 %v2217, %v2238
        %v2240 = vmul.f32 %v2218, %v2238
        %v2241 = vadd.f32 %v2215, %v2239
        %v2242 = vadd.f32 %v2216, %v2240
        %s2243 = sld [smem:[#allocation9 + $0x4]]
        %v2244 = vstv %s2243
        %v2245 = vmul.f32 %v2217, %v2244
        %v2246 = vmul.f32 %v2218, %v2244
        %2249 = vrot.lane.b32.xlu0 %v2245, 127
        %v2250 = vpop.permute.xlu0 %2249
        %2251 = vrot.lane.b32.xlu0 %v2246, 127
        %v2252 = vpop.permute.xlu0 %2251
        %v2255 = vadd.f32 %v2223, %v2250
        %v2256 = vadd.f32 %v2224, %v2252
        %s2257 = sld [smem:[#allocation9 + $0x28]]
        %v2258 = vstv %s2257
        %v2259 = vmul.f32 %v2217, %v2258
        %v2260 = vmul.f32 %v2218, %v2258
        %2263 = vrot.lane.b32.xlu0 %v2259, 127
        %v2264 = vpop.permute.xlu0 %2263
        %2265 = vrot.lane.b32.xlu0 %v2260, 127
        %v2266 = vpop.permute.xlu0 %2265
        %v2269 = vadd.f32 %v2229, %v2264
        %v2270 = vadd.f32 %v2230, %v2266
        %s2271 = sld [smem:[#allocation9 + $0x4c]]
        %v2272 = vstv %s2271
        %v2273 = vmul.f32 %v2217, %v2272
        %v2274 = vmul.f32 %v2218, %v2272
        %2277 = vrot.lane.b32.xlu0 %v2273, 127
        %v2278 = vpop.permute.xlu0 %2277
        %2279 = vrot.lane.b32.xlu0 %v2274, 127
        %v2280 = vpop.permute.xlu0 %2279
        %v2283 = vadd.f32 %v2235, %v2278
        %v2284 = vadd.f32 %v2236, %v2280
        %s2285 = sld [smem:[#allocation9 + $0x70]]
        %v2286 = vstv %s2285
        %v2287 = vmul.f32 %v2217, %v2286
        %v2288 = vmul.f32 %v2218, %v2286
        %2291 = vrot.lane.b32.xlu0 %v2287, 127
        %v2292 = vpop.permute.xlu0 %2291
        %2293 = vrot.lane.b32.xlu0 %v2288, 127
        %v2294 = vpop.permute.xlu0 %2293
        %v2297 = vadd.f32 %v2241, %v2292
        %v2298 = vadd.f32 %v2242, %v2294
        %s2299 = sld [smem:[#allocation9 + $0x5]]
        %v2300 = vstv %s2299
        %v2301 = vmul.f32 %v2217, %v2300
        %v2302 = vmul.f32 %v2218, %v2300
        %2305 = vrot.lane.b32.xlu0 %v2301, 126
        %v2306 = vpop.permute.xlu0 %2305
        %2307 = vrot.lane.b32.xlu0 %v2302, 126
        %v2308 = vpop.permute.xlu0 %2307
        %v2311 = vadd.f32 %v2255, %v2306
        %v2312 = vadd.f32 %v2256, %v2308
        %s2313 = sld [smem:[#allocation9 + $0x29]]
        %v2314 = vstv %s2313
        %v2315 = vmul.f32 %v2217, %v2314
        %v2316 = vmul.f32 %v2218, %v2314
        %2319 = vrot.lane.b32.xlu0 %v2315, 126
        %v2320 = vpop.permute.xlu0 %2319
        %2321 = vrot.lane.b32.xlu0 %v2316, 126
        %v2322 = vpop.permute.xlu0 %2321
        %v2325 = vadd.f32 %v2269, %v2320
        %v2326 = vadd.f32 %v2270, %v2322
        %s2327 = sld [smem:[#allocation9 + $0x4d]]
        %v2328 = vstv %s2327
        %v2329 = vmul.f32 %v2217, %v2328
        %v2330 = vmul.f32 %v2218, %v2328
        %2333 = vrot.lane.b32.xlu0 %v2329, 126
        %v2334 = vpop.permute.xlu0 %2333
        %2335 = vrot.lane.b32.xlu0 %v2330, 126
        %v2336 = vpop.permute.xlu0 %2335
        %v2339 = vadd.f32 %v2283, %v2334
        %v2340 = vadd.f32 %v2284, %v2336
        %s2341 = sld [smem:[#allocation9 + $0x71]]
        %v2342 = vstv %s2341
        %v2343 = vmul.f32 %v2217, %v2342
        %v2344 = vmul.f32 %v2218, %v2342
        %2347 = vrot.lane.b32.xlu0 %v2343, 126
        %v2348 = vpop.permute.xlu0 %2347
        %2349 = vrot.lane.b32.xlu0 %v2344, 126
        %v2350 = vpop.permute.xlu0 %2349
        %v2353 = vadd.f32 %v2297, %v2348
        %v2354 = vadd.f32 %v2298, %v2350
        %v2355 = vld [vmem:[#allocation3 + $0x2] sm:$0xff]
        %v2356 = vld [vmem:[#allocation3 + $0xa] sm:$0xff]
        %s2357 = sld [smem:[#allocation9 + $0x6]]
        %v2358 = vstv %s2357
        %v2359 = vmul.f32 %v2355, %v2358
        %v2360 = vmul.f32 %v2356, %v2358
        %v2361 = vadd.f32 %v2311, %v2359
        %v2362 = vadd.f32 %v2312, %v2360
        %s2363 = sld [smem:[#allocation9 + $0x2a]]
        %v2364 = vstv %s2363
        %v2365 = vmul.f32 %v2355, %v2364
        %v2366 = vmul.f32 %v2356, %v2364
        %v2367 = vadd.f32 %v2325, %v2365
        %v2368 = vadd.f32 %v2326, %v2366
        %s2369 = sld [smem:[#allocation9 + $0x4e]]
        %v2370 = vstv %s2369
        %v2371 = vmul.f32 %v2355, %v2370
        %v2372 = vmul.f32 %v2356, %v2370
        %v2373 = vadd.f32 %v2339, %v2371
        %v2374 = vadd.f32 %v2340, %v2372
        %s2375 = sld [smem:[#allocation9 + $0x72]]
        %v2376 = vstv %s2375
        %v2377 = vmul.f32 %v2355, %v2376
        %v2378 = vmul.f32 %v2356, %v2376
        %v2379 = vadd.f32 %v2353, %v2377
        %v2380 = vadd.f32 %v2354, %v2378
        %s2381 = sld [smem:[#allocation9 + $0x7]]
        %v2382 = vstv %s2381
        %v2383 = vmul.f32 %v2355, %v2382
        %v2384 = vmul.f32 %v2356, %v2382
        %2387 = vrot.lane.b32.xlu0 %v2383, 127
        %v2388 = vpop.permute.xlu0 %2387
        %2389 = vrot.lane.b32.xlu0 %v2384, 127
        %v2390 = vpop.permute.xlu0 %2389
        %v2393 = vadd.f32 %v2361, %v2388
        %v2394 = vadd.f32 %v2362, %v2390
        %s2395 = sld [smem:[#allocation9 + $0x2b]]
        %v2396 = vstv %s2395
        %v2397 = vmul.f32 %v2355, %v2396
        %v2398 = vmul.f32 %v2356, %v2396
        %2401 = vrot.lane.b32.xlu0 %v2397, 127
        %v2402 = vpop.permute.xlu0 %2401
        %2403 = vrot.lane.b32.xlu0 %v2398, 127
        %v2404 = vpop.permute.xlu0 %2403
        %v2407 = vadd.f32 %v2367, %v2402
        %v2408 = vadd.f32 %v2368, %v2404
        %s2409 = sld [smem:[#allocation9 + $0x4f]]
        %v2410 = vstv %s2409
        %v2411 = vmul.f32 %v2355, %v2410
        %v2412 = vmul.f32 %v2356, %v2410
        %2415 = vrot.lane.b32.xlu0 %v2411, 127
        %v2416 = vpop.permute.xlu0 %2415
        %2417 = vrot.lane.b32.xlu0 %v2412, 127
        %v2418 = vpop.permute.xlu0 %2417
        %v2421 = vadd.f32 %v2373, %v2416
        %v2422 = vadd.f32 %v2374, %v2418
        %s2423 = sld [smem:[#allocation9 + $0x73]]
        %v2424 = vstv %s2423
        %v2425 = vmul.f32 %v2355, %v2424
        %v2426 = vmul.f32 %v2356, %v2424
        %2429 = vrot.lane.b32.xlu0 %v2425, 127
        %v2430 = vpop.permute.xlu0 %2429
        %2431 = vrot.lane.b32.xlu0 %v2426, 127
        %v2432 = vpop.permute.xlu0 %2431
        %v2435 = vadd.f32 %v2379, %v2430
        %v2436 = vadd.f32 %v2380, %v2432
        %s2437 = sld [smem:[#allocation9 + $0x8]]
        %v2438 = vstv %s2437
        %v2439 = vmul.f32 %v2355, %v2438
        %v2440 = vmul.f32 %v2356, %v2438
        %2443 = vrot.lane.b32.xlu0 %v2439, 126
        %v2444 = vpop.permute.xlu0 %2443
        %2445 = vrot.lane.b32.xlu0 %v2440, 126
        %v2446 = vpop.permute.xlu0 %2445
        %v2449 = vadd.f32 %v2393, %v2444
        %v2450 = vadd.f32 %v2394, %v2446
        %s2451 = sld [smem:[#allocation9 + $0x2c]]
        %v2452 = vstv %s2451
        %v2453 = vmul.f32 %v2355, %v2452
        %v2454 = vmul.f32 %v2356, %v2452
        %2457 = vrot.lane.b32.xlu0 %v2453, 126
        %v2458 = vpop.permute.xlu0 %2457
        %2459 = vrot.lane.b32.xlu0 %v2454, 126
        %v2460 = vpop.permute.xlu0 %2459
        %v2463 = vadd.f32 %v2407, %v2458
        %v2464 = vadd.f32 %v2408, %v2460
        %s2465 = sld [smem:[#allocation9 + $0x50]]
        %v2466 = vstv %s2465
        %v2467 = vmul.f32 %v2355, %v2466
        %v2468 = vmul.f32 %v2356, %v2466
        %2471 = vrot.lane.b32.xlu0 %v2467, 126
        %v2472 = vpop.permute.xlu0 %2471
        %2473 = vrot.lane.b32.xlu0 %v2468, 126
        %v2474 = vpop.permute.xlu0 %2473
        %v2477 = vadd.f32 %v2421, %v2472
        %v2478 = vadd.f32 %v2422, %v2474
        %s2479 = sld [smem:[#allocation9 + $0x74]]
        %v2480 = vstv %s2479
        %v2481 = vmul.f32 %v2355, %v2480
        %v2482 = vmul.f32 %v2356, %v2480
        %2485 = vrot.lane.b32.xlu0 %v2481, 126
        %v2486 = vpop.permute.xlu0 %2485
        %2487 = vrot.lane.b32.xlu0 %v2482, 126
        %v2488 = vpop.permute.xlu0 %2487
        %v2491 = vadd.f32 %v2435, %v2486
        %v2492 = vadd.f32 %v2436, %v2488
        %v2493 = vld [vmem:[%s2046] sm:$0xff]
        %v2494 = vld [vmem:[%s2046 + $0x8] sm:$0xff]
        %s2495 = sld [smem:[#allocation9 + $0x9]]
        %v2496 = vstv %s2495
        %v2497 = vmul.f32 %v2493, %v2496
        %v2498 = vmul.f32 %v2494, %v2496
        %v2499 = vadd.f32 %v2449, %v2497
        %v2500 = vadd.f32 %v2450, %v2498
        %s2501 = sld [smem:[#allocation9 + $0x2d]]
        %v2502 = vstv %s2501
        %v2503 = vmul.f32 %v2493, %v2502
        %v2504 = vmul.f32 %v2494, %v2502
        %v2505 = vadd.f32 %v2463, %v2503
        %v2506 = vadd.f32 %v2464, %v2504
        %s2507 = sld [smem:[#allocation9 + $0x51]]
        %v2508 = vstv %s2507
        %v2509 = vmul.f32 %v2493, %v2508
        %v2510 = vmul.f32 %v2494, %v2508
        %v2511 = vadd.f32 %v2477, %v2509
        %v2512 = vadd.f32 %v2478, %v2510
        %s2513 = sld [smem:[#allocation9 + $0x75]]
        %v2514 = vstv %s2513
        %v2515 = vmul.f32 %v2493, %v2514
        %v2516 = vmul.f32 %v2494, %v2514
        %v2517 = vadd.f32 %v2491, %v2515
        %v2518 = vadd.f32 %v2492, %v2516
        %s2519 = sld [smem:[#allocation9 + $0xa]]
        %v2520 = vstv %s2519
        %v2521 = vmul.f32 %v2493, %v2520
        %v2522 = vmul.f32 %v2494, %v2520
        %2525 = vrot.lane.b32.xlu0 %v2521, 127
        %v2526 = vpop.permute.xlu0 %2525
        %2527 = vrot.lane.b32.xlu0 %v2522, 127
        %v2528 = vpop.permute.xlu0 %2527
        %v2531 = vadd.f32 %v2499, %v2526
        %v2532 = vadd.f32 %v2500, %v2528
        %s2533 = sld [smem:[#allocation9 + $0x2e]]
        %v2534 = vstv %s2533
        %v2535 = vmul.f32 %v2493, %v2534
        %v2536 = vmul.f32 %v2494, %v2534
        %2539 = vrot.lane.b32.xlu0 %v2535, 127
        %v2540 = vpop.permute.xlu0 %2539
        %2541 = vrot.lane.b32.xlu0 %v2536, 127
        %v2542 = vpop.permute.xlu0 %2541
        %v2545 = vadd.f32 %v2505, %v2540
        %v2546 = vadd.f32 %v2506, %v2542
        %s2547 = sld [smem:[#allocation9 + $0x52]]
        %v2548 = vstv %s2547
        %v2549 = vmul.f32 %v2493, %v2548
        %v2550 = vmul.f32 %v2494, %v2548
        %2553 = vrot.lane.b32.xlu0 %v2549, 127
        %v2554 = vpop.permute.xlu0 %2553
        %2555 = vrot.lane.b32.xlu0 %v2550, 127
        %v2556 = vpop.permute.xlu0 %2555
        %v2559 = vadd.f32 %v2511, %v2554
        %v2560 = vadd.f32 %v2512, %v2556
        %s2561 = sld [smem:[#allocation9 + $0x76]]
        %v2562 = vstv %s2561
        %v2563 = vmul.f32 %v2493, %v2562
        %v2564 = vmul.f32 %v2494, %v2562
        %2567 = vrot.lane.b32.xlu0 %v2563, 127
        %v2568 = vpop.permute.xlu0 %2567
        %2569 = vrot.lane.b32.xlu0 %v2564, 127
        %v2570 = vpop.permute.xlu0 %2569
        %v2573 = vadd.f32 %v2517, %v2568
        %v2574 = vadd.f32 %v2518, %v2570
        %s2575 = sld [smem:[#allocation9 + $0xb]]
        %v2576 = vstv %s2575
        %v2577 = vmul.f32 %v2493, %v2576
        %v2578 = vmul.f32 %v2494, %v2576
        %2581 = vrot.lane.b32.xlu0 %v2577, 126
        %v2582 = vpop.permute.xlu0 %2581
        %2583 = vrot.lane.b32.xlu0 %v2578, 126
        %v2584 = vpop.permute.xlu0 %2583
        %v2587 = vadd.f32 %v2531, %v2582
        %v2588 = vadd.f32 %v2532, %v2584
        %s2589 = sld [smem:[#allocation9 + $0x2f]]
        %v2590 = vstv %s2589
        %v2591 = vmul.f32 %v2493, %v2590
        %v2592 = vmul.f32 %v2494, %v2590
        %2595 = vrot.lane.b32.xlu0 %v2591, 126
        %v2596 = vpop.permute.xlu0 %2595
        %2597 = vrot.lane.b32.xlu0 %v2592, 126
        %v2598 = vpop.permute.xlu0 %2597
        %v2601 = vadd.f32 %v2545, %v2596
        %v2602 = vadd.f32 %v2546, %v2598
        %s2603 = sld [smem:[#allocation9 + $0x53]]
        %v2604 = vstv %s2603
        %v2605 = vmul.f32 %v2493, %v2604
        %v2606 = vmul.f32 %v2494, %v2604
        %2609 = vrot.lane.b32.xlu0 %v2605, 126
        %v2610 = vpop.permute.xlu0 %2609
        %2611 = vrot.lane.b32.xlu0 %v2606, 126
        %v2612 = vpop.permute.xlu0 %2611
        %v2615 = vadd.f32 %v2559, %v2610
        %v2616 = vadd.f32 %v2560, %v2612
        %s2617 = sld [smem:[#allocation9 + $0x77]]
        %v2618 = vstv %s2617
        %v2619 = vmul.f32 %v2493, %v2618
        %v2620 = vmul.f32 %v2494, %v2618
        %2623 = vrot.lane.b32.xlu0 %v2619, 126
        %v2624 = vpop.permute.xlu0 %2623
        %2625 = vrot.lane.b32.xlu0 %v2620, 126
        %v2626 = vpop.permute.xlu0 %2625
        %v2629 = vadd.f32 %v2573, %v2624
        %v2630 = vadd.f32 %v2574, %v2626
        %v2631 = vld [vmem:[%s2046 + $0x1] sm:$0xff]
        %v2632 = vld [vmem:[%s2046 + $0x9] sm:$0xff]
        %s2633 = sld [smem:[#allocation9 + $0xc]]
        %v2634 = vstv %s2633
        %v2635 = vmul.f32 %v2631, %v2634
        %v2636 = vmul.f32 %v2632, %v2634
        %v2637 = vadd.f32 %v2587, %v2635
        %v2638 = vadd.f32 %v2588, %v2636
        %s2639 = sld [smem:[#allocation9 + $0x30]]
        %v2640 = vstv %s2639
        %v2641 = vmul.f32 %v2631, %v2640
        %v2642 = vmul.f32 %v2632, %v2640
        %v2643 = vadd.f32 %v2601, %v2641
        %v2644 = vadd.f32 %v2602, %v2642
        %s2645 = sld [smem:[#allocation9 + $0x54]]
        %v2646 = vstv %s2645
        %v2647 = vmul.f32 %v2631, %v2646
        %v2648 = vmul.f32 %v2632, %v2646
        %v2649 = vadd.f32 %v2615, %v2647
        %v2650 = vadd.f32 %v2616, %v2648
        %s2651 = sld [smem:[#allocation9 + $0x78]]
        %v2652 = vstv %s2651
        %v2653 = vmul.f32 %v2631, %v2652
        %v2654 = vmul.f32 %v2632, %v2652
        %v2655 = vadd.f32 %v2629, %v2653
        %v2656 = vadd.f32 %v2630, %v2654
        %s2657 = sld [smem:[#allocation9 + $0xd]]
        %v2658 = vstv %s2657
        %v2659 = vmul.f32 %v2631, %v2658
        %v2660 = vmul.f32 %v2632, %v2658
        %2663 = vrot.lane.b32.xlu0 %v2659, 127
        %v2664 = vpop.permute.xlu0 %2663
        %2665 = vrot.lane.b32.xlu0 %v2660, 127
        %v2666 = vpop.permute.xlu0 %2665
        %v2669 = vadd.f32 %v2637, %v2664
        %v2670 = vadd.f32 %v2638, %v2666
        %s2671 = sld [smem:[#allocation9 + $0x31]]
        %v2672 = vstv %s2671
        %v2673 = vmul.f32 %v2631, %v2672
        %v2674 = vmul.f32 %v2632, %v2672
        %2677 = vrot.lane.b32.xlu0 %v2673, 127
        %v2678 = vpop.permute.xlu0 %2677
        %2679 = vrot.lane.b32.xlu0 %v2674, 127
        %v2680 = vpop.permute.xlu0 %2679
        %v2683 = vadd.f32 %v2643, %v2678
        %v2684 = vadd.f32 %v2644, %v2680
        %s2685 = sld [smem:[#allocation9 + $0x55]]
        %v2686 = vstv %s2685
        %v2687 = vmul.f32 %v2631, %v2686
        %v2688 = vmul.f32 %v2632, %v2686
        %2691 = vrot.lane.b32.xlu0 %v2687, 127
        %v2692 = vpop.permute.xlu0 %2691
        %2693 = vrot.lane.b32.xlu0 %v2688, 127
        %v2694 = vpop.permute.xlu0 %2693
        %v2697 = vadd.f32 %v2649, %v2692
        %v2698 = vadd.f32 %v2650, %v2694
        %s2699 = sld [smem:[#allocation9 + $0x79]]
        %v2700 = vstv %s2699
        %v2701 = vmul.f32 %v2631, %v2700
        %v2702 = vmul.f32 %v2632, %v2700
        %2705 = vrot.lane.b32.xlu0 %v2701, 127
        %v2706 = vpop.permute.xlu0 %2705
        %2707 = vrot.lane.b32.xlu0 %v2702, 127
        %v2708 = vpop.permute.xlu0 %2707
        %v2711 = vadd.f32 %v2655, %v2706
        %v2712 = vadd.f32 %v2656, %v2708
        %s2713 = sld [smem:[#allocation9 + $0xe]]
        %v2714 = vstv %s2713
        %v2715 = vmul.f32 %v2631, %v2714
        %v2716 = vmul.f32 %v2632, %v2714
        %2719 = vrot.lane.b32.xlu0 %v2715, 126
        %v2720 = vpop.permute.xlu0 %2719
        %2721 = vrot.lane.b32.xlu0 %v2716, 126
        %v2722 = vpop.permute.xlu0 %2721
        %v2725 = vadd.f32 %v2669, %v2720
        %v2726 = vadd.f32 %v2670, %v2722
        %s2727 = sld [smem:[#allocation9 + $0x32]]
        %v2728 = vstv %s2727
        %v2729 = vmul.f32 %v2631, %v2728
        %v2730 = vmul.f32 %v2632, %v2728
        %2733 = vrot.lane.b32.xlu0 %v2729, 126
        %v2734 = vpop.permute.xlu0 %2733
        %2735 = vrot.lane.b32.xlu0 %v2730, 126
        %v2736 = vpop.permute.xlu0 %2735
        %v2739 = vadd.f32 %v2683, %v2734
        %v2740 = vadd.f32 %v2684, %v2736
        %s2741 = sld [smem:[#allocation9 + $0x56]]
        %v2742 = vstv %s2741
        %v2743 = vmul.f32 %v2631, %v2742
        %v2744 = vmul.f32 %v2632, %v2742
        %2747 = vrot.lane.b32.xlu0 %v2743, 126
        %v2748 = vpop.permute.xlu0 %2747
        %2749 = vrot.lane.b32.xlu0 %v2744, 126
        %v2750 = vpop.permute.xlu0 %2749
        %v2753 = vadd.f32 %v2697, %v2748
        %v2754 = vadd.f32 %v2698, %v2750
        %s2755 = sld [smem:[#allocation9 + $0x7a]]
        %v2756 = vstv %s2755
        %v2757 = vmul.f32 %v2631, %v2756
        %v2758 = vmul.f32 %v2632, %v2756
        %2761 = vrot.lane.b32.xlu0 %v2757, 126
        %v2762 = vpop.permute.xlu0 %2761
        %2763 = vrot.lane.b32.xlu0 %v2758, 126
        %v2764 = vpop.permute.xlu0 %2763
        %v2767 = vadd.f32 %v2711, %v2762
        %v2768 = vadd.f32 %v2712, %v2764
        %v2769 = vld [vmem:[%s2046 + $0x2] sm:$0xff]
        %v2770 = vld [vmem:[%s2046 + $0xa] sm:$0xff]
        %s2771 = sld [smem:[#allocation9 + $0xf]]
        %v2772 = vstv %s2771
        %v2773 = vmul.f32 %v2769, %v2772
        %v2774 = vmul.f32 %v2770, %v2772
        %v2775 = vadd.f32 %v2725, %v2773
        %v2776 = vadd.f32 %v2726, %v2774
        %s2777 = sld [smem:[#allocation9 + $0x33]]
        %v2778 = vstv %s2777
        %v2779 = vmul.f32 %v2769, %v2778
        %v2780 = vmul.f32 %v2770, %v2778
        %v2781 = vadd.f32 %v2739, %v2779
        %v2782 = vadd.f32 %v2740, %v2780
        %s2783 = sld [smem:[#allocation9 + $0x57]]
        %v2784 = vstv %s2783
        %v2785 = vmul.f32 %v2769, %v2784
        %v2786 = vmul.f32 %v2770, %v2784
        %v2787 = vadd.f32 %v2753, %v2785
        %v2788 = vadd.f32 %v2754, %v2786
        %s2789 = sld [smem:[#allocation9 + $0x7b]]
        %v2790 = vstv %s2789
        %v2791 = vmul.f32 %v2769, %v2790
        %v2792 = vmul.f32 %v2770, %v2790
        %v2793 = vadd.f32 %v2767, %v2791
        %v2794 = vadd.f32 %v2768, %v2792
        %s2795 = sld [smem:[#allocation9 + $0x10]]
        %v2796 = vstv %s2795
        %v2797 = vmul.f32 %v2769, %v2796
        %v2798 = vmul.f32 %v2770, %v2796
        %2801 = vrot.lane.b32.xlu0 %v2797, 127
        %v2802 = vpop.permute.xlu0 %2801
        %2803 = vrot.lane.b32.xlu0 %v2798, 127
        %v2804 = vpop.permute.xlu0 %2803
        %v2807 = vadd.f32 %v2775, %v2802
        %v2808 = vadd.f32 %v2776, %v2804
        %s2809 = sld [smem:[#allocation9 + $0x34]]
        %v2810 = vstv %s2809
        %v2811 = vmul.f32 %v2769, %v2810
        %v2812 = vmul.f32 %v2770, %v2810
        %2815 = vrot.lane.b32.xlu0 %v2811, 127
        %v2816 = vpop.permute.xlu0 %2815
        %2817 = vrot.lane.b32.xlu0 %v2812, 127
        %v2818 = vpop.permute.xlu0 %2817
        %v2821 = vadd.f32 %v2781, %v2816
        %v2822 = vadd.f32 %v2782, %v2818
        %s2823 = sld [smem:[#allocation9 + $0x58]]
        %v2824 = vstv %s2823
        %v2825 = vmul.f32 %v2769, %v2824
        %v2826 = vmul.f32 %v2770, %v2824
        %2829 = vrot.lane.b32.xlu0 %v2825, 127
        %v2830 = vpop.permute.xlu0 %2829
        %2831 = vrot.lane.b32.xlu0 %v2826, 127
        %v2832 = vpop.permute.xlu0 %2831
        %v2835 = vadd.f32 %v2787, %v2830
        %v2836 = vadd.f32 %v2788, %v2832
        %s2837 = sld [smem:[#allocation9 + $0x7c]]
        %v2838 = vstv %s2837
        %v2839 = vmul.f32 %v2769, %v2838
        %v2840 = vmul.f32 %v2770, %v2838
        %2843 = vrot.lane.b32.xlu0 %v2839, 127
        %v2844 = vpop.permute.xlu0 %2843
        %2845 = vrot.lane.b32.xlu0 %v2840, 127
        %v2846 = vpop.permute.xlu0 %2845
        %v2849 = vadd.f32 %v2793, %v2844
        %v2850 = vadd.f32 %v2794, %v2846
        %s2851 = sld [smem:[#allocation9 + $0x11]]
        %v2852 = vstv %s2851
        %v2853 = vmul.f32 %v2769, %v2852
        %v2854 = vmul.f32 %v2770, %v2852
        %2857 = vrot.lane.b32.xlu0 %v2853, 126
        %v2858 = vpop.permute.xlu0 %2857
        %2859 = vrot.lane.b32.xlu0 %v2854, 126
        %v2860 = vpop.permute.xlu0 %2859
        %v2863 = vadd.f32 %v2807, %v2858
        %v2864 = vadd.f32 %v2808, %v2860
        %s2865 = sld [smem:[#allocation9 + $0x35]]
        %v2866 = vstv %s2865
        %v2867 = vmul.f32 %v2769, %v2866
        %v2868 = vmul.f32 %v2770, %v2866
        %2871 = vrot.lane.b32.xlu0 %v2867, 126
        %v2872 = vpop.permute.xlu0 %2871
        %2873 = vrot.lane.b32.xlu0 %v2868, 126
        %v2874 = vpop.permute.xlu0 %2873
        %v2877 = vadd.f32 %v2821, %v2872
        %v2878 = vadd.f32 %v2822, %v2874
        %s2879 = sld [smem:[#allocation9 + $0x59]]
        %v2880 = vstv %s2879
        %v2881 = vmul.f32 %v2769, %v2880
        %v2882 = vmul.f32 %v2770, %v2880
        %2885 = vrot.lane.b32.xlu0 %v2881, 126
        %v2886 = vpop.permute.xlu0 %2885
        %2887 = vrot.lane.b32.xlu0 %v2882, 126
        %v2888 = vpop.permute.xlu0 %2887
        %v2891 = vadd.f32 %v2835, %v2886
        %v2892 = vadd.f32 %v2836, %v2888
        %s2893 = sld [smem:[#allocation9 + $0x7d]]
        %v2894 = vstv %s2893
        %v2895 = vmul.f32 %v2769, %v2894
        %v2896 = vmul.f32 %v2770, %v2894
        %2899 = vrot.lane.b32.xlu0 %v2895, 126
        %v2900 = vpop.permute.xlu0 %2899
        %2901 = vrot.lane.b32.xlu0 %v2896, 126
        %v2902 = vpop.permute.xlu0 %2901
        %v2905 = vadd.f32 %v2849, %v2900
        %v2906 = vadd.f32 %v2850, %v2902
        %v2907 = vld [vmem:[%s2057] sm:$0xff]
        %v2908 = vld [vmem:[%s2057 + $0x8] sm:$0xff]
        %s2909 = sld [smem:[#allocation9 + $0x12]]
        %v2910 = vstv %s2909
        %v2911 = vmul.f32 %v2907, %v2910
        %v2912 = vmul.f32 %v2908, %v2910
        %v2913 = vadd.f32 %v2863, %v2911
        %v2914 = vadd.f32 %v2864, %v2912
        %s2915 = sld [smem:[#allocation9 + $0x36]]
        %v2916 = vstv %s2915
        %v2917 = vmul.f32 %v2907, %v2916
        %v2918 = vmul.f32 %v2908, %v2916
        %v2919 = vadd.f32 %v2877, %v2917
        %v2920 = vadd.f32 %v2878, %v2918
        %s2921 = sld [smem:[#allocation9 + $0x5a]]
        %v2922 = vstv %s2921
        %v2923 = vmul.f32 %v2907, %v2922
        %v2924 = vmul.f32 %v2908, %v2922
        %v2925 = vadd.f32 %v2891, %v2923
        %v2926 = vadd.f32 %v2892, %v2924
        %s2927 = sld [smem:[#allocation9 + $0x7e]]
        %v2928 = vstv %s2927
        %v2929 = vmul.f32 %v2907, %v2928
        %v2930 = vmul.f32 %v2908, %v2928
        %v2931 = vadd.f32 %v2905, %v2929
        %v2932 = vadd.f32 %v2906, %v2930
        %s2933 = sld [smem:[#allocation9 + $0x13]]
        %v2934 = vstv %s2933
        %v2935 = vmul.f32 %v2907, %v2934
        %v2936 = vmul.f32 %v2908, %v2934
        %2939 = vrot.lane.b32.xlu0 %v2935, 127
        %v2940 = vpop.permute.xlu0 %2939
        %2941 = vrot.lane.b32.xlu0 %v2936, 127
        %v2942 = vpop.permute.xlu0 %2941
        %v2945 = vadd.f32 %v2913, %v2940
        %v2946 = vadd.f32 %v2914, %v2942
        %s2947 = sld [smem:[#allocation9 + $0x37]]
        %v2948 = vstv %s2947
        %v2949 = vmul.f32 %v2907, %v2948
        %v2950 = vmul.f32 %v2908, %v2948
        %2953 = vrot.lane.b32.xlu0 %v2949, 127
        %v2954 = vpop.permute.xlu0 %2953
        %2955 = vrot.lane.b32.xlu0 %v2950, 127
        %v2956 = vpop.permute.xlu0 %2955
        %v2959 = vadd.f32 %v2919, %v2954
        %v2960 = vadd.f32 %v2920, %v2956
        %s2961 = sld [smem:[#allocation9 + $0x5b]]
        %v2962 = vstv %s2961
        %v2963 = vmul.f32 %v2907, %v2962
        %v2964 = vmul.f32 %v2908, %v2962
        %2967 = vrot.lane.b32.xlu0 %v2963, 127
        %v2968 = vpop.permute.xlu0 %2967
        %2969 = vrot.lane.b32.xlu0 %v2964, 127
        %v2970 = vpop.permute.xlu0 %2969
        %v2973 = vadd.f32 %v2925, %v2968
        %v2974 = vadd.f32 %v2926, %v2970
        %s2975 = sld [smem:[#allocation9 + $0x7f]]
        %v2976 = vstv %s2975
        %v2977 = vmul.f32 %v2907, %v2976
        %v2978 = vmul.f32 %v2908, %v2976
        %2981 = vrot.lane.b32.xlu0 %v2977, 127
        %v2982 = vpop.permute.xlu0 %2981
        %2983 = vrot.lane.b32.xlu0 %v2978, 127
        %v2984 = vpop.permute.xlu0 %2983
        %v2987 = vadd.f32 %v2931, %v2982
        %v2988 = vadd.f32 %v2932, %v2984
        %s2989 = sld [smem:[#allocation9 + $0x14]]
        %v2990 = vstv %s2989
        %v2991 = vmul.f32 %v2907, %v2990
        %v2992 = vmul.f32 %v2908, %v2990
        %2995 = vrot.lane.b32.xlu0 %v2991, 126
        %v2996 = vpop.permute.xlu0 %2995
        %2997 = vrot.lane.b32.xlu0 %v2992, 126
        %v2998 = vpop.permute.xlu0 %2997
        %v3001 = vadd.f32 %v2945, %v2996
        %v3002 = vadd.f32 %v2946, %v2998
        %s3003 = sld [smem:[#allocation9 + $0x38]]
        %v3004 = vstv %s3003
        %v3005 = vmul.f32 %v2907, %v3004
        %v3006 = vmul.f32 %v2908, %v3004
        %3009 = vrot.lane.b32.xlu0 %v3005, 126
        %v3010 = vpop.permute.xlu0 %3009
        %3011 = vrot.lane.b32.xlu0 %v3006, 126
        %v3012 = vpop.permute.xlu0 %3011
        %v3015 = vadd.f32 %v2959, %v3010
        %v3016 = vadd.f32 %v2960, %v3012
        %s3017 = sld [smem:[#allocation9 + $0x5c]]
        %v3018 = vstv %s3017
        %v3019 = vmul.f32 %v2907, %v3018
        %v3020 = vmul.f32 %v2908, %v3018
        %3023 = vrot.lane.b32.xlu0 %v3019, 126
        %v3024 = vpop.permute.xlu0 %3023
        %3025 = vrot.lane.b32.xlu0 %v3020, 126
        %v3026 = vpop.permute.xlu0 %3025
        %v3029 = vadd.f32 %v2973, %v3024
        %v3030 = vadd.f32 %v2974, %v3026
        %s3031 = sld [smem:[#allocation9 + $0x80]]
        %v3032 = vstv %s3031
        %v3033 = vmul.f32 %v2907, %v3032
        %v3034 = vmul.f32 %v2908, %v3032
        %3037 = vrot.lane.b32.xlu0 %v3033, 126
        %v3038 = vpop.permute.xlu0 %3037
        %3039 = vrot.lane.b32.xlu0 %v3034, 126
        %v3040 = vpop.permute.xlu0 %3039
        %v3043 = vadd.f32 %v2987, %v3038
        %v3044 = vadd.f32 %v2988, %v3040
        %v3045 = vld [vmem:[%s2057 + $0x1] sm:$0xff]
        %v3046 = vld [vmem:[%s2057 + $0x9] sm:$0xff]
        %s3047 = sld [smem:[#allocation9 + $0x15]]
        %v3048 = vstv %s3047
        %v3049 = vmul.f32 %v3045, %v3048
        %v3050 = vmul.f32 %v3046, %v3048
        %v3051 = vadd.f32 %v3001, %v3049
        %v3052 = vadd.f32 %v3002, %v3050
        %s3053 = sld [smem:[#allocation9 + $0x39]]
        %v3054 = vstv %s3053
        %v3055 = vmul.f32 %v3045, %v3054
        %v3056 = vmul.f32 %v3046, %v3054
        %v3057 = vadd.f32 %v3015, %v3055
        %v3058 = vadd.f32 %v3016, %v3056
        %s3059 = sld [smem:[#allocation9 + $0x5d]]
        %v3060 = vstv %s3059
        %v3061 = vmul.f32 %v3045, %v3060
        %v3062 = vmul.f32 %v3046, %v3060
        %v3063 = vadd.f32 %v3029, %v3061
        %v3064 = vadd.f32 %v3030, %v3062
        %s3065 = sld [smem:[#allocation9 + $0x81]]
        %v3066 = vstv %s3065
        %v3067 = vmul.f32 %v3045, %v3066
        %v3068 = vmul.f32 %v3046, %v3066
        %v3069 = vadd.f32 %v3043, %v3067
        %v3070 = vadd.f32 %v3044, %v3068
        %s3071 = sld [smem:[#allocation9 + $0x16]]
        %v3072 = vstv %s3071
        %v3073 = vmul.f32 %v3045, %v3072
        %v3074 = vmul.f32 %v3046, %v3072
        %3077 = vrot.lane.b32.xlu0 %v3073, 127
        %v3078 = vpop.permute.xlu0 %3077
        %3079 = vrot.lane.b32.xlu0 %v3074, 127
        %v3080 = vpop.permute.xlu0 %3079
        %v3083 = vadd.f32 %v3051, %v3078
        %v3084 = vadd.f32 %v3052, %v3080
        %s3085 = sld [smem:[#allocation9 + $0x3a]]
        %v3086 = vstv %s3085
        %v3087 = vmul.f32 %v3045, %v3086
        %v3088 = vmul.f32 %v3046, %v3086
        %3091 = vrot.lane.b32.xlu0 %v3087, 127
        %v3092 = vpop.permute.xlu0 %3091
        %3093 = vrot.lane.b32.xlu0 %v3088, 127
        %v3094 = vpop.permute.xlu0 %3093
        %v3097 = vadd.f32 %v3057, %v3092
        %v3098 = vadd.f32 %v3058, %v3094
        %s3099 = sld [smem:[#allocation9 + $0x5e]]
        %v3100 = vstv %s3099
        %v3101 = vmul.f32 %v3045, %v3100
        %v3102 = vmul.f32 %v3046, %v3100
        %3105 = vrot.lane.b32.xlu0 %v3101, 127
        %v3106 = vpop.permute.xlu0 %3105
        %3107 = vrot.lane.b32.xlu0 %v3102, 127
        %v3108 = vpop.permute.xlu0 %3107
        %v3111 = vadd.f32 %v3063, %v3106
        %v3112 = vadd.f32 %v3064, %v3108
        %s3113 = sld [smem:[#allocation9 + $0x82]]
        %v3114 = vstv %s3113
        %v3115 = vmul.f32 %v3045, %v3114
        %v3116 = vmul.f32 %v3046, %v3114
        %3119 = vrot.lane.b32.xlu0 %v3115, 127
        %v3120 = vpop.permute.xlu0 %3119
        %3121 = vrot.lane.b32.xlu0 %v3116, 127
        %v3122 = vpop.permute.xlu0 %3121
        %v3125 = vadd.f32 %v3069, %v3120
        %v3126 = vadd.f32 %v3070, %v3122
        %s3127 = sld [smem:[#allocation9 + $0x17]]
        %v3128 = vstv %s3127
        %v3129 = vmul.f32 %v3045, %v3128
        %v3130 = vmul.f32 %v3046, %v3128
        %3133 = vrot.lane.b32.xlu0 %v3129, 126
        %v3134 = vpop.permute.xlu0 %3133
        %3135 = vrot.lane.b32.xlu0 %v3130, 126
        %v3136 = vpop.permute.xlu0 %3135
        %v3139 = vadd.f32 %v3083, %v3134
        %v3140 = vadd.f32 %v3084, %v3136
        %s3141 = sld [smem:[#allocation9 + $0x3b]]
        %v3142 = vstv %s3141
        %v3143 = vmul.f32 %v3045, %v3142
        %v3144 = vmul.f32 %v3046, %v3142
        %3147 = vrot.lane.b32.xlu0 %v3143, 126
        %v3148 = vpop.permute.xlu0 %3147
        %3149 = vrot.lane.b32.xlu0 %v3144, 126
        %v3150 = vpop.permute.xlu0 %3149
        %v3153 = vadd.f32 %v3097, %v3148
        %v3154 = vadd.f32 %v3098, %v3150
        %s3155 = sld [smem:[#allocation9 + $0x5f]]
        %v3156 = vstv %s3155
        %v3157 = vmul.f32 %v3045, %v3156
        %v3158 = vmul.f32 %v3046, %v3156
        %3161 = vrot.lane.b32.xlu0 %v3157, 126
        %v3162 = vpop.permute.xlu0 %3161
        %3163 = vrot.lane.b32.xlu0 %v3158, 126
        %v3164 = vpop.permute.xlu0 %3163
        %v3167 = vadd.f32 %v3111, %v3162
        %v3168 = vadd.f32 %v3112, %v3164
        %s3169 = sld [smem:[#allocation9 + $0x83]]
        %v3170 = vstv %s3169
        %v3171 = vmul.f32 %v3045, %v3170
        %v3172 = vmul.f32 %v3046, %v3170
        %3175 = vrot.lane.b32.xlu0 %v3171, 126
        %v3176 = vpop.permute.xlu0 %3175
        %3177 = vrot.lane.b32.xlu0 %v3172, 126
        %v3178 = vpop.permute.xlu0 %3177
        %v3181 = vadd.f32 %v3125, %v3176
        %v3182 = vadd.f32 %v3126, %v3178
        %v3183 = vld [vmem:[%s2057 + $0x2] sm:$0xff]
        %v3184 = vld [vmem:[%s2057 + $0xa] sm:$0xff]
        %s3185 = sld [smem:[#allocation9 + $0x18]]
        %v3186 = vstv %s3185
        %v3187 = vmul.f32 %v3183, %v3186
        %v3188 = vmul.f32 %v3184, %v3186
        %v3189 = vadd.f32 %v3139, %v3187
        %v3190 = vadd.f32 %v3140, %v3188
        %s3191 = sld [smem:[#allocation9 + $0x3c]]
        %v3192 = vstv %s3191
        %v3193 = vmul.f32 %v3183, %v3192
        %v3194 = vmul.f32 %v3184, %v3192
        %v3195 = vadd.f32 %v3153, %v3193
        %v3196 = vadd.f32 %v3154, %v3194
        %s3197 = sld [smem:[#allocation9 + $0x60]]
        %v3198 = vstv %s3197
        %v3199 = vmul.f32 %v3183, %v3198
        %v3200 = vmul.f32 %v3184, %v3198
        %v3201 = vadd.f32 %v3167, %v3199
        %v3202 = vadd.f32 %v3168, %v3200
        %s3203 = sld [smem:[#allocation9 + $0x84]]
        %v3204 = vstv %s3203
        %v3205 = vmul.f32 %v3183, %v3204
        %v3206 = vmul.f32 %v3184, %v3204
        %v3207 = vadd.f32 %v3181, %v3205
        %v3208 = vadd.f32 %v3182, %v3206
        %s3209 = sld [smem:[#allocation9 + $0x19]]
        %v3210 = vstv %s3209
        %v3211 = vmul.f32 %v3183, %v3210
        %v3212 = vmul.f32 %v3184, %v3210
        %3215 = vrot.lane.b32.xlu0 %v3211, 127
        %v3216 = vpop.permute.xlu0 %3215
        %3217 = vrot.lane.b32.xlu0 %v3212, 127
        %v3218 = vpop.permute.xlu0 %3217
        %v3221 = vadd.f32 %v3189, %v3216
        %v3222 = vadd.f32 %v3190, %v3218
        %s3223 = sld [smem:[#allocation9 + $0x3d]]
        %v3224 = vstv %s3223
        %v3225 = vmul.f32 %v3183, %v3224
        %v3226 = vmul.f32 %v3184, %v3224
        %3229 = vrot.lane.b32.xlu0 %v3225, 127
        %v3230 = vpop.permute.xlu0 %3229
        %3231 = vrot.lane.b32.xlu0 %v3226, 127
        %v3232 = vpop.permute.xlu0 %3231
        %v3235 = vadd.f32 %v3195, %v3230
        %v3236 = vadd.f32 %v3196, %v3232
        %s3237 = sld [smem:[#allocation9 + $0x61]]
        %v3238 = vstv %s3237
        %v3239 = vmul.f32 %v3183, %v3238
        %v3240 = vmul.f32 %v3184, %v3238
        %3243 = vrot.lane.b32.xlu0 %v3239, 127
        %v3244 = vpop.permute.xlu0 %3243
        %3245 = vrot.lane.b32.xlu0 %v3240, 127
        %v3246 = vpop.permute.xlu0 %3245
        %v3249 = vadd.f32 %v3201, %v3244
        %v3250 = vadd.f32 %v3202, %v3246
        %s3251 = sld [smem:[#allocation9 + $0x85]]
        %v3252 = vstv %s3251
        %v3253 = vmul.f32 %v3183, %v3252
        %v3254 = vmul.f32 %v3184, %v3252
        %3257 = vrot.lane.b32.xlu0 %v3253, 127
        %v3258 = vpop.permute.xlu0 %3257
        %3259 = vrot.lane.b32.xlu0 %v3254, 127
        %v3260 = vpop.permute.xlu0 %3259
        %v3263 = vadd.f32 %v3207, %v3258
        %v3264 = vadd.f32 %v3208, %v3260
        %s3265 = sld [smem:[#allocation9 + $0x1a]]
        %v3266 = vstv %s3265
        %v3267 = vmul.f32 %v3183, %v3266
        %v3268 = vmul.f32 %v3184, %v3266
        %3271 = vrot.lane.b32.xlu0 %v3267, 126
        %v3272 = vpop.permute.xlu0 %3271
        %3273 = vrot.lane.b32.xlu0 %v3268, 126
        %v3274 = vpop.permute.xlu0 %3273
        %v3277 = vadd.f32 %v3221, %v3272
        %v3278 = vadd.f32 %v3222, %v3274
        %s3279 = sld [smem:[#allocation9 + $0x3e]]
        %v3280 = vstv %s3279
        %v3281 = vmul.f32 %v3183, %v3280
        %v3282 = vmul.f32 %v3184, %v3280
        %3285 = vrot.lane.b32.xlu0 %v3281, 126
        %v3286 = vpop.permute.xlu0 %3285
        %3287 = vrot.lane.b32.xlu0 %v3282, 126
        %v3288 = vpop.permute.xlu0 %3287
        %v3291 = vadd.f32 %v3235, %v3286
        %v3292 = vadd.f32 %v3236, %v3288
        %s3293 = sld [smem:[#allocation9 + $0x62]]
        %v3294 = vstv %s3293
        %v3295 = vmul.f32 %v3183, %v3294
        %v3296 = vmul.f32 %v3184, %v3294
        %3299 = vrot.lane.b32.xlu0 %v3295, 126
        %v3300 = vpop.permute.xlu0 %3299
        %3301 = vrot.lane.b32.xlu0 %v3296, 126
        %v3302 = vpop.permute.xlu0 %3301
        %v3305 = vadd.f32 %v3249, %v3300
        %v3306 = vadd.f32 %v3250, %v3302
        %s3307 = sld [smem:[#allocation9 + $0x86]]
        %v3308 = vstv %s3307
        %v3309 = vmul.f32 %v3183, %v3308
        %v3310 = vmul.f32 %v3184, %v3308
        %3313 = vrot.lane.b32.xlu0 %v3309, 126
        %v3314 = vpop.permute.xlu0 %3313
        %3315 = vrot.lane.b32.xlu0 %v3310, 126
        %v3316 = vpop.permute.xlu0 %3315
        %v3319 = vadd.f32 %v3263, %v3314
        %v3320 = vadd.f32 %v3264, %v3316
        %v3321 = vld [vmem:[%s2068] sm:$0xff]
        %v3322 = vld [vmem:[%s2068 + $0x8] sm:$0xff]
        %s3323 = sld [smem:[#allocation9 + $0x1b]]
        %v3324 = vstv %s3323
        %v3325 = vmul.f32 %v3321, %v3324
        %v3326 = vmul.f32 %v3322, %v3324
        %v3327 = vadd.f32 %v3277, %v3325
        %v3328 = vadd.f32 %v3278, %v3326
        %s3329 = sld [smem:[#allocation9 + $0x3f]]
        %v3330 = vstv %s3329
        %v3331 = vmul.f32 %v3321, %v3330
        %v3332 = vmul.f32 %v3322, %v3330
        %v3333 = vadd.f32 %v3291, %v3331
        %v3334 = vadd.f32 %v3292, %v3332
        %s3335 = sld [smem:[#allocation9 + $0x63]]
        %v3336 = vstv %s3335
        %v3337 = vmul.f32 %v3321, %v3336
        %v3338 = vmul.f32 %v3322, %v3336
        %v3339 = vadd.f32 %v3305, %v3337
        %v3340 = vadd.f32 %v3306, %v3338
        %s3341 = sld [smem:[#allocation9 + $0x87]]
        %v3342 = vstv %s3341
        %v3343 = vmul.f32 %v3321, %v3342
        %v3344 = vmul.f32 %v3322, %v3342
        %v3345 = vadd.f32 %v3319, %v3343
        %v3346 = vadd.f32 %v3320, %v3344
        %s3347 = sld [smem:[#allocation9 + $0x1c]]
        %v3348 = vstv %s3347
        %v3349 = vmul.f32 %v3321, %v3348
        %v3350 = vmul.f32 %v3322, %v3348
        %3353 = vrot.lane.b32.xlu0 %v3349, 127
        %v3354 = vpop.permute.xlu0 %3353
        %3355 = vrot.lane.b32.xlu0 %v3350, 127
        %v3356 = vpop.permute.xlu0 %3355
        %v3359 = vadd.f32 %v3327, %v3354
        %v3360 = vadd.f32 %v3328, %v3356
        %s3361 = sld [smem:[#allocation9 + $0x40]]
        %v3362 = vstv %s3361
        %v3363 = vmul.f32 %v3321, %v3362
        %v3364 = vmul.f32 %v3322, %v3362
        %3367 = vrot.lane.b32.xlu0 %v3363, 127
        %v3368 = vpop.permute.xlu0 %3367
        %3369 = vrot.lane.b32.xlu0 %v3364, 127
        %v3370 = vpop.permute.xlu0 %3369
        %v3373 = vadd.f32 %v3333, %v3368
        %v3374 = vadd.f32 %v3334, %v3370
        %s3375 = sld [smem:[#allocation9 + $0x64]]
        %v3376 = vstv %s3375
        %v3377 = vmul.f32 %v3321, %v3376
        %v3378 = vmul.f32 %v3322, %v3376
        %3381 = vrot.lane.b32.xlu0 %v3377, 127
        %v3382 = vpop.permute.xlu0 %3381
        %3383 = vrot.lane.b32.xlu0 %v3378, 127
        %v3384 = vpop.permute.xlu0 %3383
        %v3387 = vadd.f32 %v3339, %v3382
        %v3388 = vadd.f32 %v3340, %v3384
        %s3389 = sld [smem:[#allocation9 + $0x88]]
        %v3390 = vstv %s3389
        %v3391 = vmul.f32 %v3321, %v3390
        %v3392 = vmul.f32 %v3322, %v3390
        %3395 = vrot.lane.b32.xlu0 %v3391, 127
        %v3396 = vpop.permute.xlu0 %3395
        %3397 = vrot.lane.b32.xlu0 %v3392, 127
        %v3398 = vpop.permute.xlu0 %3397
        %v3401 = vadd.f32 %v3345, %v3396
        %v3402 = vadd.f32 %v3346, %v3398
        %s3403 = sld [smem:[#allocation9 + $0x1d]]
        %v3404 = vstv %s3403
        %v3405 = vmul.f32 %v3321, %v3404
        %v3406 = vmul.f32 %v3322, %v3404
        %3409 = vrot.lane.b32.xlu0 %v3405, 126
        %v3410 = vpop.permute.xlu0 %3409
        %3411 = vrot.lane.b32.xlu0 %v3406, 126
        %v3412 = vpop.permute.xlu0 %3411
        %v3415 = vadd.f32 %v3359, %v3410
        %v3416 = vadd.f32 %v3360, %v3412
        %s3417 = sld [smem:[#allocation9 + $0x41]]
        %v3418 = vstv %s3417
        %v3419 = vmul.f32 %v3321, %v3418
        %v3420 = vmul.f32 %v3322, %v3418
        %3423 = vrot.lane.b32.xlu0 %v3419, 126
        %v3424 = vpop.permute.xlu0 %3423
        %3425 = vrot.lane.b32.xlu0 %v3420, 126
        %v3426 = vpop.permute.xlu0 %3425
        %v3429 = vadd.f32 %v3373, %v3424
        %v3430 = vadd.f32 %v3374, %v3426
        %s3431 = sld [smem:[#allocation9 + $0x65]]
        %v3432 = vstv %s3431
        %v3433 = vmul.f32 %v3321, %v3432
        %v3434 = vmul.f32 %v3322, %v3432
        %3437 = vrot.lane.b32.xlu0 %v3433, 126
        %v3438 = vpop.permute.xlu0 %3437
        %3439 = vrot.lane.b32.xlu0 %v3434, 126
        %v3440 = vpop.permute.xlu0 %3439
        %v3443 = vadd.f32 %v3387, %v3438
        %v3444 = vadd.f32 %v3388, %v3440
        %s3445 = sld [smem:[#allocation9 + $0x89]]
        %v3446 = vstv %s3445
        %v3447 = vmul.f32 %v3321, %v3446
        %v3448 = vmul.f32 %v3322, %v3446
        %3451 = vrot.lane.b32.xlu0 %v3447, 126
        %v3452 = vpop.permute.xlu0 %3451
        %3453 = vrot.lane.b32.xlu0 %v3448, 126
        %v3454 = vpop.permute.xlu0 %3453
        %v3457 = vadd.f32 %v3401, %v3452
        %v3458 = vadd.f32 %v3402, %v3454
        %v3459 = vld [vmem:[%s2068 + $0x1] sm:$0xff]
        %v3460 = vld [vmem:[%s2068 + $0x9] sm:$0xff]
        %s3461 = sld [smem:[#allocation9 + $0x1e]]
        %v3462 = vstv %s3461
        %v3463 = vmul.f32 %v3459, %v3462
        %v3464 = vmul.f32 %v3460, %v3462
        %v3465 = vadd.f32 %v3415, %v3463
        %v3466 = vadd.f32 %v3416, %v3464
        %s3467 = sld [smem:[#allocation9 + $0x42]]
        %v3468 = vstv %s3467
        %v3469 = vmul.f32 %v3459, %v3468
        %v3470 = vmul.f32 %v3460, %v3468
        %v3471 = vadd.f32 %v3429, %v3469
        %v3472 = vadd.f32 %v3430, %v3470
        %s3473 = sld [smem:[#allocation9 + $0x66]]
        %v3474 = vstv %s3473
        %v3475 = vmul.f32 %v3459, %v3474
        %v3476 = vmul.f32 %v3460, %v3474
        %v3477 = vadd.f32 %v3443, %v3475
        %v3478 = vadd.f32 %v3444, %v3476
        %s3479 = sld [smem:[#allocation9 + $0x8a]]
        %v3480 = vstv %s3479
        %v3481 = vmul.f32 %v3459, %v3480
        %v3482 = vmul.f32 %v3460, %v3480
        %v3483 = vadd.f32 %v3457, %v3481
        %v3484 = vadd.f32 %v3458, %v3482
        %s3485 = sld [smem:[#allocation9 + $0x1f]]
        %v3486 = vstv %s3485
        %v3487 = vmul.f32 %v3459, %v3486
        %v3488 = vmul.f32 %v3460, %v3486
        %3491 = vrot.lane.b32.xlu0 %v3487, 127
        %v3492 = vpop.permute.xlu0 %3491
        %3493 = vrot.lane.b32.xlu0 %v3488, 127
        %v3494 = vpop.permute.xlu0 %3493
        %v3497 = vadd.f32 %v3465, %v3492
        %v3498 = vadd.f32 %v3466, %v3494
        %s3499 = sld [smem:[#allocation9 + $0x43]]
        %v3500 = vstv %s3499
        %v3501 = vmul.f32 %v3459, %v3500
        %v3502 = vmul.f32 %v3460, %v3500
        %3505 = vrot.lane.b32.xlu0 %v3501, 127
        %v3506 = vpop.permute.xlu0 %3505
        %3507 = vrot.lane.b32.xlu0 %v3502, 127
        %v3508 = vpop.permute.xlu0 %3507
        %v3511 = vadd.f32 %v3471, %v3506
        %v3512 = vadd.f32 %v3472, %v3508
        %s3513 = sld [smem:[#allocation9 + $0x67]]
        %v3514 = vstv %s3513
        %v3515 = vmul.f32 %v3459, %v3514
        %v3516 = vmul.f32 %v3460, %v3514
        %3519 = vrot.lane.b32.xlu0 %v3515, 127
        %v3520 = vpop.permute.xlu0 %3519
        %3521 = vrot.lane.b32.xlu0 %v3516, 127
        %v3522 = vpop.permute.xlu0 %3521
        %v3525 = vadd.f32 %v3477, %v3520
        %v3526 = vadd.f32 %v3478, %v3522
        %s3527 = sld [smem:[#allocation9 + $0x8b]]
        %v3528 = vstv %s3527
        %v3529 = vmul.f32 %v3459, %v3528
        %v3530 = vmul.f32 %v3460, %v3528
        %3533 = vrot.lane.b32.xlu0 %v3529, 127
        %v3534 = vpop.permute.xlu0 %3533
        %3535 = vrot.lane.b32.xlu0 %v3530, 127
        %v3536 = vpop.permute.xlu0 %3535
        %v3539 = vadd.f32 %v3483, %v3534
        %v3540 = vadd.f32 %v3484, %v3536
        %s3541 = sld [smem:[#allocation9 + $0x20]]
        %v3542 = vstv %s3541
        %v3543 = vmul.f32 %v3459, %v3542
        %v3544 = vmul.f32 %v3460, %v3542
        %3547 = vrot.lane.b32.xlu0 %v3543, 126
        %v3548 = vpop.permute.xlu0 %3547
        %3549 = vrot.lane.b32.xlu0 %v3544, 126
        %v3550 = vpop.permute.xlu0 %3549
        %v3553 = vadd.f32 %v3497, %v3548
        %v3554 = vadd.f32 %v3498, %v3550
        %s3555 = sld [smem:[#allocation9 + $0x44]]
        %v3556 = vstv %s3555
        %v3557 = vmul.f32 %v3459, %v3556
        %v3558 = vmul.f32 %v3460, %v3556
        %3561 = vrot.lane.b32.xlu0 %v3557, 126
        %v3562 = vpop.permute.xlu0 %3561
        %3563 = vrot.lane.b32.xlu0 %v3558, 126
        %v3564 = vpop.permute.xlu0 %3563
        %v3567 = vadd.f32 %v3511, %v3562
        %v3568 = vadd.f32 %v3512, %v3564
        %s3569 = sld [smem:[#allocation9 + $0x68]]
        %v3570 = vstv %s3569
        %v3571 = vmul.f32 %v3459, %v3570
        %v3572 = vmul.f32 %v3460, %v3570
        %3575 = vrot.lane.b32.xlu0 %v3571, 126
        %v3576 = vpop.permute.xlu0 %3575
        %3577 = vrot.lane.b32.xlu0 %v3572, 126
        %v3578 = vpop.permute.xlu0 %3577
        %v3581 = vadd.f32 %v3525, %v3576
        %v3582 = vadd.f32 %v3526, %v3578
        %s3583 = sld [smem:[#allocation9 + $0x8c]]
        %v3584 = vstv %s3583
        %v3585 = vmul.f32 %v3459, %v3584
        %v3586 = vmul.f32 %v3460, %v3584
        %3589 = vrot.lane.b32.xlu0 %v3585, 126
        %v3590 = vpop.permute.xlu0 %3589
        %3591 = vrot.lane.b32.xlu0 %v3586, 126
        %v3592 = vpop.permute.xlu0 %3591
        %v3595 = vadd.f32 %v3539, %v3590
        %v3596 = vadd.f32 %v3540, %v3592
        %v3597 = vld [vmem:[%s2068 + $0x2] sm:$0xff]
        %v3598 = vld [vmem:[%s2068 + $0xa] sm:$0xff]
        %s3599 = sld [smem:[#allocation9 + $0x21]]
        %v3600 = vstv %s3599
        %v3601 = vmul.f32 %v3597, %v3600
        %v3602 = vmul.f32 %v3598, %v3600
        %v3603 = vadd.f32 %v3553, %v3601
        %v3604 = vadd.f32 %v3554, %v3602
        %s3605 = sld [smem:[#allocation9 + $0x45]]
        %v3606 = vstv %s3605
        %v3607 = vmul.f32 %v3597, %v3606
        %v3608 = vmul.f32 %v3598, %v3606
        %v3609 = vadd.f32 %v3567, %v3607
        %v3610 = vadd.f32 %v3568, %v3608
        %s3611 = sld [smem:[#allocation9 + $0x69]]
        %v3612 = vstv %s3611
        %v3613 = vmul.f32 %v3597, %v3612
        %v3614 = vmul.f32 %v3598, %v3612
        %v3615 = vadd.f32 %v3581, %v3613
        %v3616 = vadd.f32 %v3582, %v3614
        %s3617 = sld [smem:[#allocation9 + $0x8d]]
        %v3618 = vstv %s3617
        %v3619 = vmul.f32 %v3597, %v3618
        %v3620 = vmul.f32 %v3598, %v3618
        %v3621 = vadd.f32 %v3595, %v3619
        %v3622 = vadd.f32 %v3596, %v3620
        %s3623 = sld [smem:[#allocation9 + $0x22]]
        %v3624 = vstv %s3623
        %v3625 = vmul.f32 %v3597, %v3624
        %v3626 = vmul.f32 %v3598, %v3624
        %3629 = vrot.lane.b32.xlu0 %v3625, 127
        %v3630 = vpop.permute.xlu0 %3629
        %3631 = vrot.lane.b32.xlu0 %v3626, 127
        %v3632 = vpop.permute.xlu0 %3631
        %v3635 = vadd.f32 %v3603, %v3630
        %v3636 = vadd.f32 %v3604, %v3632
        %s3637 = sld [smem:[#allocation9 + $0x46]]
        %v3638 = vstv %s3637
        %v3639 = vmul.f32 %v3597, %v3638
        %v3640 = vmul.f32 %v3598, %v3638
        %3643 = vrot.lane.b32.xlu0 %v3639, 127
        %v3644 = vpop.permute.xlu0 %3643
        %3645 = vrot.lane.b32.xlu0 %v3640, 127
        %v3646 = vpop.permute.xlu0 %3645
        %v3649 = vadd.f32 %v3609, %v3644
        %v3650 = vadd.f32 %v3610, %v3646
        %s3651 = sld [smem:[#allocation9 + $0x6a]]
        %v3652 = vstv %s3651
        %v3653 = vmul.f32 %v3597, %v3652
        %v3654 = vmul.f32 %v3598, %v3652
        %3657 = vrot.lane.b32.xlu0 %v3653, 127
        %v3658 = vpop.permute.xlu0 %3657
        %3659 = vrot.lane.b32.xlu0 %v3654, 127
        %v3660 = vpop.permute.xlu0 %3659
        %v3663 = vadd.f32 %v3615, %v3658
        %v3664 = vadd.f32 %v3616, %v3660
        %s3665 = sld [smem:[#allocation9 + $0x8e]]
        %v3666 = vstv %s3665
        %v3667 = vmul.f32 %v3597, %v3666
        %v3668 = vmul.f32 %v3598, %v3666
        %3671 = vrot.lane.b32.xlu0 %v3667, 127
        %v3672 = vpop.permute.xlu0 %3671
        %3673 = vrot.lane.b32.xlu0 %v3668, 127
        %v3674 = vpop.permute.xlu0 %3673
        %v3677 = vadd.f32 %v3621, %v3672
        %v3678 = vadd.f32 %v3622, %v3674
        %s3679 = sld [smem:[#allocation9 + $0x23]]
        %v3680 = vstv %s3679
        %v3681 = vmul.f32 %v3597, %v3680
        %v3682 = vmul.f32 %v3598, %v3680
        %3685 = vrot.lane.b32.xlu0 %v3681, 126
        %v3686 = vpop.permute.xlu0 %3685
        %3687 = vrot.lane.b32.xlu0 %v3682, 126
        %v3688 = vpop.permute.xlu0 %3687
        %v3691 = vadd.f32 %v3635, %v3686
        %v3692 = vadd.f32 %v3636, %v3688
        %s3693 = sld [smem:[#allocation9 + $0x47]]
        %v3694 = vstv %s3693
        %v3695 = vmul.f32 %v3597, %v3694
        %v3696 = vmul.f32 %v3598, %v3694
        %3699 = vrot.lane.b32.xlu0 %v3695, 126
        %v3700 = vpop.permute.xlu0 %3699
        %3701 = vrot.lane.b32.xlu0 %v3696, 126
        %v3702 = vpop.permute.xlu0 %3701
        %v3705 = vadd.f32 %v3649, %v3700
        %v3706 = vadd.f32 %v3650, %v3702
        %s3707 = sld [smem:[#allocation9 + $0x6b]]
        %v3708 = vstv %s3707
        %v3709 = vmul.f32 %v3597, %v3708
        %v3710 = vmul.f32 %v3598, %v3708
        %3713 = vrot.lane.b32.xlu0 %v3709, 126
        %v3714 = vpop.permute.xlu0 %3713
        %3715 = vrot.lane.b32.xlu0 %v3710, 126
        %v3716 = vpop.permute.xlu0 %3715
        %v3719 = vadd.f32 %v3663, %v3714
        %v3720 = vadd.f32 %v3664, %v3716
        %s3721 = sld [smem:[#allocation9 + $0x8f]]
        %v3722 = vstv %s3721
        %v3723 = vmul.f32 %v3597, %v3722
        %v3724 = vmul.f32 %v3598, %v3722
        %3727 = vrot.lane.b32.xlu0 %v3723, 126
        %v3728 = vpop.permute.xlu0 %3727
        %3729 = vrot.lane.b32.xlu0 %v3724, 126
        %v3730 = vpop.permute.xlu0 %3729
        %v3733 = vadd.f32 %v3677, %v3728
        %v3734 = vadd.f32 %v3678, %v3730
        %v3735 = vmax.f32 %v3691, 0.0
        %v3736 = vmax.f32 %v3692, 0.0
        %v3737 = vmax.f32 %v3705, 0.0
        %v3738 = vmax.f32 %v3706, 0.0
        %v3739 = vmax.f32 %v3719, 0.0
        %v3740 = vmax.f32 %v3720, 0.0
        %v3741 = vmax.f32 %v3733, 0.0
        %v3742 = vmax.f32 %v3734, 0.0
        %v3743 = vld [vmem:[%s274] sm:$0xff]
        %v3744 = vld [vmem:[%s274 + $0x8] sm:$0xff]
        %v3745 = vadd.f32 %v3735, %v3743
        %v3746 = vadd.f32 %v3736, %v3744
        %vm3747 = vcmask 130048
        %3748 = vst.msk [vmem:[%s269] sm:$0xff] %vm3747, %v3745
        %3749 = vst.msk [vmem:[%s269 + $0x8] sm:$0xff] %vm3747, %v3746
        %v3750 = vld [vmem:[%s302] sm:$0xff]
        %v3751 = vld [vmem:[%s302 + $0x8] sm:$0xff]
        %v3752 = vadd.f32 %v3737, %v3750
        %v3753 = vadd.f32 %v3738, %v3751
        %s3754 = scalar_lea.vmem %s269, 16 [#allocation12]
        %3755 = vst.msk [vmem:[%s3754] sm:$0xff] %vm3747, %v3752
        %3756 = vst.msk [vmem:[%s3754 + $0x8] sm:$0xff] %vm3747, %v3753
        %v3757 = vld [vmem:[%s316] sm:$0xff]
        %v3758 = vld [vmem:[%s316 + $0x8] sm:$0xff]
        %v3759 = vadd.f32 %v3739, %v3757
        %v3760 = vadd.f32 %v3740, %v3758
        %s3761 = scalar_lea.vmem %s269, 32 [#allocation12]
        %3762 = vst.msk [vmem:[%s3761] sm:$0xff] %vm3747, %v3759
        %3763 = vst.msk [vmem:[%s3761 + $0x8] sm:$0xff] %vm3747, %v3760
        %v3764 = vld [vmem:[%s330] sm:$0xff]
        %v3765 = vld [vmem:[%s330 + $0x8] sm:$0xff]
        %v3766 = vadd.f32 %v3741, %v3764
        %v3767 = vadd.f32 %v3742, %v3765
        %s3768 = scalar_lea.vmem %s269, 48 [#allocation12]
        %3769 = vst.msk [vmem:[%s3768] sm:$0xff] %vm3747, %v3766
        %3770 = vst.msk [vmem:[%s3768 + $0x8] sm:$0xff] %vm3747, %v3767
        %s3771 = sand.u32 %s140, 1
        %s3772 = scalar_lea.sflag [#allocation5], %s3771
        %s3773 = sand.u32 %s140, 1
        %s3774 = smul.addr %s3773, 64
        %s3775 = scalar_lea.vmem [#allocation12], %s3774
        // Predicated region
        $region57: #{_double_residual_conv_impl.1} parent=39 // pred_check
          %p3776 = pneg %p150
        $region58: #{_double_residual_conv_impl.1} parent=39 // pred_check_branch
          %3778 = sbr.rel (%p3776) target = $region60
        $region59: #{_double_residual_conv_impl.1} parent=39 // pred_region
          %3780 = vsyncadd %s3772, 0
          %s3781 = smul.addr %s22, 8
          %s3782 = smul.addr %s3781, 8
          %s3783 = scalar_lea.hbm %s5, %s3782
          %s3784 = sshll.u32 %s3775, 4
          %s3785 = int_to_ptr.vmem [resolvable:$true] %s3784
          %s3786 = sshll.u32 %s3783, 4
          %s3787 = int_to_ptr.hbm [resolvable:$true] %s3786
          %3792 = dma.vmem_to_hbm [thread:$0]  %s3785, 1024, %s3787, %s3772, 128, 128, 8
        $region60: #{_double_residual_conv_impl.1} parent=39 // pred_fallthru
          _
      $region40: #{_double_residual_conv_impl.1} parent=5 // pred_fallthru
        _
      %p3793 = scmp.le.s32.totalorder 2, %s17
      // Predicated region
      $region61: #{_double_residual_conv_impl.1} parent=5 // pred_check
        %p3794 = pneg %p3793
      $region62: #{_double_residual_conv_impl.1} parent=5 // pred_check_branch
        %3796 = sbr.rel (%p3794) target = $region64
      $region63: #{_double_residual_conv_impl.1} parent=5 // pred_region
        %s3797 = ssub.s32 %s17, 2
        // Predicated region
        $region65: #{_double_residual_conv_impl.1} parent=63 // pred_check
          %p3798 = pneg %p156
        $region66: #{_double_residual_conv_impl.1} parent=63 // pred_check_branch
          %3800 = sbr.rel (%p3798) target = $region68
        $region67: #{_double_residual_conv_impl.1} parent=63 // pred_region
          %s3801 = sand.u32 %s141, 1
          %s3802 = scalar_lea.sflag [#allocation5], %s3801
          %s3803 = sand.u32 %s141, 1
          %s3804 = smul.addr %s3803, 64
          %s3805 = scalar_lea.vmem [#allocation12], %s3804
          %3807 = dma.done %s3802, 1024
        $region68: #{_double_residual_conv_impl.1} parent=63 // pred_fallthru
          _
      $region64: #{_double_residual_conv_impl.1} parent=5 // pred_fallthru
        _
    $region6: #{_double_residual_conv_impl.1} parent=1 // loop_footer
      %s21 = sadd.s32 1, %s17
    $region7: #{_double_residual_conv_impl.1} parent=1 // loop_footer_branch
      %16 = sbr.rel target = $region3
    $region8: #{_double_residual_conv_impl.1} parent=1 // loop_exit
      _
    %3808 = vsyncpa [#allocation5], 1
    %s3809 = scalar_lea.sflag [#allocation5], 1
    %3810 = vsyncpa %s3809, 1
    %3811 = vsyncpa [#allocation6], 1
    %s3812 = scalar_lea.sflag [#allocation6], 1
    %3813 = vsyncpa %s3812, 1
    %3814 = vsyncpa [#allocation8], 1
    %3815 = vsyncpa [#allocation11], 1

</llo_original>
